<compile_context>
chip_gen: v7x
topology: tpu7x:2x2x1
jax: 0.10.0
libtpu: 0.0.40
codegen_flags: <defaults>
</compile_context>

<pallas_src>
import jax
import jax.numpy as jnp
from jax.experimental import pallas as pl
from jax.experimental.pallas import tpu as pltpu

HIDDEN_SIZE = 128
INPUT_SIZE = 512
NUM_CLASSES = 13
Y_FEATS = 408
CONCAT_SIZE = HIDDEN_SIZE + Y_FEATS          # 536
FC1_OUT = CONCAT_SIZE // 2                   # 268


# ----------------------------------------------------------------------------
# Fused kernel: GRU recurrence -> (concat-free) fc1 -> fc2 -> softmax(dim=1)
# ----------------------------------------------------------------------------
def fusion_kernel(x_ref, wih_ref, whh_ref, bih_ref, bhh_ref,
                  y_ref, b1_ref, w2_ref, b2_ref,
                  w1h_hbm, w1y_hbm,
                  out_ref,
                  w1h_buf, w1y_buf, sems):
    TB, D = x_ref.shape
    H = whh_ref.shape[0]
    B = out_ref.shape[0]
    T = TB // B

    # ---- kick off DMA of the late-use fc1 weights; they are not needed until
    #      after the whole recurrence, so their transfer hides under compute --
    cp_w1h = pltpu.make_async_copy(w1h_hbm, w1h_buf, sems.at[0])
    cp_w1y = pltpu.make_async_copy(w1y_hbm, w1y_buf, sems.at[1])
    cp_w1h.start()
    cp_w1y.start()

    # ---- hoisted input-hidden projection: one (T*B, D) @ (D, 3H) bf16 MXU op,
    #      f32 accumulation; x is already time-major/flat so no in-kernel
    #      reshape or relayout is needed. Gate order [r | z | n]. ----
    gi_all = (jnp.dot(x_ref[...], wih_ref[...],
                      preferred_element_type=jnp.float32)
              + bih_ref[...])                               # (T*B, 3H) f32

    bhh = bhh_ref[...]

    # ---- serial recurrence, fully unrolled (T static & small).
    #      W_hh is sourced from VMEM inside every dot (not held live). ----
    h = jnp.zeros((B, H), jnp.float32)
    for t in range(T):
        gi = gi_all[t * B:(t + 1) * B, :]                   # contiguous rows
        gh = (jnp.dot(h.astype(jnp.bfloat16), whh_ref[...],
                      preferred_element_type=jnp.float32) + bhh)
        r = jax.nn.sigmoid(gi[:, :H] + gh[:, :H])
        z = jax.nn.sigmoid(gi[:, H:2 * H] + gh[:, H:2 * H])
        n = jnp.tanh(gi[:, 2 * H:] + r * gh[:, 2 * H:])
        h = (1.0 - z) * n + z * h                           # PyTorch GRU update

    # ---- the prefetched fc1 weights have had the whole recurrence to land ----
    cp_w1h.wait()
    cp_w1y.wait()

    # ---- concat-free fc1 -> fc2 -> softmax (elementwise math in f32) ----
    z1 = (jnp.dot(h.astype(jnp.bfloat16), w1h_buf[...],
                  preferred_element_type=jnp.float32)
          + jnp.dot(y_ref[...], w1y_buf[...],
                    preferred_element_type=jnp.float32)
          + b1_ref[...])
    z2 = (jnp.dot(z1.astype(jnp.bfloat16), w2_ref[...],
                  preferred_element_type=jnp.float32)
          + b2_ref[...])

    m = jnp.max(z2, axis=1, keepdims=True)
    e = jnp.exp(z2 - m)
    denom = jnp.sum(e, axis=1, keepdims=True)
    # exact reciprocal: approx=True would perturb row sums vs. torch softmax
    out_ref[...] = e * pl.reciprocal(denom, approx=False)


def fusion_forward(params, x, y):
    B, T, D = x.shape
    H = params["w_hh_t"].shape[0]
    F1 = params["w1_h_t"].shape[1]
    NC = params["w2_t"].shape[1]
    YF = y.shape[1]

    # Host-side (metadata-cheap) prep:
    #   * time-major flatten of x so the kernel never reshapes / stride-slices
    #   * bf16 cast of every MXU operand (weights + activations feeding dots)
    bf16 = lambda a: a.astype(jnp.bfloat16)
    x_tb = bf16(jnp.transpose(x, (1, 0, 2)).reshape(T * B, D))

    def full(shape):
        zeros = (0,) * len(shape)
        return pl.BlockSpec(shape, lambda i: zeros)   # whole array = one block

    any_spec = pl.BlockSpec(memory_space=pl.ANY)      # stays in HBM; manual DMA

    return pl.pallas_call(
        fusion_kernel,
        out_shape=jax.ShapeDtypeStruct((B, NC), jnp.float32),
        grid_spec=pltpu.PrefetchScalarGridSpec(
            num_scalar_prefetch=0,
            grid=(1,),
            in_specs=[
                full((T * B, D)),         # x  (time-major, bf16)
                full((D, 3 * H)),         # W_ih^T            bf16
                full((H, 3 * H)),         # W_hh^T            bf16
                full((1, 3 * H)),         # b_ih              f32
                full((1, 3 * H)),         # b_hh              f32
                full((B, YF)),            # y                 bf16
                full((1, F1)),            # b1                f32
                full((F1, NC)),           # W2^T              bf16 (tiny)
                full((1, NC)),            # b2                f32
                any_spec,                 # W1^T rows acting on hidden (HBM)
                any_spec,                 # W1^T rows acting on y      (HBM)
            ],
            out_specs=full((B, NC)),
            scratch_shapes=[
                pltpu.VMEM((H, F1), jnp.bfloat16),    # w1_h landing buffer
                pltpu.VMEM((YF, F1), jnp.bfloat16),   # w1_y landing buffer
                pltpu.SemaphoreType.DMA((2,)),
            ]),
        compiler_params=pltpu.CompilerParams(
            dimension_semantics=("arbitrary",)),
    )(x_tb, bf16(params["w_ih_t"]), bf16(params["w_hh_t"]),
      params["b_ih"], params["b_hh"],
      bf16(y), params["b1"], bf16(params["w2_t"]), params["b2"],
      bf16(params["w1_h_t"]), bf16(params["w1_y_t"]))


# ----------------------------------------------------------------------------
# References for validation
#   * fusion_reference_mixed: mirrors the kernel numerics (bf16 MXU operands,
#     f32 elementwise) -> tight tolerance
#   * fusion_reference_f32: pure-f32 / HIGHEST matmuls (the PyTorch semantics)
#     -> loose tolerance (documents the expected bf16-weight drift)
# ----------------------------------------------------------------------------
def fusion_reference_mixed(params, x, y):
    B, T, D = x.shape
    H = params["w_hh_t"].shape[0]
    bdot = lambda a, b: jnp.dot(a.astype(jnp.bfloat16), b.astype(jnp.bfloat16),
                                preferred_element_type=jnp.float32)
    h = jnp.zeros((B, H), jnp.float32)
    for t in range(T):
        gi = bdot(x[:, t, :], params["w_ih_t"]) + params["b_ih"]
        gh = bdot(h, params["w_hh_t"]) + params["b_hh"]
        r = jax.nn.sigmoid(gi[:, :H] + gh[:, :H])
        z = jax.nn.sigmoid(gi[:, H:2 * H] + gh[:, H:2 * H])
        n = jnp.tanh(gi[:, 2 * H:] + r * gh[:, 2 * H:])
        h = (1.0 - z) * n + z * h
    z1 = (bdot(h, params["w1_h_t"]) + bdot(y, params["w1_y_t"]) + params["b1"])
    z2 = bdot(z1, params["w2_t"]) + params["b2"]
    return jax.nn.softmax(z2, axis=1)


def fusion_reference_f32(params, x, y):
    B, T, D = x.shape
    H = params["w_hh_t"].shape[0]
    hp = jax.lax.Precision.HIGHEST
    h = jnp.zeros((B, H), jnp.float32)
    for t in range(T):
        gi = jnp.dot(x[:, t, :], params["w_ih_t"], precision=hp) + params["b_ih"]
        gh = jnp.dot(h, params["w_hh_t"], precision=hp) + params["b_hh"]
        r = jax.nn.sigmoid(gi[:, :H] + gh[:, :H])
        z = jax.nn.sigmoid(gi[:, H:2 * H] + gh[:, H:2 * H])
        n = jnp.tanh(gi[:, 2 * H:] + r * gh[:, 2 * H:])
        h = (1.0 - z) * n + z * h
    z1 = (jnp.dot(h, params["w1_h_t"], precision=hp)
          + jnp.dot(y, params["w1_y_t"], precision=hp) + params["b1"])
    z2 = jnp.dot(z1, params["w2_t"], precision=hp) + params["b2"]
    return jax.nn.softmax(z2, axis=1)


def init_params(key):
    ks = jax.random.split(key, 9)
    s_gru = 1.0 / jnp.sqrt(HIDDEN_SIZE)
    s_fc1 = 1.0 / jnp.sqrt(CONCAT_SIZE)
    s_fc2 = 1.0 / jnp.sqrt(FC1_OUT)
    u = lambda k, shape, s: jax.random.uniform(k, shape, jnp.float32, -s, s)
    return {
        # GRU weights stored transposed: (in, 3H) / (H, 3H); gate order [r,z,n]
        "w_ih_t": u(ks[0], (INPUT_SIZE, 3 * HIDDEN_SIZE), s_gru),
        "w_hh_t": u(ks[1], (HIDDEN_SIZE, 3 * HIDDEN_SIZE), s_gru),
        "b_ih":   u(ks[2], (1, 3 * HIDDEN_SIZE), s_gru),
        "b_hh":   u(ks[3], (1, 3 * HIDDEN_SIZE), s_gru),
        # fc1 weight stored transposed and ROW-SPLIT: fc1(cat(h, y)) ==
        #   h @ w1_h_t + y @ w1_y_t + b1   (removes the concat entirely)
        "w1_h_t": u(ks[4], (HIDDEN_SIZE, FC1_OUT), s_fc1),
        "w1_y_t": u(ks[5], (Y_FEATS, FC1_OUT), s_fc1),
        "b1":     u(ks[6], (1, FC1_OUT), s_fc1),
        # fc2 stored transposed
        "w2_t":   u(ks[7], (FC1_OUT, NUM_CLASSES), s_fc2),
        "b2":     u(ks[8], (1, NUM_CLASSES), s_fc2),
    }


if __name__ == "__main__":
    key = jax.random.PRNGKey(0)
    k_params, k_x, k_y = jax.random.split(key, 3)

    B, T = 2, 8
    params = init_params(k_params)
    x = jax.random.normal(k_x, (B, T, INPUT_SIZE), jnp.float32)
    y = jax.random.normal(k_y, (B, Y_FEATS), jnp.float32)

    out = jax.block_until_ready(fusion_forward(params, x, y))
    ref_mixed = jax.block_until_ready(fusion_reference_mixed(params, x, y))
    ref_f32 = jax.block_until_ready(fusion_reference_f32(params, x, y))

    assert out.shape == (B, NUM_CLASSES)
    # softmax rows sum to 1
    assert jnp.allclose(jnp.sum(out, axis=1), 1.0, atol=1e-5)
    # matches a pure-JAX reference with the same bf16-MXU numerics (tight)
    assert jnp.allclose(out, ref_mixed, atol=5e-3), \
        float(jnp.max(jnp.abs(out - ref_mixed)))
    # matches the full-f32 PyTorch-semantics reference (loose: bf16 weights)
    assert jnp.allclose(out, ref_f32, atol=5e-2), \
        float(jnp.max(jnp.abs(out - ref_f32)))
    print("KERNEL_OK")
</pallas_src>

<mosaic_0001>
module attributes {stable_mosaic.version = 11 : i64} {
  func.func @fusion_kernel(%arg0: i32, %arg1: memref<16x512xbf16, #tpu.memory_space<vmem>>, %arg2: memref<512x384xbf16, #tpu.memory_space<vmem>>, %arg3: memref<128x384xbf16, #tpu.memory_space<vmem>>, %arg4: memref<1x384xf32, #tpu.memory_space<vmem>>, %arg5: memref<1x384xf32, #tpu.memory_space<vmem>>, %arg6: memref<2x408xbf16, #tpu.memory_space<vmem>>, %arg7: memref<1x268xf32, #tpu.memory_space<vmem>>, %arg8: memref<268x13xbf16, #tpu.memory_space<vmem>>, %arg9: memref<1x13xf32, #tpu.memory_space<vmem>>, %arg10: memref<128x268xbf16, #tpu.memory_space<any>>, %arg11: memref<408x268xbf16, #tpu.memory_space<any>>, %arg12: memref<2x13xf32, #tpu.memory_space<vmem>>, %arg13: memref<128x268xbf16, #tpu.memory_space<vmem>>, %arg14: memref<408x268xbf16, #tpu.memory_space<vmem>>, %arg15: memref<2x!tpu.dma_semaphore, #tpu.memory_space<semaphore_mem>>) attributes {dimension_semantics = [#tpu.dimension_semantics<arbitrary>], iteration_bounds = array<i64: 1>, scalar_prefetch = 0 : i64, scratch_operands = 3 : i64, tpu.core_type = #tpu.core_type<tc>, window_params = [{pipeline_mode = #tpu.pipeline_mode<synchronous>, transform_indices = @transform_0, window_bounds = array<i64: 16, 512>}, {pipeline_mode = #tpu.pipeline_mode<synchronous>, transform_indices = @transform_1, window_bounds = array<i64: 512, 384>}, {pipeline_mode = #tpu.pipeline_mode<synchronous>, transform_indices = @transform_2, window_bounds = array<i64: 128, 384>}, {pipeline_mode = #tpu.pipeline_mode<synchronous>, transform_indices = @transform_3, window_bounds = array<i64: 1, 384>}, {pipeline_mode = #tpu.pipeline_mode<synchronous>, transform_indices = @transform_4, window_bounds = array<i64: 1, 384>}, {pipeline_mode = #tpu.pipeline_mode<synchronous>, transform_indices = @transform_5, window_bounds = array<i64: 2, 408>}, {pipeline_mode = #tpu.pipeline_mode<synchronous>, transform_indices = @transform_6, window_bounds = array<i64: 1, 268>}, {pipeline_mode = #tpu.pipeline_mode<synchronous>, transform_indices = @transform_7, window_bounds = array<i64: 268, 13>}, {pipeline_mode = #tpu.pipeline_mode<synchronous>, transform_indices = @transform_8, window_bounds = array<i64: 1, 13>}, {}, {}, {pipeline_mode = #tpu.pipeline_mode<synchronous>, transform_indices = @transform_11, window_bounds = array<i64: 2, 13>}]} {
    %c0_i32 = arith.constant 0 : i32
    %0 = tpu.memref_slice %arg15[%c0_i32] : memref<2x!tpu.dma_semaphore, #tpu.memory_space<semaphore_mem>> -> memref<1x!tpu.dma_semaphore, #tpu.memory_space<semaphore_mem>>
    %1 = tpu.memref_squeeze %0 : memref<1x!tpu.dma_semaphore, #tpu.memory_space<semaphore_mem>> -> memref<!tpu.dma_semaphore, #tpu.memory_space<semaphore_mem>>
    tpu.enqueue_dma source(%arg10 : memref<128x268xbf16, #tpu.memory_space<any>>) target(%arg13 : memref<128x268xbf16, #tpu.memory_space<vmem>>) target_semaphore(%1 : memref<!tpu.dma_semaphore, #tpu.memory_space<semaphore_mem>>)
    %c1_i32 = arith.constant 1 : i32
    %2 = tpu.memref_slice %arg15[%c1_i32] : memref<2x!tpu.dma_semaphore, #tpu.memory_space<semaphore_mem>> -> memref<1x!tpu.dma_semaphore, #tpu.memory_space<semaphore_mem>>
    %3 = tpu.memref_squeeze %2 : memref<1x!tpu.dma_semaphore, #tpu.memory_space<semaphore_mem>> -> memref<!tpu.dma_semaphore, #tpu.memory_space<semaphore_mem>>
    tpu.enqueue_dma source(%arg11 : memref<408x268xbf16, #tpu.memory_space<any>>) target(%arg14 : memref<408x268xbf16, #tpu.memory_space<vmem>>) target_semaphore(%3 : memref<!tpu.dma_semaphore, #tpu.memory_space<semaphore_mem>>)
    %c0 = arith.constant 0 : index
    %c0_0 = arith.constant 0 : index
    %4 = vector.load %arg1[%c0, %c0_0] : memref<16x512xbf16, #tpu.memory_space<vmem>>, vector<16x512xbf16>
    %c0_1 = arith.constant 0 : index
    %c0_2 = arith.constant 0 : index
    %5 = vector.load %arg2[%c0_1, %c0_2] : memref<512x384xbf16, #tpu.memory_space<vmem>>, vector<512x384xbf16>
    %cst = arith.constant dense<0.000000e+00> : vector<16x384xf32>
    %6 = tpu.matmul %4, %5, %cst {dimension_numbers = #tpu.dot_dimension_numbers<[1], [0], [0], [1], [0, 0, 1, 1], [], []>} : vector<16x512xbf16>, vector<512x384xbf16>, vector<16x384xf32> -> vector<16x384xf32>
    %c0_3 = arith.constant 0 : index
    %c0_4 = arith.constant 0 : index
    %7 = vector.load %arg4[%c0_3, %c0_4] : memref<1x384xf32, #tpu.memory_space<vmem>>, vector<1x384xf32>
    %8 = vector.broadcast %7 : vector<1x384xf32> to vector<16x384xf32>
    %9 = arith.addf %6, %8 : vector<16x384xf32>
    %c0_5 = arith.constant 0 : index
    %c0_6 = arith.constant 0 : index
    %10 = vector.load %arg5[%c0_5, %c0_6] : memref<1x384xf32, #tpu.memory_space<vmem>>, vector<1x384xf32>
    %cst_7 = arith.constant 0.000000e+00 : f32
    %11 = vector.broadcast %cst_7 : f32 to vector<2x128xf32>
    %12 = vector.extract_strided_slice %9 {offsets = [0, 0], sizes = [2, 384], strides = [1, 1]} : vector<16x384xf32> to vector<2x384xf32>
    %13 = arith.truncf %11 : vector<2x128xf32> to vector<2x128xbf16>
    %c0_8 = arith.constant 0 : index
    %c0_9 = arith.constant 0 : index
    %14 = vector.load %arg3[%c0_8, %c0_9] : memref<128x384xbf16, #tpu.memory_space<vmem>>, vector<128x384xbf16>
    %cst_10 = arith.constant dense<0.000000e+00> : vector<2x384xf32>
    %15 = tpu.matmul %13, %14, %cst_10 {dimension_numbers = #tpu.dot_dimension_numbers<[1], [0], [0], [1], [0, 0, 1, 1], [], []>} : vector<2x128xbf16>, vector<128x384xbf16>, vector<2x384xf32> -> vector<2x384xf32>
    %16 = vector.broadcast %10 : vector<1x384xf32> to vector<2x384xf32>
    %17 = arith.addf %15, %16 : vector<2x384xf32>
    %18 = vector.extract_strided_slice %12 {offsets = [0, 0], sizes = [2, 128], strides = [1, 1]} : vector<2x384xf32> to vector<2x128xf32>
    %19 = vector.extract_strided_slice %17 {offsets = [0, 0], sizes = [2, 128], strides = [1, 1]} : vector<2x384xf32> to vector<2x128xf32>
    %20 = arith.addf %18, %19 : vector<2x128xf32>
    %21 = arith.negf %20 : vector<2x128xf32>
    %22 = math.exp %21 : vector<2x128xf32>
    %cst_11 = arith.constant 1.000000e+00 : f32
    %23 = vector.broadcast %cst_11 : f32 to vector<2x128xf32>
    %24 = arith.addf %23, %22 : vector<2x128xf32>
    %25 = arith.divf %23, %24 : vector<2x128xf32>
    %26 = vector.extract_strided_slice %12 {offsets = [0, 128], sizes = [2, 128], strides = [1, 1]} : vector<2x384xf32> to vector<2x128xf32>
    %27 = vector.extract_strided_slice %17 {offsets = [0, 128], sizes = [2, 128], strides = [1, 1]} : vector<2x384xf32> to vector<2x128xf32>
    %28 = arith.addf %26, %27 : vector<2x128xf32>
    %29 = arith.negf %28 : vector<2x128xf32>
    %30 = math.exp %29 : vector<2x128xf32>
    %cst_12 = arith.constant 1.000000e+00 : f32
    %31 = vector.broadcast %cst_12 : f32 to vector<2x128xf32>
    %32 = arith.addf %31, %30 : vector<2x128xf32>
    %33 = arith.divf %31, %32 : vector<2x128xf32>
    %34 = vector.extract_strided_slice %12 {offsets = [0, 256], sizes = [2, 128], strides = [1, 1]} : vector<2x384xf32> to vector<2x128xf32>
    %35 = vector.extract_strided_slice %17 {offsets = [0, 256], sizes = [2, 128], strides = [1, 1]} : vector<2x384xf32> to vector<2x128xf32>
    %36 = arith.mulf %25, %35 : vector<2x128xf32>
    %37 = arith.addf %34, %36 : vector<2x128xf32>
    %38 = math.tanh %37 : vector<2x128xf32>
    %cst_13 = arith.constant 1.000000e+00 : f32
    %39 = vector.broadcast %cst_13 : f32 to vector<2x128xf32>
    %40 = arith.subf %39, %33 : vector<2x128xf32>
    %41 = arith.mulf %40, %38 : vector<2x128xf32>
    %42 = arith.mulf %33, %11 : vector<2x128xf32>
    %43 = arith.addf %41, %42 : vector<2x128xf32>
    %44 = vector.extract_strided_slice %9 {offsets = [2, 0], sizes = [2, 384], strides = [1, 1]} : vector<16x384xf32> to vector<2x384xf32>
    %45 = arith.truncf %43 : vector<2x128xf32> to vector<2x128xbf16>
    %c0_14 = arith.constant 0 : index
    %c0_15 = arith.constant 0 : index
    %46 = vector.load %arg3[%c0_14, %c0_15] : memref<128x384xbf16, #tpu.memory_space<vmem>>, vector<128x384xbf16>
    %cst_16 = arith.constant dense<0.000000e+00> : vector<2x384xf32>
    %47 = tpu.matmul %45, %46, %cst_16 {dimension_numbers = #tpu.dot_dimension_numbers<[1], [0], [0], [1], [0, 0, 1, 1], [], []>} : vector<2x128xbf16>, vector<128x384xbf16>, vector<2x384xf32> -> vector<2x384xf32>
    %48 = vector.broadcast %10 : vector<1x384xf32> to vector<2x384xf32>
    %49 = arith.addf %47, %48 : vector<2x384xf32>
    %50 = vector.extract_strided_slice %44 {offsets = [0, 0], sizes = [2, 128], strides = [1, 1]} : vector<2x384xf32> to vector<2x128xf32>
    %51 = vector.extract_strided_slice %49 {offsets = [0, 0], sizes = [2, 128], strides = [1, 1]} : vector<2x384xf32> to vector<2x128xf32>
    %52 = arith.addf %50, %51 : vector<2x128xf32>
    %53 = arith.negf %52 : vector<2x128xf32>
    %54 = math.exp %53 : vector<2x128xf32>
    %cst_17 = arith.constant 1.000000e+00 : f32
    %55 = vector.broadcast %cst_17 : f32 to vector<2x128xf32>
    %56 = arith.addf %55, %54 : vector<2x128xf32>
    %57 = arith.divf %55, %56 : vector<2x128xf32>
    %58 = vector.extract_strided_slice %44 {offsets = [0, 128], sizes = [2, 128], strides = [1, 1]} : vector<2x384xf32> to vector<2x128xf32>
    %59 = vector.extract_strided_slice %49 {offsets = [0, 128], sizes = [2, 128], strides = [1, 1]} : vector<2x384xf32> to vector<2x128xf32>
    %60 = arith.addf %58, %59 : vector<2x128xf32>
    %61 = arith.negf %60 : vector<2x128xf32>
    %62 = math.exp %61 : vector<2x128xf32>
    %cst_18 = arith.constant 1.000000e+00 : f32
    %63 = vector.broadcast %cst_18 : f32 to vector<2x128xf32>
    %64 = arith.addf %63, %62 : vector<2x128xf32>
    %65 = arith.divf %63, %64 : vector<2x128xf32>
    %66 = vector.extract_strided_slice %44 {offsets = [0, 256], sizes = [2, 128], strides = [1, 1]} : vector<2x384xf32> to vector<2x128xf32>
    %67 = vector.extract_strided_slice %49 {offsets = [0, 256], sizes = [2, 128], strides = [1, 1]} : vector<2x384xf32> to vector<2x128xf32>
    %68 = arith.mulf %57, %67 : vector<2x128xf32>
    %69 = arith.addf %66, %68 : vector<2x128xf32>
    %70 = math.tanh %69 : vector<2x128xf32>
    %cst_19 = arith.constant 1.000000e+00 : f32
    %71 = vector.broadcast %cst_19 : f32 to vector<2x128xf32>
    %72 = arith.subf %71, %65 : vector<2x128xf32>
    %73 = arith.mulf %72, %70 : vector<2x128xf32>
    %74 = arith.mulf %65, %43 : vector<2x128xf32>
    %75 = arith.addf %73, %74 : vector<2x128xf32>
    %76 = vector.extract_strided_slice %9 {offsets = [4, 0], sizes = [2, 384], strides = [1, 1]} : vector<16x384xf32> to vector<2x384xf32>
    %77 = arith.truncf %75 : vector<2x128xf32> to vector<2x128xbf16>
    %c0_20 = arith.constant 0 : index
    %c0_21 = arith.constant 0 : index
    %78 = vector.load %arg3[%c0_20, %c0_21] : memref<128x384xbf16, #tpu.memory_space<vmem>>, vector<128x384xbf16>
    %cst_22 = arith.constant dense<0.000000e+00> : vector<2x384xf32>
    %79 = tpu.matmul %77, %78, %cst_22 {dimension_numbers = #tpu.dot_dimension_numbers<[1], [0], [0], [1], [0, 0, 1, 1], [], []>} : vector<2x128xbf16>, vector<128x384xbf16>, vector<2x384xf32> -> vector<2x384xf32>
    %80 = vector.broadcast %10 : vector<1x384xf32> to vector<2x384xf32>
    %81 = arith.addf %79, %80 : vector<2x384xf32>
    %82 = vector.extract_strided_slice %76 {offsets = [0, 0], sizes = [2, 128], strides = [1, 1]} : vector<2x384xf32> to vector<2x128xf32>
    %83 = vector.extract_strided_slice %81 {offsets = [0, 0], sizes = [2, 128], strides = [1, 1]} : vector<2x384xf32> to vector<2x128xf32>
    %84 = arith.addf %82, %83 : vector<2x128xf32>
    %85 = arith.negf %84 : vector<2x128xf32>
    %86 = math.exp %85 : vector<2x128xf32>
    %cst_23 = arith.constant 1.000000e+00 : f32
    %87 = vector.broadcast %cst_23 : f32 to vector<2x128xf32>
    %88 = arith.addf %87, %86 : vector<2x128xf32>
    %89 = arith.divf %87, %88 : vector<2x128xf32>
    %90 = vector.extract_strided_slice %76 {offsets = [0, 128], sizes = [2, 128], strides = [1, 1]} : vector<2x384xf32> to vector<2x128xf32>
    %91 = vector.extract_strided_slice %81 {offsets = [0, 128], sizes = [2, 128], strides = [1, 1]} : vector<2x384xf32> to vector<2x128xf32>
    %92 = arith.addf %90, %91 : vector<2x128xf32>
    %93 = arith.negf %92 : vector<2x128xf32>
    %94 = math.exp %93 : vector<2x128xf32>
    %cst_24 = arith.constant 1.000000e+00 : f32
    %95 = vector.broadcast %cst_24 : f32 to vector<2x128xf32>
    %96 = arith.addf %95, %94 : vector<2x128xf32>
    %97 = arith.divf %95, %96 : vector<2x128xf32>
    %98 = vector.extract_strided_slice %76 {offsets = [0, 256], sizes = [2, 128], strides = [1, 1]} : vector<2x384xf32> to vector<2x128xf32>
    %99 = vector.extract_strided_slice %81 {offsets = [0, 256], sizes = [2, 128], strides = [1, 1]} : vector<2x384xf32> to vector<2x128xf32>
    %100 = arith.mulf %89, %99 : vector<2x128xf32>
    %101 = arith.addf %98, %100 : vector<2x128xf32>
    %102 = math.tanh %101 : vector<2x128xf32>
    %cst_25 = arith.constant 1.000000e+00 : f32
    %103 = vector.broadcast %cst_25 : f32 to vector<2x128xf32>
    %104 = arith.subf %103, %97 : vector<2x128xf32>
    %105 = arith.mulf %104, %102 : vector<2x128xf32>
    %106 = arith.mulf %97, %75 : vector<2x128xf32>
    %107 = arith.addf %105, %106 : vector<2x128xf32>
    %108 = vector.extract_strided_slice %9 {offsets = [6, 0], sizes = [2, 384], strides = [1, 1]} : vector<16x384xf32> to vector<2x384xf32>
    %109 = arith.truncf %107 : vector<2x128xf32> to vector<2x128xbf16>
    %c0_26 = arith.constant 0 : index
    %c0_27 = arith.constant 0 : index
    %110 = vector.load %arg3[%c0_26, %c0_27] : memref<128x384xbf16, #tpu.memory_space<vmem>>, vector<128x384xbf16>
    %cst_28 = arith.constant dense<0.000000e+00> : vector<2x384xf32>
    %111 = tpu.matmul %109, %110, %cst_28 {dimension_numbers = #tpu.dot_dimension_numbers<[1], [0], [0], [1], [0, 0, 1, 1], [], []>} : vector<2x128xbf16>, vector<128x384xbf16>, vector<2x384xf32> -> vector<2x384xf32>
    %112 = vector.broadcast %10 : vector<1x384xf32> to vector<2x384xf32>
    %113 = arith.addf %111, %112 : vector<2x384xf32>
    %114 = vector.extract_strided_slice %108 {offsets = [0, 0], sizes = [2, 128], strides = [1, 1]} : vector<2x384xf32> to vector<2x128xf32>
    %115 = vector.extract_strided_slice %113 {offsets = [0, 0], sizes = [2, 128], strides = [1, 1]} : vector<2x384xf32> to vector<2x128xf32>
    %116 = arith.addf %114, %115 : vector<2x128xf32>
    %117 = arith.negf %116 : vector<2x128xf32>
    %118 = math.exp %117 : vector<2x128xf32>
    %cst_29 = arith.constant 1.000000e+00 : f32
    %119 = vector.broadcast %cst_29 : f32 to vector<2x128xf32>
    %120 = arith.addf %119, %118 : vector<2x128xf32>
    %121 = arith.divf %119, %120 : vector<2x128xf32>
    %122 = vector.extract_strided_slice %108 {offsets = [0, 128], sizes = [2, 128], strides = [1, 1]} : vector<2x384xf32> to vector<2x128xf32>
    %123 = vector.extract_strided_slice %113 {offsets = [0, 128], sizes = [2, 128], strides = [1, 1]} : vector<2x384xf32> to vector<2x128xf32>
    %124 = arith.addf %122, %123 : vector<2x128xf32>
    %125 = arith.negf %124 : vector<2x128xf32>
    %126 = math.exp %125 : vector<2x128xf32>
    %cst_30 = arith.constant 1.000000e+00 : f32
    %127 = vector.broadcast %cst_30 : f32 to vector<2x128xf32>
    %128 = arith.addf %127, %126 : vector<2x128xf32>
    %129 = arith.divf %127, %128 : vector<2x128xf32>
    %130 = vector.extract_strided_slice %108 {offsets = [0, 256], sizes = [2, 128], strides = [1, 1]} : vector<2x384xf32> to vector<2x128xf32>
    %131 = vector.extract_strided_slice %113 {offsets = [0, 256], sizes = [2, 128], strides = [1, 1]} : vector<2x384xf32> to vector<2x128xf32>
    %132 = arith.mulf %121, %131 : vector<2x128xf32>
    %133 = arith.addf %130, %132 : vector<2x128xf32>
    %134 = math.tanh %133 : vector<2x128xf32>
    %cst_31 = arith.constant 1.000000e+00 : f32
    %135 = vector.broadcast %cst_31 : f32 to vector<2x128xf32>
    %136 = arith.subf %135, %129 : vector<2x128xf32>
    %137 = arith.mulf %136, %134 : vector<2x128xf32>
    %138 = arith.mulf %129, %107 : vector<2x128xf32>
    %139 = arith.addf %137, %138 : vector<2x128xf32>
    %140 = vector.extract_strided_slice %9 {offsets = [8, 0], sizes = [2, 384], strides = [1, 1]} : vector<16x384xf32> to vector<2x384xf32>
    %141 = arith.truncf %139 : vector<2x128xf32> to vector<2x128xbf16>
    %c0_32 = arith.constant 0 : index
    %c0_33 = arith.constant 0 : index
    %142 = vector.load %arg3[%c0_32, %c0_33] : memref<128x384xbf16, #tpu.memory_space<vmem>>, vector<128x384xbf16>
    %cst_34 = arith.constant dense<0.000000e+00> : vector<2x384xf32>
    %143 = tpu.matmul %141, %142, %cst_34 {dimension_numbers = #tpu.dot_dimension_numbers<[1], [0], [0], [1], [0, 0, 1, 1], [], []>} : vector<2x128xbf16>, vector<128x384xbf16>, vector<2x384xf32> -> vector<2x384xf32>
    %144 = vector.broadcast %10 : vector<1x384xf32> to vector<2x384xf32>
    %145 = arith.addf %143, %144 : vector<2x384xf32>
    %146 = vector.extract_strided_slice %140 {offsets = [0, 0], sizes = [2, 128], strides = [1, 1]} : vector<2x384xf32> to vector<2x128xf32>
    %147 = vector.extract_strided_slice %145 {offsets = [0, 0], sizes = [2, 128], strides = [1, 1]} : vector<2x384xf32> to vector<2x128xf32>
    %148 = arith.addf %146, %147 : vector<2x128xf32>
    %149 = arith.negf %148 : vector<2x128xf32>
    %150 = math.exp %149 : vector<2x128xf32>
    %cst_35 = arith.constant 1.000000e+00 : f32
    %151 = vector.broadcast %cst_35 : f32 to vector<2x128xf32>
    %152 = arith.addf %151, %150 : vector<2x128xf32>
    %153 = arith.divf %151, %152 : vector<2x128xf32>
    %154 = vector.extract_strided_slice %140 {offsets = [0, 128], sizes = [2, 128], strides = [1, 1]} : vector<2x384xf32> to vector<2x128xf32>
    %155 = vector.extract_strided_slice %145 {offsets = [0, 128], sizes = [2, 128], strides = [1, 1]} : vector<2x384xf32> to vector<2x128xf32>
    %156 = arith.addf %154, %155 : vector<2x128xf32>
    %157 = arith.negf %156 : vector<2x128xf32>
    %158 = math.exp %157 : vector<2x128xf32>
    %cst_36 = arith.constant 1.000000e+00 : f32
    %159 = vector.broadcast %cst_36 : f32 to vector<2x128xf32>
    %160 = arith.addf %159, %158 : vector<2x128xf32>
    %161 = arith.divf %159, %160 : vector<2x128xf32>
    %162 = vector.extract_strided_slice %140 {offsets = [0, 256], sizes = [2, 128], strides = [1, 1]} : vector<2x384xf32> to vector<2x128xf32>
    %163 = vector.extract_strided_slice %145 {offsets = [0, 256], sizes = [2, 128], strides = [1, 1]} : vector<2x384xf32> to vector<2x128xf32>
    %164 = arith.mulf %153, %163 : vector<2x128xf32>
    %165 = arith.addf %162, %164 : vector<2x128xf32>
    %166 = math.tanh %165 : vector<2x128xf32>
    %cst_37 = arith.constant 1.000000e+00 : f32
    %167 = vector.broadcast %cst_37 : f32 to vector<2x128xf32>
    %168 = arith.subf %167, %161 : vector<2x128xf32>
    %169 = arith.mulf %168, %166 : vector<2x128xf32>
    %170 = arith.mulf %161, %139 : vector<2x128xf32>
    %171 = arith.addf %169, %170 : vector<2x128xf32>
    %172 = vector.extract_strided_slice %9 {offsets = [10, 0], sizes = [2, 384], strides = [1, 1]} : vector<16x384xf32> to vector<2x384xf32>
    %173 = arith.truncf %171 : vector<2x128xf32> to vector<2x128xbf16>
    %c0_38 = arith.constant 0 : index
    %c0_39 = arith.constant 0 : index
    %174 = vector.load %arg3[%c0_38, %c0_39] : memref<128x384xbf16, #tpu.memory_space<vmem>>, vector<128x384xbf16>
    %cst_40 = arith.constant dense<0.000000e+00> : vector<2x384xf32>
    %175 = tpu.matmul %173, %174, %cst_40 {dimension_numbers = #tpu.dot_dimension_numbers<[1], [0], [0], [1], [0, 0, 1, 1], [], []>} : vector<2x128xbf16>, vector<128x384xbf16>, vector<2x384xf32> -> vector<2x384xf32>
    %176 = vector.broadcast %10 : vector<1x384xf32> to vector<2x384xf32>
    %177 = arith.addf %175, %176 : vector<2x384xf32>
    %178 = vector.extract_strided_slice %172 {offsets = [0, 0], sizes = [2, 128], strides = [1, 1]} : vector<2x384xf32> to vector<2x128xf32>
    %179 = vector.extract_strided_slice %177 {offsets = [0, 0], sizes = [2, 128], strides = [1, 1]} : vector<2x384xf32> to vector<2x128xf32>
    %180 = arith.addf %178, %179 : vector<2x128xf32>
    %181 = arith.negf %180 : vector<2x128xf32>
    %182 = math.exp %181 : vector<2x128xf32>
    %cst_41 = arith.constant 1.000000e+00 : f32
    %183 = vector.broadcast %cst_41 : f32 to vector<2x128xf32>
    %184 = arith.addf %183, %182 : vector<2x128xf32>
    %185 = arith.divf %183, %184 : vector<2x128xf32>
    %186 = vector.extract_strided_slice %172 {offsets = [0, 128], sizes = [2, 128], strides = [1, 1]} : vector<2x384xf32> to vector<2x128xf32>
    %187 = vector.extract_strided_slice %177 {offsets = [0, 128], sizes = [2, 128], strides = [1, 1]} : vector<2x384xf32> to vector<2x128xf32>
    %188 = arith.addf %186, %187 : vector<2x128xf32>
    %189 = arith.negf %188 : vector<2x128xf32>
    %190 = math.exp %189 : vector<2x128xf32>
    %cst_42 = arith.constant 1.000000e+00 : f32
    %191 = vector.broadcast %cst_42 : f32 to vector<2x128xf32>
    %192 = arith.addf %191, %190 : vector<2x128xf32>
    %193 = arith.divf %191, %192 : vector<2x128xf32>
    %194 = vector.extract_strided_slice %172 {offsets = [0, 256], sizes = [2, 128], strides = [1, 1]} : vector<2x384xf32> to vector<2x128xf32>
    %195 = vector.extract_strided_slice %177 {offsets = [0, 256], sizes = [2, 128], strides = [1, 1]} : vector<2x384xf32> to vector<2x128xf32>
    %196 = arith.mulf %185, %195 : vector<2x128xf32>
    %197 = arith.addf %194, %196 : vector<2x128xf32>
    %198 = math.tanh %197 : vector<2x128xf32>
    %cst_43 = arith.constant 1.000000e+00 : f32
    %199 = vector.broadcast %cst_43 : f32 to vector<2x128xf32>
    %200 = arith.subf %199, %193 : vector<2x128xf32>
    %201 = arith.mulf %200, %198 : vector<2x128xf32>
    %202 = arith.mulf %193, %171 : vector<2x128xf32>
    %203 = arith.addf %201, %202 : vector<2x128xf32>
    %204 = vector.extract_strided_slice %9 {offsets = [12, 0], sizes = [2, 384], strides = [1, 1]} : vector<16x384xf32> to vector<2x384xf32>
    %205 = arith.truncf %203 : vector<2x128xf32> to vector<2x128xbf16>
    %c0_44 = arith.constant 0 : index
    %c0_45 = arith.constant 0 : index
    %206 = vector.load %arg3[%c0_44, %c0_45] : memref<128x384xbf16, #tpu.memory_space<vmem>>, vector<128x384xbf16>
    %cst_46 = arith.constant dense<0.000000e+00> : vector<2x384xf32>
    %207 = tpu.matmul %205, %206, %cst_46 {dimension_numbers = #tpu.dot_dimension_numbers<[1], [0], [0], [1], [0, 0, 1, 1], [], []>} : vector<2x128xbf16>, vector<128x384xbf16>, vector<2x384xf32> -> vector<2x384xf32>
    %208 = vector.broadcast %10 : vector<1x384xf32> to vector<2x384xf32>
    %209 = arith.addf %207, %208 : vector<2x384xf32>
    %210 = vector.extract_strided_slice %204 {offsets = [0, 0], sizes = [2, 128], strides = [1, 1]} : vector<2x384xf32> to vector<2x128xf32>
    %211 = vector.extract_strided_slice %209 {offsets = [0, 0], sizes = [2, 128], strides = [1, 1]} : vector<2x384xf32> to vector<2x128xf32>
    %212 = arith.addf %210, %211 : vector<2x128xf32>
    %213 = arith.negf %212 : vector<2x128xf32>
    %214 = math.exp %213 : vector<2x128xf32>
    %cst_47 = arith.constant 1.000000e+00 : f32
    %215 = vector.broadcast %cst_47 : f32 to vector<2x128xf32>
    %216 = arith.addf %215, %214 : vector<2x128xf32>
    %217 = arith.divf %215, %216 : vector<2x128xf32>
    %218 = vector.extract_strided_slice %204 {offsets = [0, 128], sizes = [2, 128], strides = [1, 1]} : vector<2x384xf32> to vector<2x128xf32>
    %219 = vector.extract_strided_slice %209 {offsets = [0, 128], sizes = [2, 128], strides = [1, 1]} : vector<2x384xf32> to vector<2x128xf32>
    %220 = arith.addf %218, %219 : vector<2x128xf32>
    %221 = arith.negf %220 : vector<2x128xf32>
    %222 = math.exp %221 : vector<2x128xf32>
    %cst_48 = arith.constant 1.000000e+00 : f32
    %223 = vector.broadcast %cst_48 : f32 to vector<2x128xf32>
    %224 = arith.addf %223, %222 : vector<2x128xf32>
    %225 = arith.divf %223, %224 : vector<2x128xf32>
    %226 = vector.extract_strided_slice %204 {offsets = [0, 256], sizes = [2, 128], strides = [1, 1]} : vector<2x384xf32> to vector<2x128xf32>
    %227 = vector.extract_strided_slice %209 {offsets = [0, 256], sizes = [2, 128], strides = [1, 1]} : vector<2x384xf32> to vector<2x128xf32>
    %228 = arith.mulf %217, %227 : vector<2x128xf32>
    %229 = arith.addf %226, %228 : vector<2x128xf32>
    %230 = math.tanh %229 : vector<2x128xf32>
    %cst_49 = arith.constant 1.000000e+00 : f32
    %231 = vector.broadcast %cst_49 : f32 to vector<2x128xf32>
    %232 = arith.subf %231, %225 : vector<2x128xf32>
    %233 = arith.mulf %232, %230 : vector<2x128xf32>
    %234 = arith.mulf %225, %203 : vector<2x128xf32>
    %235 = arith.addf %233, %234 : vector<2x128xf32>
    %236 = vector.extract_strided_slice %9 {offsets = [14, 0], sizes = [2, 384], strides = [1, 1]} : vector<16x384xf32> to vector<2x384xf32>
    %237 = arith.truncf %235 : vector<2x128xf32> to vector<2x128xbf16>
    %c0_50 = arith.constant 0 : index
    %c0_51 = arith.constant 0 : index
    %238 = vector.load %arg3[%c0_50, %c0_51] : memref<128x384xbf16, #tpu.memory_space<vmem>>, vector<128x384xbf16>
    %cst_52 = arith.constant dense<0.000000e+00> : vector<2x384xf32>
    %239 = tpu.matmul %237, %238, %cst_52 {dimension_numbers = #tpu.dot_dimension_numbers<[1], [0], [0], [1], [0, 0, 1, 1], [], []>} : vector<2x128xbf16>, vector<128x384xbf16>, vector<2x384xf32> -> vector<2x384xf32>
    %240 = vector.broadcast %10 : vector<1x384xf32> to vector<2x384xf32>
    %241 = arith.addf %239, %240 : vector<2x384xf32>
    %242 = vector.extract_strided_slice %236 {offsets = [0, 0], sizes = [2, 128], strides = [1, 1]} : vector<2x384xf32> to vector<2x128xf32>
    %243 = vector.extract_strided_slice %241 {offsets = [0, 0], sizes = [2, 128], strides = [1, 1]} : vector<2x384xf32> to vector<2x128xf32>
    %244 = arith.addf %242, %243 : vector<2x128xf32>
    %245 = arith.negf %244 : vector<2x128xf32>
    %246 = math.exp %245 : vector<2x128xf32>
    %cst_53 = arith.constant 1.000000e+00 : f32
    %247 = vector.broadcast %cst_53 : f32 to vector<2x128xf32>
    %248 = arith.addf %247, %246 : vector<2x128xf32>
    %249 = arith.divf %247, %248 : vector<2x128xf32>
    %250 = vector.extract_strided_slice %236 {offsets = [0, 128], sizes = [2, 128], strides = [1, 1]} : vector<2x384xf32> to vector<2x128xf32>
    %251 = vector.extract_strided_slice %241 {offsets = [0, 128], sizes = [2, 128], strides = [1, 1]} : vector<2x384xf32> to vector<2x128xf32>
    %252 = arith.addf %250, %251 : vector<2x128xf32>
    %253 = arith.negf %252 : vector<2x128xf32>
    %254 = math.exp %253 : vector<2x128xf32>
    %cst_54 = arith.constant 1.000000e+00 : f32
    %255 = vector.broadcast %cst_54 : f32 to vector<2x128xf32>
    %256 = arith.addf %255, %254 : vector<2x128xf32>
    %257 = arith.divf %255, %256 : vector<2x128xf32>
    %258 = vector.extract_strided_slice %236 {offsets = [0, 256], sizes = [2, 128], strides = [1, 1]} : vector<2x384xf32> to vector<2x128xf32>
    %259 = vector.extract_strided_slice %241 {offsets = [0, 256], sizes = [2, 128], strides = [1, 1]} : vector<2x384xf32> to vector<2x128xf32>
    %260 = arith.mulf %249, %259 : vector<2x128xf32>
    %261 = arith.addf %258, %260 : vector<2x128xf32>
    %262 = math.tanh %261 : vector<2x128xf32>
    %cst_55 = arith.constant 1.000000e+00 : f32
    %263 = vector.broadcast %cst_55 : f32 to vector<2x128xf32>
    %264 = arith.subf %263, %257 : vector<2x128xf32>
    %265 = arith.mulf %264, %262 : vector<2x128xf32>
    %266 = arith.mulf %257, %235 : vector<2x128xf32>
    %267 = arith.addf %265, %266 : vector<2x128xf32>
    %c0_i32_56 = arith.constant 0 : i32
    %268 = tpu.memref_slice %arg15[%c0_i32_56] : memref<2x!tpu.dma_semaphore, #tpu.memory_space<semaphore_mem>> -> memref<1x!tpu.dma_semaphore, #tpu.memory_space<semaphore_mem>>
    %269 = tpu.memref_squeeze %268 : memref<1x!tpu.dma_semaphore, #tpu.memory_space<semaphore_mem>> -> memref<!tpu.dma_semaphore, #tpu.memory_space<semaphore_mem>>
    tpu.wait_dma2 semaphore(%269 : memref<!tpu.dma_semaphore, #tpu.memory_space<semaphore_mem>>) src(%arg10 : memref<128x268xbf16, #tpu.memory_space<any>>) dst(%arg13 : memref<128x268xbf16, #tpu.memory_space<vmem>>)
    %c1_i32_57 = arith.constant 1 : i32
    %270 = tpu.memref_slice %arg15[%c1_i32_57] : memref<2x!tpu.dma_semaphore, #tpu.memory_space<semaphore_mem>> -> memref<1x!tpu.dma_semaphore, #tpu.memory_space<semaphore_mem>>
    %271 = tpu.memref_squeeze %270 : memref<1x!tpu.dma_semaphore, #tpu.memory_space<semaphore_mem>> -> memref<!tpu.dma_semaphore, #tpu.memory_space<semaphore_mem>>
    tpu.wait_dma2 semaphore(%271 : memref<!tpu.dma_semaphore, #tpu.memory_space<semaphore_mem>>) src(%arg11 : memref<408x268xbf16, #tpu.memory_space<any>>) dst(%arg14 : memref<408x268xbf16, #tpu.memory_space<vmem>>)
    %272 = arith.truncf %267 : vector<2x128xf32> to vector<2x128xbf16>
    %c0_58 = arith.constant 0 : index
    %c0_59 = arith.constant 0 : index
    %273 = vector.load %arg13[%c0_58, %c0_59] : memref<128x268xbf16, #tpu.memory_space<vmem>>, vector<128x268xbf16>
    %cst_60 = arith.constant dense<0.000000e+00> : vector<2x268xf32>
    %274 = tpu.matmul %272, %273, %cst_60 {dimension_numbers = #tpu.dot_dimension_numbers<[1], [0], [0], [1], [0, 0, 1, 1], [], []>} : vector<2x128xbf16>, vector<128x268xbf16>, vector<2x268xf32> -> vector<2x268xf32>
    %c0_61 = arith.constant 0 : index
    %c0_62 = arith.constant 0 : index
    %275 = vector.load %arg6[%c0_61, %c0_62] : memref<2x408xbf16, #tpu.memory_space<vmem>>, vector<2x408xbf16>
    %c0_63 = arith.constant 0 : index
    %c0_64 = arith.constant 0 : index
    %276 = vector.load %arg14[%c0_63, %c0_64] : memref<408x268xbf16, #tpu.memory_space<vmem>>, vector<408x268xbf16>
    %cst_65 = arith.constant dense<0.000000e+00> : vector<2x268xf32>
    %277 = tpu.matmul %275, %276, %cst_65 {dimension_numbers = #tpu.dot_dimension_numbers<[1], [0], [0], [1], [0, 0, 1, 1], [], []>} : vector<2x408xbf16>, vector<408x268xbf16>, vector<2x268xf32> -> vector<2x268xf32>
    %278 = arith.addf %274, %277 : vector<2x268xf32>
    %c0_66 = arith.constant 0 : index
    %c0_67 = arith.constant 0 : index
    %279 = vector.load %arg7[%c0_66, %c0_67] : memref<1x268xf32, #tpu.memory_space<vmem>>, vector<1x268xf32>
    %280 = vector.broadcast %279 : vector<1x268xf32> to vector<2x268xf32>
    %281 = arith.addf %278, %280 : vector<2x268xf32>
    %282 = arith.truncf %281 : vector<2x268xf32> to vector<2x268xbf16>
    %c0_68 = arith.constant 0 : index
    %c0_69 = arith.constant 0 : index
    %283 = vector.load %arg8[%c0_68, %c0_69] : memref<268x13xbf16, #tpu.memory_space<vmem>>, vector<268x13xbf16>
    %cst_70 = arith.constant dense<0.000000e+00> : vector<2x13xf32>
    %284 = tpu.matmul %282, %283, %cst_70 {dimension_numbers = #tpu.dot_dimension_numbers<[1], [0], [0], [1], [0, 0, 1, 1], [], []>} : vector<2x268xbf16>, vector<268x13xbf16>, vector<2x13xf32> -> vector<2x13xf32>
    %c0_71 = arith.constant 0 : index
    %c0_72 = arith.constant 0 : index
    %285 = vector.load %arg9[%c0_71, %c0_72] : memref<1x13xf32, #tpu.memory_space<vmem>>, vector<1x13xf32>
    %286 = vector.broadcast %285 : vector<1x13xf32> to vector<2x13xf32>
    %287 = arith.addf %284, %286 : vector<2x13xf32>
    %cst_73 = arith.constant dense<0xFF800000> : vector<2xf32>
    %288 = vector.multi_reduction <maximumf>, %287, %cst_73 [1] : vector<2x13xf32> to vector<2xf32>
    %289 = vector.shape_cast %288 : vector<2xf32> to vector<2x1xf32>
    %290 = vector.broadcast %289 : vector<2x1xf32> to vector<2x13xf32>
    %291 = arith.subf %287, %290 : vector<2x13xf32>
    %292 = math.exp %291 : vector<2x13xf32>
    %cst_74 = arith.constant dense<0.000000e+00> : vector<2xf32>
    %293 = vector.multi_reduction <add>, %292, %cst_74 [1] : vector<2x13xf32> to vector<2xf32>
    %294 = vector.shape_cast %293 : vector<2xf32> to vector<2x1xf32>
    %295 = tpu.reciprocal %294 : vector<2x1xf32> -> vector<2x1xf32>
    %296 = vector.broadcast %295 : vector<2x1xf32> to vector<2x13xf32>
    %297 = arith.mulf %292, %296 : vector<2x13xf32>
    %c0_75 = arith.constant 0 : index
    %c0_76 = arith.constant 0 : index
    %298 = vector.load %arg12[%c0_75, %c0_76] : memref<2x13xf32, #tpu.memory_space<vmem>>, vector<2x13xf32>
    tpu.vector_store %arg12[%c0_75, %c0_76], %297 {strides = array<i32>} : memref<2x13xf32, #tpu.memory_space<vmem>>, vector<2x13xf32>,
    return
  }
  func.func @transform_0(%arg0: i32) -> (i32, i32) {
    %c0_i32 = arith.constant 0 : i32
    %c0_i32_0 = arith.constant 0 : i32
    %c0_i32_1 = arith.constant 0 : i32
    return %c0_i32, %c0_i32_0 : i32, i32
  }
  func.func @transform_1(%arg0: i32) -> (i32, i32) {
    %c0_i32 = arith.constant 0 : i32
    %c0_i32_0 = arith.constant 0 : i32
    %c0_i32_1 = arith.constant 0 : i32
    return %c0_i32, %c0_i32_0 : i32, i32
  }
  func.func @transform_2(%arg0: i32) -> (i32, i32) {
    %c0_i32 = arith.constant 0 : i32
    %c0_i32_0 = arith.constant 0 : i32
    %c0_i32_1 = arith.constant 0 : i32
    return %c0_i32, %c0_i32_0 : i32, i32
  }
  func.func @transform_3(%arg0: i32) -> (i32, i32) {
    %c0_i32 = arith.constant 0 : i32
    %c0_i32_0 = arith.constant 0 : i32
    %c0_i32_1 = arith.constant 0 : i32
    return %c0_i32, %c0_i32_0 : i32, i32
  }
  func.func @transform_4(%arg0: i32) -> (i32, i32) {
    %c0_i32 = arith.constant 0 : i32
    %c0_i32_0 = arith.constant 0 : i32
    %c0_i32_1 = arith.constant 0 : i32
    return %c0_i32, %c0_i32_0 : i32, i32
  }
  func.func @transform_5(%arg0: i32) -> (i32, i32) {
    %c0_i32 = arith.constant 0 : i32
    %c0_i32_0 = arith.constant 0 : i32
    %c0_i32_1 = arith.constant 0 : i32
    return %c0_i32, %c0_i32_0 : i32, i32
  }
  func.func @transform_6(%arg0: i32) -> (i32, i32) {
    %c0_i32 = arith.constant 0 : i32
    %c0_i32_0 = arith.constant 0 : i32
    %c0_i32_1 = arith.constant 0 : i32
    return %c0_i32, %c0_i32_0 : i32, i32
  }
  func.func @transform_7(%arg0: i32) -> (i32, i32) {
    %c0_i32 = arith.constant 0 : i32
    %c0_i32_0 = arith.constant 0 : i32
    %c0_i32_1 = arith.constant 0 : i32
    return %c0_i32, %c0_i32_0 : i32, i32
  }
  func.func @transform_8(%arg0: i32) -> (i32, i32) {
    %c0_i32 = arith.constant 0 : i32
    %c0_i32_0 = arith.constant 0 : i32
    %c0_i32_1 = arith.constant 0 : i32
    return %c0_i32, %c0_i32_0 : i32, i32
  }
  func.func @transform_11(%arg0: i32) -> (i32, i32) {
    %c0_i32 = arith.constant 0 : i32
    %c0_i32_0 = arith.constant 0 : i32
    %c0_i32_1 = arith.constant 0 : i32
    return %c0_i32, %c0_i32_0 : i32, i32
  }
}

</mosaic_0001>

<llo_original>
// kernel: tpu_custom_call.1
$region0: #{tpu_custom_call.1}
  #allocation0 [shape = 'u32[]', space=smem, size = 0x4, offset = 0x4, fixed_abs, tag = 'smem constant byte address 0x4 - core index']
  #allocation1 [shape = 'u32[144,128]{1,0:T(1,128)}', space=vmem, size = 0x12000, scoped, tag = 'internal scratch']
  #allocation2 [shape = 'bf16[128,268]{1,0:T(16,128)(2,1)}', space=vmem, size = 0x18000, scoped, tag = 'scratch operand']
  #allocation3 [shape = 'bf16[408,268]{1,0:T(8,128)(2,1)}', space=vmem, size = 0x4c800, scoped, tag = 'scratch operand']
  #allocation4 [shape = 's32[2]{0}', space=sflag, size = 0x8, scoped, tag = 'scratch operand']
  #allocation7 [shape = 's32[]', space=sflag, size = 0x4, offset = 0, fixed_abs, tag = 'sflag constant byte address 0x0 - dummy sync flag']
  #allocation8 [shape = 's32[]', space=sflag, size = 0x4, offset = 0, fixed_abs, tag = 'sflag constant byte address 0x0 - dummy sync flag']
  %s0 = inlined_call_operand.vmem [shape: bf16[16,512], index: 0, kind: input, shape index: {}]
  %s1 = inlined_call_operand.vmem [shape: bf16[512,384], index: 1, kind: input, shape index: {}]
  %s2 = inlined_call_operand.vmem [shape: bf16[128,384], index: 2, kind: input, shape index: {}]
  %s3 = inlined_call_operand.vmem [shape: f32[1,384], index: 3, kind: input, shape index: {}]
  %s4 = inlined_call_operand.vmem [shape: f32[1,384], index: 4, kind: input, shape index: {}]
  %s5 = inlined_call_operand.vmem [shape: bf16[2,408], index: 5, kind: input, shape index: {}]
  %s6 = inlined_call_operand.vmem [shape: f32[1,268], index: 6, kind: input, shape index: {}]
  %s7 = inlined_call_operand.vmem [shape: bf16[268,13], index: 7, kind: input, shape index: {}]
  %s8 = inlined_call_operand.vmem [shape: f32[1,13], index: 8, kind: input, shape index: {}]
  %s9 = inlined_call_operand.vmem [shape: bf16[128,268], index: 9, kind: input, shape index: {}]
  %s10 = inlined_call_operand.vmem [shape: bf16[408,268], index: 10, kind: input, shape index: {}]
  %s11 = inlined_call_operand.hbm [shape: f32[2,13], index: 11, kind: output, shape index: {}]
  %s12 = sld [smem:[#allocation0]]
  $region120: #{tpu_custom_call.1} parent=0
    _
  %s14 = ssub.s32 1, %s12
  %s15 = scalar_select 0, %s14, %s12
  $region1: #{tpu_custom_call.1} parent=0
    #allocation5 [shape = 'u8[1024]{0}', space=vmem, size = 0x400, scoped, tag = 'output window, operand 0, single buffered']
    #allocation6 [shape = 's32[1]{0}', space=sflag, size = 0x4, scoped, tag = 'scoped memory for tpu_custom_call.1']
    %16 = vsyncpa [#allocation6], 0
    // Predicated region
    $region2: #{tpu_custom_call.1} parent=1 // pred_check
      _
    $region3: #{tpu_custom_call.1} parent=1 // pred_check_branch
      %18 = sbr.rel (0) target = $region5
    $region4: #{tpu_custom_call.1} parent=1 // pred_region
      _
    $region5: #{tpu_custom_call.1} parent=1 // pred_fallthru
      _
    // Predicated region
    $region6: #{tpu_custom_call.1} parent=1 // pred_check
      _
    $region7: #{tpu_custom_call.1} parent=1 // pred_check_branch
      %20 = sbr.rel (0) target = $region9
    $region8: #{tpu_custom_call.1} parent=1 // pred_region
      _
    $region9: #{tpu_custom_call.1} parent=1 // pred_fallthru
      _
    // Predicated region
    $region10: #{tpu_custom_call.1} parent=1 // pred_check
      _
    $region11: #{tpu_custom_call.1} parent=1 // pred_check_branch
      %22 = sbr.rel (0) target = $region13
    $region12: #{tpu_custom_call.1} parent=1 // pred_region
      _
    $region13: #{tpu_custom_call.1} parent=1 // pred_fallthru
      _
    // Predicated region
    $region14: #{tpu_custom_call.1} parent=1 // pred_check
      _
    $region15: #{tpu_custom_call.1} parent=1 // pred_check_branch
      %24 = sbr.rel (0) target = $region17
    $region16: #{tpu_custom_call.1} parent=1 // pred_region
      _
    $region17: #{tpu_custom_call.1} parent=1 // pred_fallthru
      _
    // Predicated region
    $region18: #{tpu_custom_call.1} parent=1 // pred_check
      _
    $region19: #{tpu_custom_call.1} parent=1 // pred_check_branch
      %26 = sbr.rel (0) target = $region21
    $region20: #{tpu_custom_call.1} parent=1 // pred_region
      _
    $region21: #{tpu_custom_call.1} parent=1 // pred_fallthru
      _
    // Predicated region
    $region22: #{tpu_custom_call.1} parent=1 // pred_check
      _
    $region23: #{tpu_custom_call.1} parent=1 // pred_check_branch
      %28 = sbr.rel (0) target = $region25
    $region24: #{tpu_custom_call.1} parent=1 // pred_region
      _
    $region25: #{tpu_custom_call.1} parent=1 // pred_fallthru
      _
    // Predicated region
    $region26: #{tpu_custom_call.1} parent=1 // pred_check
      _
    $region27: #{tpu_custom_call.1} parent=1 // pred_check_branch
      %30 = sbr.rel (0) target = $region29
    $region28: #{tpu_custom_call.1} parent=1 // pred_region
      _
    $region29: #{tpu_custom_call.1} parent=1 // pred_fallthru
      _
    // Predicated region
    $region30: #{tpu_custom_call.1} parent=1 // pred_check
      _
    $region31: #{tpu_custom_call.1} parent=1 // pred_check_branch
      %32 = sbr.rel (0) target = $region33
    $region32: #{tpu_custom_call.1} parent=1 // pred_region
      _
    $region33: #{tpu_custom_call.1} parent=1 // pred_fallthru
      _
    // Predicated region
    $region34: #{tpu_custom_call.1} parent=1 // pred_check
      _
    $region35: #{tpu_custom_call.1} parent=1 // pred_check_branch
      %34 = sbr.rel (0) target = $region37
    $region36: #{tpu_custom_call.1} parent=1 // pred_region
      _
    $region37: #{tpu_custom_call.1} parent=1 // pred_fallthru
      _
    %p37 = scmp.lt.u32.totalorder 4, 8
    %p38 = pneg %p37
    // Predicated region
    $region38: #{tpu_custom_call.1} parent=1 // pred_check
      _
    $region39: #{tpu_custom_call.1} parent=1 // pred_check_branch
      %40 = sbr.rel (%p37) target = $region41
    $region40: #{tpu_custom_call.1} parent=1 // pred_region
      %s149 = sand.u32 4, 7
      %p150 = scmp.eq.s32.totalorder %s149, 0
      %p151 = pneg %p150
      // Predicated region
      $region53: #{tpu_custom_call.1} parent=40 // pred_check
        _
      $region54: #{tpu_custom_call.1} parent=40 // pred_check_branch
        %153 = sbr.rel (%p150) target = $region56
      $region55: #{tpu_custom_call.1} parent=40 // pred_region
        %s154 = sand.u32 4, 7
        %s155 = ssub.s32 4, %s154
        %s156 = scalar_lea.vmem %s9, %s155
        %s157 = ssub.s32 4, %s154
        %s158 = scalar_lea.vmem [#allocation2], %s157
        loop: start=0, step=1, limit=1
        $region57: #{tpu_custom_call.1} parent=55 // loop_pre_header
          _
        $region58: #{tpu_custom_call.1} parent=55 // loop_header
          %s160 = sphi 0, %s164
          %p161 = scmp.ge.s32.totalorder %s160, 1
          %s165 = sphi %s9, %s9
          %s166 = sphi [#allocation2], [#allocation2]
        $region59: #{tpu_custom_call.1} parent=55 // loop_header_branch
          %163 = sbr.rel (%p161) target = $region63
        $region60: #{tpu_custom_call.1} parent=55 // loop_body
          _
        $region61: #{tpu_custom_call.1} parent=55 // loop_footer
          %s164 = sadd.s32 1, %s160
        $region62: #{tpu_custom_call.1} parent=55 // loop_footer_branch
          %159 = sbr.rel target = $region58
        $region63: #{tpu_custom_call.1} parent=55 // loop_exit
          _
        %s167 = sshllo.u32 0, %s154
        loop: start=0, step=1, limit=1
        $region64: #{tpu_custom_call.1} parent=55 // loop_pre_header
          _
        $region65: #{tpu_custom_call.1} parent=55 // loop_header
          %s169 = sphi 0, %s173
          %p170 = scmp.ge.s32.totalorder %s169, 1
          %s174 = sphi %s156, %s156
          %s175 = sphi %s158, %s158
        $region66: #{tpu_custom_call.1} parent=55 // loop_header_branch
          %172 = sbr.rel (%p170) target = $region70
        $region67: #{tpu_custom_call.1} parent=55 // loop_body
          %v176 = vld [vmem:[%s174] sm:%s167]
          %177 = vst [vmem:[%s175] sm:%s167] %v176
          %v178 = vld [vmem:[%s174 + $0xc] sm:%s167]
          %179 = vst [vmem:[%s175 + $0x4] sm:%s167] %v178
          %v180 = vld [vmem:[%s174 + $0x4] sm:%s167]
          %181 = vst [vmem:[%s175 + $0x8] sm:%s167] %v180
          %v182 = vld [vmem:[%s174 + $0x10] sm:%s167]
          %183 = vst [vmem:[%s175 + $0xc] sm:%s167] %v182
          %v184 = vld [vmem:[%s174 + $0x8] sm:%s167]
          %185 = vst [vmem:[%s175 + $0x10] sm:%s167] %v184
          %v186 = vld [vmem:[%s174 + $0x14] sm:%s167]
          %187 = vst [vmem:[%s175 + $0x14] sm:%s167] %v186
          %v188 = vld [vmem:[%s174 + $0x18] sm:%s167]
          %189 = vst [vmem:[%s175 + $0x18] sm:%s167] %v188
          %v190 = vld [vmem:[%s174 + $0x24] sm:%s167]
          %191 = vst [vmem:[%s175 + $0x1c] sm:%s167] %v190
          %v192 = vld [vmem:[%s174 + $0x1c] sm:%s167]
          %193 = vst [vmem:[%s175 + $0x20] sm:%s167] %v192
          %v194 = vld [vmem:[%s174 + $0x28] sm:%s167]
          %195 = vst [vmem:[%s175 + $0x24] sm:%s167] %v194
          %v196 = vld [vmem:[%s174 + $0x20] sm:%s167]
          %197 = vst [vmem:[%s175 + $0x28] sm:%s167] %v196
          %v198 = vld [vmem:[%s174 + $0x2c] sm:%s167]
          %199 = vst [vmem:[%s175 + $0x2c] sm:%s167] %v198
          %v200 = vld [vmem:[%s174 + $0x30] sm:%s167]
          %201 = vst [vmem:[%s175 + $0x30] sm:%s167] %v200
          %v202 = vld [vmem:[%s174 + $0x3c] sm:%s167]
          %203 = vst [vmem:[%s175 + $0x34] sm:%s167] %v202
          %v204 = vld [vmem:[%s174 + $0x34] sm:%s167]
          %205 = vst [vmem:[%s175 + $0x38] sm:%s167] %v204
          %v206 = vld [vmem:[%s174 + $0x40] sm:%s167]
          %207 = vst [vmem:[%s175 + $0x3c] sm:%s167] %v206
          %v208 = vld [vmem:[%s174 + $0x38] sm:%s167]
          %209 = vst [vmem:[%s175 + $0x40] sm:%s167] %v208
          %v210 = vld [vmem:[%s174 + $0x44] sm:%s167]
          %211 = vst [vmem:[%s175 + $0x44] sm:%s167] %v210
          %v212 = vld [vmem:[%s174 + $0x48] sm:%s167]
          %213 = vst [vmem:[%s175 + $0x48] sm:%s167] %v212
          %v214 = vld [vmem:[%s174 + $0x54] sm:%s167]
          %215 = vst [vmem:[%s175 + $0x4c] sm:%s167] %v214
          %v216 = vld [vmem:[%s174 + $0x4c] sm:%s167]
          %217 = vst [vmem:[%s175 + $0x50] sm:%s167] %v216
          %v218 = vld [vmem:[%s174 + $0x58] sm:%s167]
          %219 = vst [vmem:[%s175 + $0x54] sm:%s167] %v218
          %v220 = vld [vmem:[%s174 + $0x50] sm:%s167]
          %221 = vst [vmem:[%s175 + $0x58] sm:%s167] %v220
          %v222 = vld [vmem:[%s174 + $0x5c] sm:%s167]
          %223 = vst [vmem:[%s175 + $0x5c] sm:%s167] %v222
          %v224 = vld [vmem:[%s174 + $0x60] sm:%s167]
          %225 = vst [vmem:[%s175 + $0x60] sm:%s167] %v224
          %v226 = vld [vmem:[%s174 + $0x6c] sm:%s167]
          %227 = vst [vmem:[%s175 + $0x64] sm:%s167] %v226
          %v228 = vld [vmem:[%s174 + $0x64] sm:%s167]
          %229 = vst [vmem:[%s175 + $0x68] sm:%s167] %v228
          %v230 = vld [vmem:[%s174 + $0x70] sm:%s167]
          %231 = vst [vmem:[%s175 + $0x6c] sm:%s167] %v230
          %v232 = vld [vmem:[%s174 + $0x68] sm:%s167]
          %233 = vst [vmem:[%s175 + $0x70] sm:%s167] %v232
          %v234 = vld [vmem:[%s174 + $0x74] sm:%s167]
          %235 = vst [vmem:[%s175 + $0x74] sm:%s167] %v234
          %v236 = vld [vmem:[%s174 + $0x78] sm:%s167]
          %237 = vst [vmem:[%s175 + $0x78] sm:%s167] %v236
          %v238 = vld [vmem:[%s174 + $0x84] sm:%s167]
          %239 = vst [vmem:[%s175 + $0x7c] sm:%s167] %v238
          %v240 = vld [vmem:[%s174 + $0x7c] sm:%s167]
          %241 = vst [vmem:[%s175 + $0x80] sm:%s167] %v240
          %v242 = vld [vmem:[%s174 + $0x88] sm:%s167]
          %243 = vst [vmem:[%s175 + $0x84] sm:%s167] %v242
          %v244 = vld [vmem:[%s174 + $0x80] sm:%s167]
          %245 = vst [vmem:[%s175 + $0x88] sm:%s167] %v244
          %v246 = vld [vmem:[%s174 + $0x8c] sm:%s167]
          %247 = vst [vmem:[%s175 + $0x8c] sm:%s167] %v246
          %v248 = vld [vmem:[%s174 + $0x90] sm:%s167]
          %249 = vst [vmem:[%s175 + $0x90] sm:%s167] %v248
          %v250 = vld [vmem:[%s174 + $0x9c] sm:%s167]
          %251 = vst [vmem:[%s175 + $0x94] sm:%s167] %v250
          %v252 = vld [vmem:[%s174 + $0x94] sm:%s167]
          %253 = vst [vmem:[%s175 + $0x98] sm:%s167] %v252
          %v254 = vld [vmem:[%s174 + $0xa0] sm:%s167]
          %255 = vst [vmem:[%s175 + $0x9c] sm:%s167] %v254
          %v256 = vld [vmem:[%s174 + $0x98] sm:%s167]
          %257 = vst [vmem:[%s175 + $0xa0] sm:%s167] %v256
          %v258 = vld [vmem:[%s174 + $0xa4] sm:%s167]
          %259 = vst [vmem:[%s175 + $0xa4] sm:%s167] %v258
          %v260 = vld [vmem:[%s174 + $0xa8] sm:%s167]
          %261 = vst [vmem:[%s175 + $0xa8] sm:%s167] %v260
          %v262 = vld [vmem:[%s174 + $0xb4] sm:%s167]
          %263 = vst [vmem:[%s175 + $0xac] sm:%s167] %v262
          %v264 = vld [vmem:[%s174 + $0xac] sm:%s167]
          %265 = vst [vmem:[%s175 + $0xb0] sm:%s167] %v264
          %v266 = vld [vmem:[%s174 + $0xb8] sm:%s167]
          %267 = vst [vmem:[%s175 + $0xb4] sm:%s167] %v266
          %v268 = vld [vmem:[%s174 + $0xb0] sm:%s167]
          %269 = vst [vmem:[%s175 + $0xb8] sm:%s167] %v268
          %v270 = vld [vmem:[%s174 + $0xbc] sm:%s167]
          %271 = vst [vmem:[%s175 + $0xbc] sm:%s167] %v270
        $region68: #{tpu_custom_call.1} parent=55 // loop_footer
          %s173 = sadd.s32 1, %s169
        $region69: #{tpu_custom_call.1} parent=55 // loop_footer_branch
          %168 = sbr.rel target = $region65
        $region70: #{tpu_custom_call.1} parent=55 // loop_exit
          _
      $region56: #{tpu_custom_call.1} parent=40 // pred_fallthru
        _
    $region41: #{tpu_custom_call.1} parent=1 // pred_fallthru
      _
    // Predicated region
    $region42: #{tpu_custom_call.1} parent=1 // pred_check
      %p41 = pneg %p37
    $region43: #{tpu_custom_call.1} parent=1 // pred_check_branch
      %43 = sbr.rel (%p41) target = $region45
    $region44: #{tpu_custom_call.1} parent=1 // pred_region
      %s44 = sshllo.u32 0, 4
      loop: start=0, step=1, limit=1
      $region46: #{tpu_custom_call.1} parent=44 // loop_pre_header
        _
      $region47: #{tpu_custom_call.1} parent=44 // loop_header
        %s46 = sphi 0, %s50
        %p47 = scmp.ge.s32.totalorder %s46, 1
        %s51 = sphi %s9, %s9
        %s52 = sphi [#allocation2], [#allocation2]
      $region48: #{tpu_custom_call.1} parent=44 // loop_header_branch
        %49 = sbr.rel (%p47) target = $region52
      $region49: #{tpu_custom_call.1} parent=44 // loop_body
        %v53 = vld [vmem:[%s51] sm:%s44]
        %54 = vst [vmem:[%s52] sm:%s44] %v53
        %v55 = vld [vmem:[%s51 + $0xc] sm:%s44]
        %56 = vst [vmem:[%s52 + $0x4] sm:%s44] %v55
        %v57 = vld [vmem:[%s51 + $0x4] sm:%s44]
        %58 = vst [vmem:[%s52 + $0x8] sm:%s44] %v57
        %v59 = vld [vmem:[%s51 + $0x10] sm:%s44]
        %60 = vst [vmem:[%s52 + $0xc] sm:%s44] %v59
        %v61 = vld [vmem:[%s51 + $0x8] sm:%s44]
        %62 = vst [vmem:[%s52 + $0x10] sm:%s44] %v61
        %v63 = vld [vmem:[%s51 + $0x14] sm:%s44]
        %64 = vst [vmem:[%s52 + $0x14] sm:%s44] %v63
        %v65 = vld [vmem:[%s51 + $0x18] sm:%s44]
        %66 = vst [vmem:[%s52 + $0x18] sm:%s44] %v65
        %v67 = vld [vmem:[%s51 + $0x24] sm:%s44]
        %68 = vst [vmem:[%s52 + $0x1c] sm:%s44] %v67
        %v69 = vld [vmem:[%s51 + $0x1c] sm:%s44]
        %70 = vst [vmem:[%s52 + $0x20] sm:%s44] %v69
        %v71 = vld [vmem:[%s51 + $0x28] sm:%s44]
        %72 = vst [vmem:[%s52 + $0x24] sm:%s44] %v71
        %v73 = vld [vmem:[%s51 + $0x20] sm:%s44]
        %74 = vst [vmem:[%s52 + $0x28] sm:%s44] %v73
        %v75 = vld [vmem:[%s51 + $0x2c] sm:%s44]
        %76 = vst [vmem:[%s52 + $0x2c] sm:%s44] %v75
        %v77 = vld [vmem:[%s51 + $0x30] sm:%s44]
        %78 = vst [vmem:[%s52 + $0x30] sm:%s44] %v77
        %v79 = vld [vmem:[%s51 + $0x3c] sm:%s44]
        %80 = vst [vmem:[%s52 + $0x34] sm:%s44] %v79
        %v81 = vld [vmem:[%s51 + $0x34] sm:%s44]
        %82 = vst [vmem:[%s52 + $0x38] sm:%s44] %v81
        %v83 = vld [vmem:[%s51 + $0x40] sm:%s44]
        %84 = vst [vmem:[%s52 + $0x3c] sm:%s44] %v83
        %v85 = vld [vmem:[%s51 + $0x38] sm:%s44]
        %86 = vst [vmem:[%s52 + $0x40] sm:%s44] %v85
        %v87 = vld [vmem:[%s51 + $0x44] sm:%s44]
        %88 = vst [vmem:[%s52 + $0x44] sm:%s44] %v87
        %v89 = vld [vmem:[%s51 + $0x48] sm:%s44]
        %90 = vst [vmem:[%s52 + $0x48] sm:%s44] %v89
        %v91 = vld [vmem:[%s51 + $0x54] sm:%s44]
        %92 = vst [vmem:[%s52 + $0x4c] sm:%s44] %v91
        %v93 = vld [vmem:[%s51 + $0x4c] sm:%s44]
        %94 = vst [vmem:[%s52 + $0x50] sm:%s44] %v93
        %v95 = vld [vmem:[%s51 + $0x58] sm:%s44]
        %96 = vst [vmem:[%s52 + $0x54] sm:%s44] %v95
        %v97 = vld [vmem:[%s51 + $0x50] sm:%s44]
        %98 = vst [vmem:[%s52 + $0x58] sm:%s44] %v97
        %v99 = vld [vmem:[%s51 + $0x5c] sm:%s44]
        %100 = vst [vmem:[%s52 + $0x5c] sm:%s44] %v99
        %v101 = vld [vmem:[%s51 + $0x60] sm:%s44]
        %102 = vst [vmem:[%s52 + $0x60] sm:%s44] %v101
        %v103 = vld [vmem:[%s51 + $0x6c] sm:%s44]
        %104 = vst [vmem:[%s52 + $0x64] sm:%s44] %v103
        %v105 = vld [vmem:[%s51 + $0x64] sm:%s44]
        %106 = vst [vmem:[%s52 + $0x68] sm:%s44] %v105
        %v107 = vld [vmem:[%s51 + $0x70] sm:%s44]
        %108 = vst [vmem:[%s52 + $0x6c] sm:%s44] %v107
        %v109 = vld [vmem:[%s51 + $0x68] sm:%s44]
        %110 = vst [vmem:[%s52 + $0x70] sm:%s44] %v109
        %v111 = vld [vmem:[%s51 + $0x74] sm:%s44]
        %112 = vst [vmem:[%s52 + $0x74] sm:%s44] %v111
        %v113 = vld [vmem:[%s51 + $0x78] sm:%s44]
        %114 = vst [vmem:[%s52 + $0x78] sm:%s44] %v113
        %v115 = vld [vmem:[%s51 + $0x84] sm:%s44]
        %116 = vst [vmem:[%s52 + $0x7c] sm:%s44] %v115
        %v117 = vld [vmem:[%s51 + $0x7c] sm:%s44]
        %118 = vst [vmem:[%s52 + $0x80] sm:%s44] %v117
        %v119 = vld [vmem:[%s51 + $0x88] sm:%s44]
        %120 = vst [vmem:[%s52 + $0x84] sm:%s44] %v119
        %v121 = vld [vmem:[%s51 + $0x80] sm:%s44]
        %122 = vst [vmem:[%s52 + $0x88] sm:%s44] %v121
        %v123 = vld [vmem:[%s51 + $0x8c] sm:%s44]
        %124 = vst [vmem:[%s52 + $0x8c] sm:%s44] %v123
        %v125 = vld [vmem:[%s51 + $0x90] sm:%s44]
        %126 = vst [vmem:[%s52 + $0x90] sm:%s44] %v125
        %v127 = vld [vmem:[%s51 + $0x9c] sm:%s44]
        %128 = vst [vmem:[%s52 + $0x94] sm:%s44] %v127
        %v129 = vld [vmem:[%s51 + $0x94] sm:%s44]
        %130 = vst [vmem:[%s52 + $0x98] sm:%s44] %v129
        %v131 = vld [vmem:[%s51 + $0xa0] sm:%s44]
        %132 = vst [vmem:[%s52 + $0x9c] sm:%s44] %v131
        %v133 = vld [vmem:[%s51 + $0x98] sm:%s44]
        %134 = vst [vmem:[%s52 + $0xa0] sm:%s44] %v133
        %v135 = vld [vmem:[%s51 + $0xa4] sm:%s44]
        %136 = vst [vmem:[%s52 + $0xa4] sm:%s44] %v135
        %v137 = vld [vmem:[%s51 + $0xa8] sm:%s44]
        %138 = vst [vmem:[%s52 + $0xa8] sm:%s44] %v137
        %v139 = vld [vmem:[%s51 + $0xb4] sm:%s44]
        %140 = vst [vmem:[%s52 + $0xac] sm:%s44] %v139
        %v141 = vld [vmem:[%s51 + $0xac] sm:%s44]
        %142 = vst [vmem:[%s52 + $0xb0] sm:%s44] %v141
        %v143 = vld [vmem:[%s51 + $0xb8] sm:%s44]
        %144 = vst [vmem:[%s52 + $0xb4] sm:%s44] %v143
        %v145 = vld [vmem:[%s51 + $0xb0] sm:%s44]
        %146 = vst [vmem:[%s52 + $0xb8] sm:%s44] %v145
        %v147 = vld [vmem:[%s51 + $0xbc] sm:%s44]
        %148 = vst [vmem:[%s52 + $0xbc] sm:%s44] %v147
      $region50: #{tpu_custom_call.1} parent=44 // loop_footer
        %s50 = sadd.s32 1, %s46
      $region51: #{tpu_custom_call.1} parent=44 // loop_footer_branch
        %45 = sbr.rel target = $region47
      $region52: #{tpu_custom_call.1} parent=44 // loop_exit
        _
    $region45: #{tpu_custom_call.1} parent=1 // pred_fallthru
      _
    // Predicated region
    $region71: #{tpu_custom_call.1} parent=1 // pred_check
      _
    $region72: #{tpu_custom_call.1} parent=1 // pred_check_branch
      %274 = sbr.rel (0) target = $region74
    $region73: #{tpu_custom_call.1} parent=1 // pred_region
      %275 = vsyncadd [#allocation4], 3072
    $region74: #{tpu_custom_call.1} parent=1 // pred_fallthru
      _
    %s276 = scalar_lea.sflag [#allocation4], 1
    %p278 = scmp.lt.u32.totalorder 612, 8
    %p279 = pneg %p278
    // Predicated region
    $region75: #{tpu_custom_call.1} parent=1 // pred_check
      _
    $region76: #{tpu_custom_call.1} parent=1 // pred_check_branch
      %281 = sbr.rel (%p278) target = $region78
    $region77: #{tpu_custom_call.1} parent=1 // pred_region
      %s296 = sand.u32 612, 7
      %p297 = scmp.eq.s32.totalorder %s296, 0
      %p298 = pneg %p297
      // Predicated region
      $region90: #{tpu_custom_call.1} parent=77 // pred_check
        _
      $region91: #{tpu_custom_call.1} parent=77 // pred_check_branch
        %300 = sbr.rel (%p297) target = $region93
      $region92: #{tpu_custom_call.1} parent=77 // pred_region
        %s301 = sand.u32 612, 7
        %s302 = ssub.s32 612, %s301
        %s303 = scalar_lea.vmem %s10, %s302
        %s304 = ssub.s32 612, %s301
        %s305 = scalar_lea.vmem [#allocation3], %s304
        loop: start=0, step=1, limit=1
        $region94: #{tpu_custom_call.1} parent=92 // loop_pre_header
          _
        $region95: #{tpu_custom_call.1} parent=92 // loop_header
          %s307 = sphi 0, %s311
          %p308 = scmp.ge.s32.totalorder %s307, 1
          %s312 = sphi %s10, %s10
          %s313 = sphi [#allocation3], [#allocation3]
        $region96: #{tpu_custom_call.1} parent=92 // loop_header_branch
          %310 = sbr.rel (%p308) target = $region100
        $region97: #{tpu_custom_call.1} parent=92 // loop_body
          %v314 = vld [vmem:[%s312] sm:$0xff]
          %315 = vst [vmem:[%s313] sm:$0xff] %v314
          %v316 = vld [vmem:[%s312 + $0x8] sm:$0xff]
          %317 = vst [vmem:[%s313 + $0x8] sm:$0xff] %v316
          %v318 = vld [vmem:[%s312 + $0x10] sm:$0xff]
          %319 = vst [vmem:[%s313 + $0x10] sm:$0xff] %v318
          %v320 = vld [vmem:[%s312 + $0x18] sm:$0xff]
          %321 = vst [vmem:[%s313 + $0x18] sm:$0xff] %v320
          %v322 = vld [vmem:[%s312 + $0x20] sm:$0xff]
          %323 = vst [vmem:[%s313 + $0x20] sm:$0xff] %v322
          %v324 = vld [vmem:[%s312 + $0x28] sm:$0xff]
          %325 = vst [vmem:[%s313 + $0x28] sm:$0xff] %v324
          %v326 = vld [vmem:[%s312 + $0x30] sm:$0xff]
          %327 = vst [vmem:[%s313 + $0x30] sm:$0xff] %v326
          %v328 = vld [vmem:[%s312 + $0x38] sm:$0xff]
          %329 = vst [vmem:[%s313 + $0x38] sm:$0xff] %v328
          %v330 = vld [vmem:[%s312 + $0x40] sm:$0xff]
          %331 = vst [vmem:[%s313 + $0x40] sm:$0xff] %v330
          %v332 = vld [vmem:[%s312 + $0x48] sm:$0xff]
          %333 = vst [vmem:[%s313 + $0x48] sm:$0xff] %v332
          %v334 = vld [vmem:[%s312 + $0x50] sm:$0xff]
          %335 = vst [vmem:[%s313 + $0x50] sm:$0xff] %v334
          %v336 = vld [vmem:[%s312 + $0x58] sm:$0xff]
          %337 = vst [vmem:[%s313 + $0x58] sm:$0xff] %v336
          %v338 = vld [vmem:[%s312 + $0x60] sm:$0xff]
          %339 = vst [vmem:[%s313 + $0x60] sm:$0xff] %v338
          %v340 = vld [vmem:[%s312 + $0x68] sm:$0xff]
          %341 = vst [vmem:[%s313 + $0x68] sm:$0xff] %v340
          %v342 = vld [vmem:[%s312 + $0x70] sm:$0xff]
          %343 = vst [vmem:[%s313 + $0x70] sm:$0xff] %v342
          %v344 = vld [vmem:[%s312 + $0x78] sm:$0xff]
          %345 = vst [vmem:[%s313 + $0x78] sm:$0xff] %v344
          %v346 = vld [vmem:[%s312 + $0x80] sm:$0xff]
          %347 = vst [vmem:[%s313 + $0x80] sm:$0xff] %v346
          %v348 = vld [vmem:[%s312 + $0x88] sm:$0xff]
          %349 = vst [vmem:[%s313 + $0x88] sm:$0xff] %v348
          %v350 = vld [vmem:[%s312 + $0x90] sm:$0xff]
          %351 = vst [vmem:[%s313 + $0x90] sm:$0xff] %v350
          %v352 = vld [vmem:[%s312 + $0x98] sm:$0xff]
          %353 = vst [vmem:[%s313 + $0x98] sm:$0xff] %v352
          %v354 = vld [vmem:[%s312 + $0xa0] sm:$0xff]
          %355 = vst [vmem:[%s313 + $0xa0] sm:$0xff] %v354
          %v356 = vld [vmem:[%s312 + $0xa8] sm:$0xff]
          %357 = vst [vmem:[%s313 + $0xa8] sm:$0xff] %v356
          %v358 = vld [vmem:[%s312 + $0xb0] sm:$0xff]
          %359 = vst [vmem:[%s313 + $0xb0] sm:$0xff] %v358
          %v360 = vld [vmem:[%s312 + $0xb8] sm:$0xff]
          %361 = vst [vmem:[%s313 + $0xb8] sm:$0xff] %v360
          %v362 = vld [vmem:[%s312 + $0xc0] sm:$0xff]
          %363 = vst [vmem:[%s313 + $0xc0] sm:$0xff] %v362
          %v364 = vld [vmem:[%s312 + $0xc8] sm:$0xff]
          %365 = vst [vmem:[%s313 + $0xc8] sm:$0xff] %v364
          %v366 = vld [vmem:[%s312 + $0xd0] sm:$0xff]
          %367 = vst [vmem:[%s313 + $0xd0] sm:$0xff] %v366
          %v368 = vld [vmem:[%s312 + $0xd8] sm:$0xff]
          %369 = vst [vmem:[%s313 + $0xd8] sm:$0xff] %v368
          %v370 = vld [vmem:[%s312 + $0xe0] sm:$0xff]
          %371 = vst [vmem:[%s313 + $0xe0] sm:$0xff] %v370
          %v372 = vld [vmem:[%s312 + $0xe8] sm:$0xff]
          %373 = vst [vmem:[%s313 + $0xe8] sm:$0xff] %v372
          %v374 = vld [vmem:[%s312 + $0xf0] sm:$0xff]
          %375 = vst [vmem:[%s313 + $0xf0] sm:$0xff] %v374
          %v376 = vld [vmem:[%s312 + $0xf8] sm:$0xff]
          %377 = vst [vmem:[%s313 + $0xf8] sm:$0xff] %v376
          %v378 = vld [vmem:[%s312 + $0x100] sm:$0xff]
          %379 = vst [vmem:[%s313 + $0x100] sm:$0xff] %v378
          %v380 = vld [vmem:[%s312 + $0x108] sm:$0xff]
          %381 = vst [vmem:[%s313 + $0x108] sm:$0xff] %v380
          %v382 = vld [vmem:[%s312 + $0x110] sm:$0xff]
          %383 = vst [vmem:[%s313 + $0x110] sm:$0xff] %v382
          %v384 = vld [vmem:[%s312 + $0x118] sm:$0xff]
          %385 = vst [vmem:[%s313 + $0x118] sm:$0xff] %v384
          %v386 = vld [vmem:[%s312 + $0x120] sm:$0xff]
          %387 = vst [vmem:[%s313 + $0x120] sm:$0xff] %v386
          %v388 = vld [vmem:[%s312 + $0x128] sm:$0xff]
          %389 = vst [vmem:[%s313 + $0x128] sm:$0xff] %v388
          %v390 = vld [vmem:[%s312 + $0x130] sm:$0xff]
          %391 = vst [vmem:[%s313 + $0x130] sm:$0xff] %v390
          %v392 = vld [vmem:[%s312 + $0x138] sm:$0xff]
          %393 = vst [vmem:[%s313 + $0x138] sm:$0xff] %v392
          %v394 = vld [vmem:[%s312 + $0x140] sm:$0xff]
          %395 = vst [vmem:[%s313 + $0x140] sm:$0xff] %v394
          %v396 = vld [vmem:[%s312 + $0x148] sm:$0xff]
          %397 = vst [vmem:[%s313 + $0x148] sm:$0xff] %v396
          %v398 = vld [vmem:[%s312 + $0x150] sm:$0xff]
          %399 = vst [vmem:[%s313 + $0x150] sm:$0xff] %v398
          %v400 = vld [vmem:[%s312 + $0x158] sm:$0xff]
          %401 = vst [vmem:[%s313 + $0x158] sm:$0xff] %v400
          %v402 = vld [vmem:[%s312 + $0x160] sm:$0xff]
          %403 = vst [vmem:[%s313 + $0x160] sm:$0xff] %v402
          %v404 = vld [vmem:[%s312 + $0x168] sm:$0xff]
          %405 = vst [vmem:[%s313 + $0x168] sm:$0xff] %v404
          %v406 = vld [vmem:[%s312 + $0x170] sm:$0xff]
          %407 = vst [vmem:[%s313 + $0x170] sm:$0xff] %v406
          %v408 = vld [vmem:[%s312 + $0x178] sm:$0xff]
          %409 = vst [vmem:[%s313 + $0x178] sm:$0xff] %v408
          %v410 = vld [vmem:[%s312 + $0x180] sm:$0xff]
          %411 = vst [vmem:[%s313 + $0x180] sm:$0xff] %v410
          %v412 = vld [vmem:[%s312 + $0x188] sm:$0xff]
          %413 = vst [vmem:[%s313 + $0x188] sm:$0xff] %v412
          %v414 = vld [vmem:[%s312 + $0x190] sm:$0xff]
          %415 = vst [vmem:[%s313 + $0x190] sm:$0xff] %v414
          %v416 = vld [vmem:[%s312 + $0x198] sm:$0xff]
          %417 = vst [vmem:[%s313 + $0x198] sm:$0xff] %v416
          %v418 = vld [vmem:[%s312 + $0x1a0] sm:$0xff]
          %419 = vst [vmem:[%s313 + $0x1a0] sm:$0xff] %v418
          %v420 = vld [vmem:[%s312 + $0x1a8] sm:$0xff]
          %421 = vst [vmem:[%s313 + $0x1a8] sm:$0xff] %v420
          %v422 = vld [vmem:[%s312 + $0x1b0] sm:$0xff]
          %423 = vst [vmem:[%s313 + $0x1b0] sm:$0xff] %v422
          %v424 = vld [vmem:[%s312 + $0x1b8] sm:$0xff]
          %425 = vst [vmem:[%s313 + $0x1b8] sm:$0xff] %v424
          %v426 = vld [vmem:[%s312 + $0x1c0] sm:$0xff]
          %427 = vst [vmem:[%s313 + $0x1c0] sm:$0xff] %v426
          %v428 = vld [vmem:[%s312 + $0x1c8] sm:$0xff]
          %429 = vst [vmem:[%s313 + $0x1c8] sm:$0xff] %v428
          %v430 = vld [vmem:[%s312 + $0x1d0] sm:$0xff]
          %431 = vst [vmem:[%s313 + $0x1d0] sm:$0xff] %v430
          %v432 = vld [vmem:[%s312 + $0x1d8] sm:$0xff]
          %433 = vst [vmem:[%s313 + $0x1d8] sm:$0xff] %v432
          %v434 = vld [vmem:[%s312 + $0x1e0] sm:$0xff]
          %435 = vst [vmem:[%s313 + $0x1e0] sm:$0xff] %v434
          %v436 = vld [vmem:[%s312 + $0x1e8] sm:$0xff]
          %437 = vst [vmem:[%s313 + $0x1e8] sm:$0xff] %v436
          %v438 = vld [vmem:[%s312 + $0x1f0] sm:$0xff]
          %439 = vst [vmem:[%s313 + $0x1f0] sm:$0xff] %v438
          %v440 = vld [vmem:[%s312 + $0x1f8] sm:$0xff]
          %441 = vst [vmem:[%s313 + $0x1f8] sm:$0xff] %v440
          %v442 = vld [vmem:[%s312 + $0x200] sm:$0xff]
          %443 = vst [vmem:[%s313 + $0x200] sm:$0xff] %v442
          %v444 = vld [vmem:[%s312 + $0x208] sm:$0xff]
          %445 = vst [vmem:[%s313 + $0x208] sm:$0xff] %v444
          %v446 = vld [vmem:[%s312 + $0x210] sm:$0xff]
          %447 = vst [vmem:[%s313 + $0x210] sm:$0xff] %v446
          %v448 = vld [vmem:[%s312 + $0x218] sm:$0xff]
          %449 = vst [vmem:[%s313 + $0x218] sm:$0xff] %v448
          %v450 = vld [vmem:[%s312 + $0x220] sm:$0xff]
          %451 = vst [vmem:[%s313 + $0x220] sm:$0xff] %v450
          %v452 = vld [vmem:[%s312 + $0x228] sm:$0xff]
          %453 = vst [vmem:[%s313 + $0x228] sm:$0xff] %v452
          %v454 = vld [vmem:[%s312 + $0x230] sm:$0xff]
          %455 = vst [vmem:[%s313 + $0x230] sm:$0xff] %v454
          %v456 = vld [vmem:[%s312 + $0x238] sm:$0xff]
          %457 = vst [vmem:[%s313 + $0x238] sm:$0xff] %v456
          %v458 = vld [vmem:[%s312 + $0x240] sm:$0xff]
          %459 = vst [vmem:[%s313 + $0x240] sm:$0xff] %v458
          %v460 = vld [vmem:[%s312 + $0x248] sm:$0xff]
          %461 = vst [vmem:[%s313 + $0x248] sm:$0xff] %v460
          %v462 = vld [vmem:[%s312 + $0x250] sm:$0xff]
          %463 = vst [vmem:[%s313 + $0x250] sm:$0xff] %v462
          %v464 = vld [vmem:[%s312 + $0x258] sm:$0xff]
          %465 = vst [vmem:[%s313 + $0x258] sm:$0xff] %v464
        $region98: #{tpu_custom_call.1} parent=92 // loop_footer
          %s311 = sadd.s32 1, %s307
        $region99: #{tpu_custom_call.1} parent=92 // loop_footer_branch
          %306 = sbr.rel target = $region95
        $region100: #{tpu_custom_call.1} parent=92 // loop_exit
          _
        %s466 = sshllo.u32 0, %s301
        loop: start=0, step=1, limit=1
        $region101: #{tpu_custom_call.1} parent=92 // loop_pre_header
          _
        $region102: #{tpu_custom_call.1} parent=92 // loop_header
          %s468 = sphi 0, %s472
          %p469 = scmp.ge.s32.totalorder %s468, 1
          %s473 = sphi %s303, %s303
          %s474 = sphi %s305, %s305
        $region103: #{tpu_custom_call.1} parent=92 // loop_header_branch
          %471 = sbr.rel (%p469) target = $region107
        $region104: #{tpu_custom_call.1} parent=92 // loop_body
          %v475 = vld [vmem:[%s473] sm:%s466]
          %476 = vst [vmem:[%s474] sm:%s466] %v475
        $region105: #{tpu_custom_call.1} parent=92 // loop_footer
          %s472 = sadd.s32 1, %s468
        $region106: #{tpu_custom_call.1} parent=92 // loop_footer_branch
          %467 = sbr.rel target = $region102
        $region107: #{tpu_custom_call.1} parent=92 // loop_exit
          _
      $region93: #{tpu_custom_call.1} parent=77 // pred_fallthru
        _
    $region78: #{tpu_custom_call.1} parent=1 // pred_fallthru
      _
    // Predicated region
    $region79: #{tpu_custom_call.1} parent=1 // pred_check
      %p282 = pneg %p278
    $region80: #{tpu_custom_call.1} parent=1 // pred_check_branch
      %284 = sbr.rel (%p282) target = $region82
    $region81: #{tpu_custom_call.1} parent=1 // pred_region
      %s285 = sshllo.u32 0, 612
      loop: start=0, step=1, limit=1
      $region83: #{tpu_custom_call.1} parent=81 // loop_pre_header
        _
      $region84: #{tpu_custom_call.1} parent=81 // loop_header
        %s287 = sphi 0, %s291
        %p288 = scmp.ge.s32.totalorder %s287, 1
        %s292 = sphi %s10, %s10
        %s293 = sphi [#allocation3], [#allocation3]
      $region85: #{tpu_custom_call.1} parent=81 // loop_header_branch
        %290 = sbr.rel (%p288) target = $region89
      $region86: #{tpu_custom_call.1} parent=81 // loop_body
        %v294 = vld [vmem:[%s292] sm:%s285]
        %295 = vst [vmem:[%s293] sm:%s285] %v294
      $region87: #{tpu_custom_call.1} parent=81 // loop_footer
        %s291 = sadd.s32 1, %s287
      $region88: #{tpu_custom_call.1} parent=81 // loop_footer_branch
        %286 = sbr.rel target = $region84
      $region89: #{tpu_custom_call.1} parent=81 // loop_exit
        _
    $region82: #{tpu_custom_call.1} parent=1 // pred_fallthru
      _
    // Predicated region
    $region108: #{tpu_custom_call.1} parent=1 // pred_check
      _
    $region109: #{tpu_custom_call.1} parent=1 // pred_check_branch
      %479 = sbr.rel (0) target = $region111
    $region110: #{tpu_custom_call.1} parent=1 // pred_region
      %480 = vsyncadd %s276, 9792
    $region111: #{tpu_custom_call.1} parent=1 // pred_fallthru
      _
    %v481 = vld [vmem:[%s0] sm:$0xff]
    %v482 = vld [vmem:[%s0 + $0x8] sm:$0xff]
    %v483 = vld [vmem:[%s0 + $0x10] sm:$0xff]
    %v484 = vld [vmem:[%s0 + $0x18] sm:$0xff]
    %v485 = vld [vmem:[%s1] sm:$0xff]
    %v486 = vld [vmem:[%s1 + $0x8] sm:$0xf]
    %v487 = vld [vmem:[%s1 + $0xc] sm:$0xff]
    %v488 = vld [vmem:[%s1 + $0x14] sm:$0xf]
    %v489 = vld [vmem:[%s1 + $0x18] sm:$0xff]
    %v490 = vld [vmem:[%s1 + $0x20] sm:$0xf]
    %v491 = vld [vmem:[%s1 + $0x24] sm:$0xff]
    %v492 = vld [vmem:[%s1 + $0x2c] sm:$0xf]
    %v493 = vld [vmem:[%s1 + $0x30] sm:$0xff]
    %v494 = vld [vmem:[%s1 + $0x38] sm:$0xf]
    %v495 = vld [vmem:[%s1 + $0x3c] sm:$0xff]
    %v496 = vld [vmem:[%s1 + $0x44] sm:$0xf]
    %v497 = vld [vmem:[%s1 + $0x48] sm:$0xff]
    %v498 = vld [vmem:[%s1 + $0x50] sm:$0xf]
    %v499 = vld [vmem:[%s1 + $0x54] sm:$0xff]
    %v500 = vld [vmem:[%s1 + $0x5c] sm:$0xf]
    %v501 = vld [vmem:[%s1 + $0x60] sm:$0xff]
    %v502 = vld [vmem:[%s1 + $0x68] sm:$0xf]
    %v503 = vld [vmem:[%s1 + $0x6c] sm:$0xff]
    %v504 = vld [vmem:[%s1 + $0x74] sm:$0xf]
    %v505 = vld [vmem:[%s1 + $0x78] sm:$0xff]
    %v506 = vld [vmem:[%s1 + $0x80] sm:$0xf]
    %v507 = vld [vmem:[%s1 + $0x84] sm:$0xff]
    %v508 = vld [vmem:[%s1 + $0x8c] sm:$0xf]
    %v509 = vld [vmem:[%s1 + $0x90] sm:$0xff]
    %v510 = vld [vmem:[%s1 + $0x98] sm:$0xf]
    %v511 = vld [vmem:[%s1 + $0x9c] sm:$0xff]
    %v512 = vld [vmem:[%s1 + $0xa4] sm:$0xf]
    %v513 = vld [vmem:[%s1 + $0xa8] sm:$0xff]
    %v514 = vld [vmem:[%s1 + $0xb0] sm:$0xf]
    %v515 = vld [vmem:[%s1 + $0xb4] sm:$0xff]
    %v516 = vld [vmem:[%s1 + $0xbc] sm:$0xf]
    %v517 = vld [vmem:[%s1 + $0xc0] sm:$0xff]
    %v518 = vld [vmem:[%s1 + $0xc8] sm:$0xf]
    %v519 = vld [vmem:[%s1 + $0xcc] sm:$0xff]
    %v520 = vld [vmem:[%s1 + $0xd4] sm:$0xf]
    %v521 = vld [vmem:[%s1 + $0xd8] sm:$0xff]
    %v522 = vld [vmem:[%s1 + $0xe0] sm:$0xf]
    %v523 = vld [vmem:[%s1 + $0xe4] sm:$0xff]
    %v524 = vld [vmem:[%s1 + $0xec] sm:$0xf]
    %v525 = vld [vmem:[%s1 + $0xf0] sm:$0xff]
    %v526 = vld [vmem:[%s1 + $0xf8] sm:$0xf]
    %v527 = vld [vmem:[%s1 + $0xfc] sm:$0xff]
    %v528 = vld [vmem:[%s1 + $0x104] sm:$0xf]
    %v529 = vld [vmem:[%s1 + $0x108] sm:$0xff]
    %v530 = vld [vmem:[%s1 + $0x110] sm:$0xf]
    %v531 = vld [vmem:[%s1 + $0x114] sm:$0xff]
    %v532 = vld [vmem:[%s1 + $0x11c] sm:$0xf]
    %v533 = vld [vmem:[%s1 + $0x120] sm:$0xff]
    %v534 = vld [vmem:[%s1 + $0x128] sm:$0xf]
    %v535 = vld [vmem:[%s1 + $0x12c] sm:$0xff]
    %v536 = vld [vmem:[%s1 + $0x134] sm:$0xf]
    %v537 = vld [vmem:[%s1 + $0x138] sm:$0xff]
    %v538 = vld [vmem:[%s1 + $0x140] sm:$0xf]
    %v539 = vld [vmem:[%s1 + $0x144] sm:$0xff]
    %v540 = vld [vmem:[%s1 + $0x14c] sm:$0xf]
    %v541 = vld [vmem:[%s1 + $0x150] sm:$0xff]
    %v542 = vld [vmem:[%s1 + $0x158] sm:$0xf]
    %v543 = vld [vmem:[%s1 + $0x15c] sm:$0xff]
    %v544 = vld [vmem:[%s1 + $0x164] sm:$0xf]
    %v545 = vld [vmem:[%s1 + $0x168] sm:$0xff]
    %v546 = vld [vmem:[%s1 + $0x170] sm:$0xf]
    %v547 = vld [vmem:[%s1 + $0x174] sm:$0xff]
    %v548 = vld [vmem:[%s1 + $0x17c] sm:$0xf]
    %v549 = vld [vmem:[%s1 + $0x180] sm:$0xff]
    %v550 = vld [vmem:[%s1 + $0x188] sm:$0xf]
    %v551 = vld [vmem:[%s1 + $0x18c] sm:$0xff]
    %v552 = vld [vmem:[%s1 + $0x194] sm:$0xf]
    %v553 = vld [vmem:[%s1 + $0x198] sm:$0xff]
    %v554 = vld [vmem:[%s1 + $0x1a0] sm:$0xf]
    %v555 = vld [vmem:[%s1 + $0x1a4] sm:$0xff]
    %v556 = vld [vmem:[%s1 + $0x1ac] sm:$0xf]
    %v557 = vld [vmem:[%s1 + $0x1b0] sm:$0xff]
    %v558 = vld [vmem:[%s1 + $0x1b8] sm:$0xf]
    %v559 = vld [vmem:[%s1 + $0x1bc] sm:$0xff]
    %v560 = vld [vmem:[%s1 + $0x1c4] sm:$0xf]
    %v561 = vld [vmem:[%s1 + $0x1c8] sm:$0xff]
    %v562 = vld [vmem:[%s1 + $0x1d0] sm:$0xf]
    %v563 = vld [vmem:[%s1 + $0x1d4] sm:$0xff]
    %v564 = vld [vmem:[%s1 + $0x1dc] sm:$0xf]
    %v565 = vld [vmem:[%s1 + $0x1e0] sm:$0xff]
    %v566 = vld [vmem:[%s1 + $0x1e8] sm:$0xf]
    %v567 = vld [vmem:[%s1 + $0x1ec] sm:$0xff]
    %v568 = vld [vmem:[%s1 + $0x1f4] sm:$0xf]
    %v569 = vld [vmem:[%s1 + $0x1f8] sm:$0xff]
    %v570 = vld [vmem:[%s1 + $0x200] sm:$0xf]
    %v571 = vld [vmem:[%s1 + $0x204] sm:$0xff]
    %v572 = vld [vmem:[%s1 + $0x20c] sm:$0xf]
    %v573 = vld [vmem:[%s1 + $0x210] sm:$0xff]
    %v574 = vld [vmem:[%s1 + $0x218] sm:$0xf]
    %v575 = vld [vmem:[%s1 + $0x21c] sm:$0xff]
    %v576 = vld [vmem:[%s1 + $0x224] sm:$0xf]
    %v577 = vld [vmem:[%s1 + $0x228] sm:$0xff]
    %v578 = vld [vmem:[%s1 + $0x230] sm:$0xf]
    %v579 = vld [vmem:[%s1 + $0x234] sm:$0xff]
    %v580 = vld [vmem:[%s1 + $0x23c] sm:$0xf]
    %v581 = vld [vmem:[%s1 + $0x240] sm:$0xff]
    %v582 = vld [vmem:[%s1 + $0x248] sm:$0xf]
    %v583 = vld [vmem:[%s1 + $0x24c] sm:$0xff]
    %v584 = vld [vmem:[%s1 + $0x254] sm:$0xf]
    %v585 = vld [vmem:[%s1 + $0x258] sm:$0xff]
    %v586 = vld [vmem:[%s1 + $0x260] sm:$0xf]
    %v587 = vld [vmem:[%s1 + $0x264] sm:$0xff]
    %v588 = vld [vmem:[%s1 + $0x26c] sm:$0xf]
    %v589 = vld [vmem:[%s1 + $0x270] sm:$0xff]
    %v590 = vld [vmem:[%s1 + $0x278] sm:$0xf]
    %v591 = vld [vmem:[%s1 + $0x27c] sm:$0xff]
    %v592 = vld [vmem:[%s1 + $0x284] sm:$0xf]
    %v593 = vld [vmem:[%s1 + $0x288] sm:$0xff]
    %v594 = vld [vmem:[%s1 + $0x290] sm:$0xf]
    %v595 = vld [vmem:[%s1 + $0x294] sm:$0xff]
    %v596 = vld [vmem:[%s1 + $0x29c] sm:$0xf]
    %v597 = vld [vmem:[%s1 + $0x2a0] sm:$0xff]
    %v598 = vld [vmem:[%s1 + $0x2a8] sm:$0xf]
    %v599 = vld [vmem:[%s1 + $0x2ac] sm:$0xff]
    %v600 = vld [vmem:[%s1 + $0x2b4] sm:$0xf]
    %v601 = vld [vmem:[%s1 + $0x2b8] sm:$0xff]
    %v602 = vld [vmem:[%s1 + $0x2c0] sm:$0xf]
    %v603 = vld [vmem:[%s1 + $0x2c4] sm:$0xff]
    %v604 = vld [vmem:[%s1 + $0x2cc] sm:$0xf]
    %v605 = vld [vmem:[%s1 + $0x2d0] sm:$0xff]
    %v606 = vld [vmem:[%s1 + $0x2d8] sm:$0xf]
    %v607 = vld [vmem:[%s1 + $0x2dc] sm:$0xff]
    %v608 = vld [vmem:[%s1 + $0x2e4] sm:$0xf]
    %v609 = vld [vmem:[%s1 + $0x2e8] sm:$0xff]
    %v610 = vld [vmem:[%s1 + $0x2f0] sm:$0xf]
    %v611 = vld [vmem:[%s1 + $0x2f4] sm:$0xff]
    %v612 = vld [vmem:[%s1 + $0x2fc] sm:$0xf]
    %v613 = vld [vmem:[%s3] sm:$0x7]
    %v615 = vlaneseq
    %v616 = vshrl.u32 %v615, 7
    %v617 = vsub.s32 0, %v616
    %v618 = vrot.slane %v613, %v617
    %v619 = vlaneseq
    %v620 = vshrl.u32 %v619, 7
    %v621 = vsub.s32 1, %v620
    %v622 = vrot.slane %v613, %v621
    %v623 = vlaneseq
    %v624 = vshrl.u32 %v623, 7
    %v625 = vsub.s32 2, %v624
    %v626 = vrot.slane %v613, %v625
    %v634 = vunpack.c.l.b16 %v481
    %v635 = vunpack.c.h.b16 %v481
    %v636 = vunpack.c.l.b16 %v482
    %v637 = vunpack.c.h.b16 %v482
    %v638 = vunpack.c.l.b16 %v483
    %v639 = vunpack.c.h.b16 %v483
    %v640 = vunpack.c.l.b16 %v484
    %v641 = vunpack.c.h.b16 %v484
    %v642 = vpack.c.b16 %v638, %v634
    %v643 = vpack.c.b16 %v639, %v635
    %v644 = vpack.c.b16 %v640, %v636
    %v645 = vpack.c.b16 %v641, %v637
    %v778 = vunpack.c.l.b16 %v485
    %v779 = vunpack.c.h.b16 %v485
    %v780 = vunpack.c.l.b16 %v486
    %v781 = vunpack.c.l.b16 %v487
    %v782 = vunpack.c.h.b16 %v487
    %v783 = vunpack.c.l.b16 %v488
    %v784 = vunpack.c.l.b16 %v489
    %v785 = vunpack.c.h.b16 %v489
    %v786 = vunpack.c.l.b16 %v490
    %v787 = vunpack.c.l.b16 %v491
    %v788 = vunpack.c.h.b16 %v491
    %v789 = vunpack.c.l.b16 %v492
    %v790 = vunpack.c.l.b16 %v493
    %v791 = vunpack.c.h.b16 %v493
    %v792 = vunpack.c.l.b16 %v494
    %v793 = vunpack.c.l.b16 %v495
    %v794 = vunpack.c.h.b16 %v495
    %v795 = vunpack.c.l.b16 %v496
    %v796 = vunpack.c.l.b16 %v497
    %v797 = vunpack.c.h.b16 %v497
    %v798 = vunpack.c.l.b16 %v498
    %v799 = vunpack.c.l.b16 %v499
    %v800 = vunpack.c.h.b16 %v499
    %v801 = vunpack.c.l.b16 %v500
    %v802 = vunpack.c.l.b16 %v501
    %v803 = vunpack.c.h.b16 %v501
    %v804 = vunpack.c.l.b16 %v502
    %v805 = vunpack.c.l.b16 %v503
    %v806 = vunpack.c.h.b16 %v503
    %v807 = vunpack.c.l.b16 %v504
    %v808 = vunpack.c.l.b16 %v505
    %v809 = vunpack.c.h.b16 %v505
    %v810 = vunpack.c.l.b16 %v506
    %v811 = vunpack.c.l.b16 %v507
    %v812 = vunpack.c.h.b16 %v507
    %v813 = vunpack.c.l.b16 %v508
    %v814 = vunpack.c.l.b16 %v509
    %v815 = vunpack.c.h.b16 %v509
    %v816 = vunpack.c.l.b16 %v510
    %v817 = vunpack.c.l.b16 %v511
    %v818 = vunpack.c.h.b16 %v511
    %v819 = vunpack.c.l.b16 %v512
    %v820 = vunpack.c.l.b16 %v513
    %v821 = vunpack.c.h.b16 %v513
    %v822 = vunpack.c.l.b16 %v514
    %v823 = vunpack.c.l.b16 %v515
    %v824 = vunpack.c.h.b16 %v515
    %v825 = vunpack.c.l.b16 %v516
    %v826 = vunpack.c.l.b16 %v517
    %v827 = vunpack.c.h.b16 %v517
    %v828 = vunpack.c.l.b16 %v518
    %v829 = vunpack.c.l.b16 %v519
    %v830 = vunpack.c.h.b16 %v519
    %v831 = vunpack.c.l.b16 %v520
    %v832 = vunpack.c.l.b16 %v521
    %v833 = vunpack.c.h.b16 %v521
    %v834 = vunpack.c.l.b16 %v522
    %v835 = vunpack.c.l.b16 %v523
    %v836 = vunpack.c.h.b16 %v523
    %v837 = vunpack.c.l.b16 %v524
    %v838 = vunpack.c.l.b16 %v525
    %v839 = vunpack.c.h.b16 %v525
    %v840 = vunpack.c.l.b16 %v526
    %v841 = vunpack.c.l.b16 %v527
    %v842 = vunpack.c.h.b16 %v527
    %v843 = vunpack.c.l.b16 %v528
    %v844 = vunpack.c.l.b16 %v529
    %v845 = vunpack.c.h.b16 %v529
    %v846 = vunpack.c.l.b16 %v530
    %v847 = vunpack.c.l.b16 %v531
    %v848 = vunpack.c.h.b16 %v531
    %v849 = vunpack.c.l.b16 %v532
    %v850 = vunpack.c.l.b16 %v533
    %v851 = vunpack.c.h.b16 %v533
    %v852 = vunpack.c.l.b16 %v534
    %v853 = vunpack.c.l.b16 %v535
    %v854 = vunpack.c.h.b16 %v535
    %v855 = vunpack.c.l.b16 %v536
    %v856 = vunpack.c.l.b16 %v537
    %v857 = vunpack.c.h.b16 %v537
    %v858 = vunpack.c.l.b16 %v538
    %v859 = vunpack.c.l.b16 %v539
    %v860 = vunpack.c.h.b16 %v539
    %v861 = vunpack.c.l.b16 %v540
    %v862 = vunpack.c.l.b16 %v541
    %v863 = vunpack.c.h.b16 %v541
    %v864 = vunpack.c.l.b16 %v542
    %v865 = vunpack.c.l.b16 %v543
    %v866 = vunpack.c.h.b16 %v543
    %v867 = vunpack.c.l.b16 %v544
    %v868 = vunpack.c.l.b16 %v545
    %v869 = vunpack.c.h.b16 %v545
    %v870 = vunpack.c.l.b16 %v546
    %v871 = vunpack.c.l.b16 %v547
    %v872 = vunpack.c.h.b16 %v547
    %v873 = vunpack.c.l.b16 %v548
    %v874 = vunpack.c.l.b16 %v549
    %v875 = vunpack.c.h.b16 %v549
    %v876 = vunpack.c.l.b16 %v550
    %v877 = vunpack.c.l.b16 %v551
    %v878 = vunpack.c.h.b16 %v551
    %v879 = vunpack.c.l.b16 %v552
    %v880 = vunpack.c.l.b16 %v553
    %v881 = vunpack.c.h.b16 %v553
    %v882 = vunpack.c.l.b16 %v554
    %v883 = vunpack.c.l.b16 %v555
    %v884 = vunpack.c.h.b16 %v555
    %v885 = vunpack.c.l.b16 %v556
    %v886 = vunpack.c.l.b16 %v557
    %v887 = vunpack.c.h.b16 %v557
    %v888 = vunpack.c.l.b16 %v558
    %v889 = vunpack.c.l.b16 %v559
    %v890 = vunpack.c.h.b16 %v559
    %v891 = vunpack.c.l.b16 %v560
    %v892 = vunpack.c.l.b16 %v561
    %v893 = vunpack.c.h.b16 %v561
    %v894 = vunpack.c.l.b16 %v562
    %v895 = vunpack.c.l.b16 %v563
    %v896 = vunpack.c.h.b16 %v563
    %v897 = vunpack.c.l.b16 %v564
    %v898 = vunpack.c.l.b16 %v565
    %v899 = vunpack.c.h.b16 %v565
    %v900 = vunpack.c.l.b16 %v566
    %v901 = vunpack.c.l.b16 %v567
    %v902 = vunpack.c.h.b16 %v567
    %v903 = vunpack.c.l.b16 %v568
    %v904 = vunpack.c.l.b16 %v569
    %v905 = vunpack.c.h.b16 %v569
    %v906 = vunpack.c.l.b16 %v570
    %v907 = vunpack.c.l.b16 %v571
    %v908 = vunpack.c.h.b16 %v571
    %v909 = vunpack.c.l.b16 %v572
    %v910 = vunpack.c.l.b16 %v573
    %v911 = vunpack.c.h.b16 %v573
    %v912 = vunpack.c.l.b16 %v574
    %v913 = vunpack.c.l.b16 %v575
    %v914 = vunpack.c.h.b16 %v575
    %v915 = vunpack.c.l.b16 %v576
    %v916 = vunpack.c.l.b16 %v577
    %v917 = vunpack.c.h.b16 %v577
    %v918 = vunpack.c.l.b16 %v578
    %v919 = vunpack.c.l.b16 %v579
    %v920 = vunpack.c.h.b16 %v579
    %v921 = vunpack.c.l.b16 %v580
    %v922 = vunpack.c.l.b16 %v581
    %v923 = vunpack.c.h.b16 %v581
    %v924 = vunpack.c.l.b16 %v582
    %v925 = vunpack.c.l.b16 %v583
    %v926 = vunpack.c.h.b16 %v583
    %v927 = vunpack.c.l.b16 %v584
    %v928 = vunpack.c.l.b16 %v585
    %v929 = vunpack.c.h.b16 %v585
    %v930 = vunpack.c.l.b16 %v586
    %v931 = vunpack.c.l.b16 %v587
    %v932 = vunpack.c.h.b16 %v587
    %v933 = vunpack.c.l.b16 %v588
    %v934 = vunpack.c.l.b16 %v589
    %v935 = vunpack.c.h.b16 %v589
    %v936 = vunpack.c.l.b16 %v590
    %v937 = vunpack.c.l.b16 %v591
    %v938 = vunpack.c.h.b16 %v591
    %v939 = vunpack.c.l.b16 %v592
    %v940 = vunpack.c.l.b16 %v593
    %v941 = vunpack.c.h.b16 %v593
    %v942 = vunpack.c.l.b16 %v594
    %v943 = vunpack.c.l.b16 %v595
    %v944 = vunpack.c.h.b16 %v595
    %v945 = vunpack.c.l.b16 %v596
    %v946 = vunpack.c.l.b16 %v597
    %v947 = vunpack.c.h.b16 %v597
    %v948 = vunpack.c.l.b16 %v598
    %v949 = vunpack.c.l.b16 %v599
    %v950 = vunpack.c.h.b16 %v599
    %v951 = vunpack.c.l.b16 %v600
    %v952 = vunpack.c.l.b16 %v601
    %v953 = vunpack.c.h.b16 %v601
    %v954 = vunpack.c.l.b16 %v602
    %v955 = vunpack.c.l.b16 %v603
    %v956 = vunpack.c.h.b16 %v603
    %v957 = vunpack.c.l.b16 %v604
    %v958 = vunpack.c.l.b16 %v605
    %v959 = vunpack.c.h.b16 %v605
    %v960 = vunpack.c.l.b16 %v606
    %v961 = vunpack.c.l.b16 %v607
    %v962 = vunpack.c.h.b16 %v607
    %v963 = vunpack.c.l.b16 %v608
    %v964 = vunpack.c.l.b16 %v609
    %v965 = vunpack.c.h.b16 %v609
    %v966 = vunpack.c.l.b16 %v610
    %v967 = vunpack.c.l.b16 %v611
    %v968 = vunpack.c.h.b16 %v611
    %v969 = vunpack.c.l.b16 %v612
    %v970 = vpack.c.b16 %v781, %v778
    %v971 = vpack.c.b16 %v782, %v779
    %v972 = vpack.c.b16 %v783, %v780
    %v973 = vpack.c.b16 %v787, %v784
    %v974 = vpack.c.b16 %v788, %v785
    %v975 = vpack.c.b16 %v789, %v786
    %v976 = vpack.c.b16 %v793, %v790
    %v977 = vpack.c.b16 %v794, %v791
    %v978 = vpack.c.b16 %v795, %v792
    %v979 = vpack.c.b16 %v799, %v796
    %v980 = vpack.c.b16 %v800, %v797
    %v981 = vpack.c.b16 %v801, %v798
    %v982 = vpack.c.b16 %v805, %v802
    %v983 = vpack.c.b16 %v806, %v803
    %v984 = vpack.c.b16 %v807, %v804
    %v985 = vpack.c.b16 %v811, %v808
    %v986 = vpack.c.b16 %v812, %v809
    %v987 = vpack.c.b16 %v813, %v810
    %v988 = vpack.c.b16 %v817, %v814
    %v989 = vpack.c.b16 %v818, %v815
    %v990 = vpack.c.b16 %v819, %v816
    %v991 = vpack.c.b16 %v823, %v820
    %v992 = vpack.c.b16 %v824, %v821
    %v993 = vpack.c.b16 %v825, %v822
    %v994 = vpack.c.b16 %v829, %v826
    %v995 = vpack.c.b16 %v830, %v827
    %v996 = vpack.c.b16 %v831, %v828
    %v997 = vpack.c.b16 %v835, %v832
    %v998 = vpack.c.b16 %v836, %v833
    %v999 = vpack.c.b16 %v837, %v834
    %v1000 = vpack.c.b16 %v841, %v838
    %v1001 = vpack.c.b16 %v842, %v839
    %v1002 = vpack.c.b16 %v843, %v840
    %v1003 = vpack.c.b16 %v847, %v844
    %v1004 = vpack.c.b16 %v848, %v845
    %v1005 = vpack.c.b16 %v849, %v846
    %v1006 = vpack.c.b16 %v853, %v850
    %v1007 = vpack.c.b16 %v854, %v851
    %v1008 = vpack.c.b16 %v855, %v852
    %v1009 = vpack.c.b16 %v859, %v856
    %v1010 = vpack.c.b16 %v860, %v857
    %v1011 = vpack.c.b16 %v861, %v858
    %v1012 = vpack.c.b16 %v865, %v862
    %v1013 = vpack.c.b16 %v866, %v863
    %v1014 = vpack.c.b16 %v867, %v864
    %v1015 = vpack.c.b16 %v871, %v868
    %v1016 = vpack.c.b16 %v872, %v869
    %v1017 = vpack.c.b16 %v873, %v870
    %v1018 = vpack.c.b16 %v877, %v874
    %v1019 = vpack.c.b16 %v878, %v875
    %v1020 = vpack.c.b16 %v879, %v876
    %v1021 = vpack.c.b16 %v883, %v880
    %v1022 = vpack.c.b16 %v884, %v881
    %v1023 = vpack.c.b16 %v885, %v882
    %v1024 = vpack.c.b16 %v889, %v886
    %v1025 = vpack.c.b16 %v890, %v887
    %v1026 = vpack.c.b16 %v891, %v888
    %v1027 = vpack.c.b16 %v895, %v892
    %v1028 = vpack.c.b16 %v896, %v893
    %v1029 = vpack.c.b16 %v897, %v894
    %v1030 = vpack.c.b16 %v901, %v898
    %v1031 = vpack.c.b16 %v902, %v899
    %v1032 = vpack.c.b16 %v903, %v900
    %v1033 = vpack.c.b16 %v907, %v904
    %v1034 = vpack.c.b16 %v908, %v905
    %v1035 = vpack.c.b16 %v909, %v906
    %v1036 = vpack.c.b16 %v913, %v910
    %v1037 = vpack.c.b16 %v914, %v911
    %v1038 = vpack.c.b16 %v915, %v912
    %v1039 = vpack.c.b16 %v919, %v916
    %v1040 = vpack.c.b16 %v920, %v917
    %v1041 = vpack.c.b16 %v921, %v918
    %v1042 = vpack.c.b16 %v925, %v922
    %v1043 = vpack.c.b16 %v926, %v923
    %v1044 = vpack.c.b16 %v927, %v924
    %v1045 = vpack.c.b16 %v931, %v928
    %v1046 = vpack.c.b16 %v932, %v929
    %v1047 = vpack.c.b16 %v933, %v930
    %v1048 = vpack.c.b16 %v937, %v934
    %v1049 = vpack.c.b16 %v938, %v935
    %v1050 = vpack.c.b16 %v939, %v936
    %v1051 = vpack.c.b16 %v943, %v940
    %v1052 = vpack.c.b16 %v944, %v941
    %v1053 = vpack.c.b16 %v945, %v942
    %v1054 = vpack.c.b16 %v949, %v946
    %v1055 = vpack.c.b16 %v950, %v947
    %v1056 = vpack.c.b16 %v951, %v948
    %v1057 = vpack.c.b16 %v955, %v952
    %v1058 = vpack.c.b16 %v956, %v953
    %v1059 = vpack.c.b16 %v957, %v954
    %v1060 = vpack.c.b16 %v961, %v958
    %v1061 = vpack.c.b16 %v962, %v959
    %v1062 = vpack.c.b16 %v963, %v960
    %v1063 = vpack.c.b16 %v967, %v964
    %v1064 = vpack.c.b16 %v968, %v965
    %v1065 = vpack.c.b16 %v969, %v966
    %1162 = vmatprep.subr.bf16.mxu0 %v971
    %1163 = vmatpush1.bf16.msra.mxu0 %v970
    %1164 = vmatprep.subr.bf16.mxu0 %v974
    %1165 = vmatpush1.bf16.msra.mxu0 %v973
    %1166 = vmatprep.subr.bf16.mxu0 %v977
    %1167 = vmatpush1.bf16.msra.mxu0 %v976
    %1168 = vmatprep.subr.bf16.mxu0 %v980
    %1169 = vmatpush1.bf16.msra.mxu0 %v979
    %1170 = vmatprep.subr.bf16.mxu0 %v983
    %1171 = vmatpush1.bf16.msra.mxu0 %v982
    %1172 = vmatprep.subr.bf16.mxu0 %v986
    %1173 = vmatpush1.bf16.msra.mxu0 %v985
    %1174 = vmatprep.subr.bf16.mxu0 %v989
    %1175 = vmatpush1.bf16.msra.mxu0 %v988
    %1176 = vmatprep.subr.bf16.mxu0 %v992
    %1177 = vmatpush1.bf16.msra.mxu0 %v991
    %1178 = vmatprep.subr.bf16.mxu0 %v995
    %1179 = vmatpush1.bf16.msra.mxu0 %v994
    %1180 = vmatprep.subr.bf16.mxu0 %v998
    %1181 = vmatpush1.bf16.msra.mxu0 %v997
    %1182 = vmatprep.subr.bf16.mxu0 %v1001
    %1183 = vmatpush1.bf16.msra.mxu0 %v1000
    %1184 = vmatprep.subr.bf16.mxu0 %v1004
    %1185 = vmatpush1.bf16.msra.mxu0 %v1003
    %1186 = vmatprep.subr.bf16.mxu0 %v1007
    %1187 = vmatpush1.bf16.msra.mxu0 %v1006
    %1188 = vmatprep.subr.bf16.mxu0 %v1010
    %1189 = vmatpush1.bf16.msra.mxu0 %v1009
    %1190 = vmatprep.subr.bf16.mxu0 %v1013
    %1191 = vmatpush1.bf16.msra.mxu0 %v1012
    %1192 = vmatprep.subr.bf16.mxu0 %v1016
    %1193 = vmatpush1.bf16.msra.mxu0 %v1015
    %1194 = vmatprep.mubr.bf16.mxu0 %v643
    %1195 = vmatmul.mubr.bf16.gmra.mrb[0].mxu0 %v642
    %v1196 = vpop.f32.mrb[0].mxu0
    %v1197 = vadd.f32 %v618, %v1196
    %v1198 = vpop.f32.mrb[0].mxu0
    %v1199 = vadd.f32 %v622, %v1198
    %v1200 = vpop.f32.mrb[0].mxu0
    %v1201 = vadd.f32 %v618, %v1200
    %v1202 = vpop.f32.mrb[0].mxu0
    %v1203 = vadd.f32 %v622, %v1202
    %1204 = vdwg.mxu0
    %1205 = vmatprep.subr.bf16.mxu0 %v1019
    %1206 = vmatpush1.bf16.msra.mxu0 %v1018
    %1207 = vmatprep.subr.bf16.mxu0 %v1022
    %1208 = vmatpush1.bf16.msra.mxu0 %v1021
    %1209 = vmatprep.subr.bf16.mxu0 %v1025
    %1210 = vmatpush1.bf16.msra.mxu0 %v1024
    %1211 = vmatprep.subr.bf16.mxu0 %v1028
    %1212 = vmatpush1.bf16.msra.mxu0 %v1027
    %1213 = vmatprep.subr.bf16.mxu0 %v1031
    %1214 = vmatpush1.bf16.msra.mxu0 %v1030
    %1215 = vmatprep.subr.bf16.mxu0 %v1034
    %1216 = vmatpush1.bf16.msra.mxu0 %v1033
    %1217 = vmatprep.subr.bf16.mxu0 %v1037
    %1218 = vmatpush1.bf16.msra.mxu0 %v1036
    %1219 = vmatprep.subr.bf16.mxu0 %v1040
    %1220 = vmatpush1.bf16.msra.mxu0 %v1039
    %1221 = vmatprep.subr.bf16.mxu0 %v1043
    %1222 = vmatpush1.bf16.msra.mxu0 %v1042
    %1223 = vmatprep.subr.bf16.mxu0 %v1046
    %1224 = vmatpush1.bf16.msra.mxu0 %v1045
    %1225 = vmatprep.subr.bf16.mxu0 %v1049
    %1226 = vmatpush1.bf16.msra.mxu0 %v1048
    %1227 = vmatprep.subr.bf16.mxu0 %v1052
    %1228 = vmatpush1.bf16.msra.mxu0 %v1051
    %1229 = vmatprep.subr.bf16.mxu0 %v1055
    %1230 = vmatpush1.bf16.msra.mxu0 %v1054
    %1231 = vmatprep.subr.bf16.mxu0 %v1058
    %1232 = vmatpush1.bf16.msra.mxu0 %v1057
    %1233 = vmatprep.subr.bf16.mxu0 %v1061
    %1234 = vmatpush1.bf16.msra.mxu0 %v1060
    %1235 = vmatprep.subr.bf16.mxu0 %v1064
    %1236 = vmatpush1.bf16.msra.mxu0 %v1063
    %1237 = vmatprep.mubr.bf16.mxu0 %v645
    %1238 = vmatmul.mubr.bf16.gmra.mrb[0].mxu0 %v644
    %v1239 = vpop.f32.mrb[0].mxu0
    %v1240 = vadd.f32 %v1197, %v1239
    %v1241 = vpop.f32.mrb[0].mxu0
    %v1242 = vadd.f32 %v1199, %v1241
    %v1243 = vpop.f32.mrb[0].mxu0
    %v1244 = vadd.f32 %v1201, %v1243
    %v1245 = vpop.f32.mrb[0].mxu0
    %v1246 = vadd.f32 %v1203, %v1245
    %1247 = vdwg.mxu0
    %1248 = vmatprep.subr.bf16.mxu0 0
    %1249 = vmatpush1.bf16.msra.mxu0 %v972
    %1250 = vmatprep.subr.bf16.mxu0 0
    %1251 = vmatpush1.bf16.msra.mxu0 %v975
    %1252 = vmatprep.subr.bf16.mxu0 0
    %1253 = vmatpush1.bf16.msra.mxu0 %v978
    %1254 = vmatprep.subr.bf16.mxu0 0
    %1255 = vmatpush1.bf16.msra.mxu0 %v981
    %1256 = vmatprep.subr.bf16.mxu0 0
    %1257 = vmatpush1.bf16.msra.mxu0 %v984
    %1258 = vmatprep.subr.bf16.mxu0 0
    %1259 = vmatpush1.bf16.msra.mxu0 %v987
    %1260 = vmatprep.subr.bf16.mxu0 0
    %1261 = vmatpush1.bf16.msra.mxu0 %v990
    %1262 = vmatprep.subr.bf16.mxu0 0
    %1263 = vmatpush1.bf16.msra.mxu0 %v993
    %1264 = vmatprep.subr.bf16.mxu0 0
    %1265 = vmatpush1.bf16.msra.mxu0 %v996
    %1266 = vmatprep.subr.bf16.mxu0 0
    %1267 = vmatpush1.bf16.msra.mxu0 %v999
    %1268 = vmatprep.subr.bf16.mxu0 0
    %1269 = vmatpush1.bf16.msra.mxu0 %v1002
    %1270 = vmatprep.subr.bf16.mxu0 0
    %1271 = vmatpush1.bf16.msra.mxu0 %v1005
    %1272 = vmatprep.subr.bf16.mxu0 0
    %1273 = vmatpush1.bf16.msra.mxu0 %v1008
    %1274 = vmatprep.subr.bf16.mxu0 0
    %1275 = vmatpush1.bf16.msra.mxu0 %v1011
    %1276 = vmatprep.subr.bf16.mxu0 0
    %1277 = vmatpush1.bf16.msra.mxu0 %v1014
    %1278 = vmatprep.subr.bf16.mxu0 0
    %1279 = vmatpush1.bf16.msra.mxu0 %v1017
    %1280 = vmatprep.mubr.bf16.mxu0 %v643
    %1281 = vmatmul.mubr.bf16.gmra.mrb[0].mxu0 %v642
    %v1282 = vpop.f32.mrb[0].mxu0
    %v1283 = vadd.f32 %v626, %v1282
    %v1284 = vpop.f32.mrb[0].mxu0
    %v1285 = vpop.f32.mrb[0].mxu0
    %v1286 = vadd.f32 %v626, %v1285
    %v1287 = vpop.f32.mrb[0].mxu0
    %1288 = vdwg.mxu0
    %1289 = vmatprep.subr.bf16.mxu0 0
    %1290 = vmatpush1.bf16.msra.mxu0 %v1020
    %1291 = vmatprep.subr.bf16.mxu0 0
    %1292 = vmatpush1.bf16.msra.mxu0 %v1023
    %1293 = vmatprep.subr.bf16.mxu0 0
    %1294 = vmatpush1.bf16.msra.mxu0 %v1026
    %1295 = vmatprep.subr.bf16.mxu0 0
    %1296 = vmatpush1.bf16.msra.mxu0 %v1029
    %1297 = vmatprep.subr.bf16.mxu0 0
    %1298 = vmatpush1.bf16.msra.mxu0 %v1032
    %1299 = vmatprep.subr.bf16.mxu0 0
    %1300 = vmatpush1.bf16.msra.mxu0 %v1035
    %1301 = vmatprep.subr.bf16.mxu0 0
    %1302 = vmatpush1.bf16.msra.mxu0 %v1038
    %1303 = vmatprep.subr.bf16.mxu0 0
    %1304 = vmatpush1.bf16.msra.mxu0 %v1041
    %1305 = vmatprep.subr.bf16.mxu0 0
    %1306 = vmatpush1.bf16.msra.mxu0 %v1044
    %1307 = vmatprep.subr.bf16.mxu0 0
    %1308 = vmatpush1.bf16.msra.mxu0 %v1047
    %1309 = vmatprep.subr.bf16.mxu0 0
    %1310 = vmatpush1.bf16.msra.mxu0 %v1050
    %1311 = vmatprep.subr.bf16.mxu0 0
    %1312 = vmatpush1.bf16.msra.mxu0 %v1053
    %1313 = vmatprep.subr.bf16.mxu0 0
    %1314 = vmatpush1.bf16.msra.mxu0 %v1056
    %1315 = vmatprep.subr.bf16.mxu0 0
    %1316 = vmatpush1.bf16.msra.mxu0 %v1059
    %1317 = vmatprep.subr.bf16.mxu0 0
    %1318 = vmatpush1.bf16.msra.mxu0 %v1062
    %1319 = vmatprep.subr.bf16.mxu0 0
    %1320 = vmatpush1.bf16.msra.mxu0 %v1065
    %1321 = vmatprep.mubr.bf16.mxu0 %v645
    %1322 = vmatmul.mubr.bf16.gmra.mrb[0].mxu0 %v644
    %v1323 = vpop.f32.mrb[0].mxu0
    %v1324 = vadd.f32 %v1283, %v1323
    %v1325 = vpop.f32.mrb[0].mxu0
    %v1326 = vpop.f32.mrb[0].mxu0
    %v1327 = vadd.f32 %v1286, %v1326
    %v1328 = vpop.f32.mrb[0].mxu0
    %1329 = vdwg.mxu0
    %v1330 = vld [vmem:[%s4] sm:$0x7]
    %v1331 = vld [vmem:[%s2] sm:$0xff]
    %v1332 = vld [vmem:[%s2 + $0x8] sm:$0xf]
    %v1333 = vld [vmem:[%s2 + $0xc] sm:$0xff]
    %v1334 = vld [vmem:[%s2 + $0x14] sm:$0xf]
    %v1335 = vld [vmem:[%s2 + $0x18] sm:$0xff]
    %v1336 = vld [vmem:[%s2 + $0x20] sm:$0xf]
    %v1337 = vld [vmem:[%s2 + $0x24] sm:$0xff]
    %v1338 = vld [vmem:[%s2 + $0x2c] sm:$0xf]
    %v1339 = vld [vmem:[%s2 + $0x30] sm:$0xff]
    %v1340 = vld [vmem:[%s2 + $0x38] sm:$0xf]
    %v1341 = vld [vmem:[%s2 + $0x3c] sm:$0xff]
    %v1342 = vld [vmem:[%s2 + $0x44] sm:$0xf]
    %v1343 = vld [vmem:[%s2 + $0x48] sm:$0xff]
    %v1344 = vld [vmem:[%s2 + $0x50] sm:$0xf]
    %v1345 = vld [vmem:[%s2 + $0x54] sm:$0xff]
    %v1346 = vld [vmem:[%s2 + $0x5c] sm:$0xf]
    %v1347 = vld [vmem:[%s2 + $0x60] sm:$0xff]
    %v1348 = vld [vmem:[%s2 + $0x68] sm:$0xf]
    %v1349 = vld [vmem:[%s2 + $0x6c] sm:$0xff]
    %v1350 = vld [vmem:[%s2 + $0x74] sm:$0xf]
    %v1351 = vld [vmem:[%s2 + $0x78] sm:$0xff]
    %v1352 = vld [vmem:[%s2 + $0x80] sm:$0xf]
    %v1353 = vld [vmem:[%s2 + $0x84] sm:$0xff]
    %v1354 = vld [vmem:[%s2 + $0x8c] sm:$0xf]
    %v1355 = vld [vmem:[%s2 + $0x90] sm:$0xff]
    %v1356 = vld [vmem:[%s2 + $0x98] sm:$0xf]
    %v1357 = vld [vmem:[%s2 + $0x9c] sm:$0xff]
    %v1358 = vld [vmem:[%s2 + $0xa4] sm:$0xf]
    %v1359 = vld [vmem:[%s2 + $0xa8] sm:$0xff]
    %v1360 = vld [vmem:[%s2 + $0xb0] sm:$0xf]
    %v1361 = vld [vmem:[%s2 + $0xb4] sm:$0xff]
    %v1362 = vld [vmem:[%s2 + $0xbc] sm:$0xf]
    %v1364 = vlaneseq
    %v1365 = vshrl.u32 %v1364, 7
    %v1366 = vsub.s32 0, %v1365
    %v1367 = vrot.slane %v1330, %v1366
    %v1368 = vlaneseq
    %v1369 = vshrl.u32 %v1368, 7
    %v1370 = vsub.s32 1, %v1369
    %v1371 = vrot.slane %v1330, %v1370
    %v1372 = vlaneseq
    %v1373 = vshrl.u32 %v1372, 7
    %v1374 = vsub.s32 2, %v1373
    %v1375 = vrot.slane %v1330, %v1374
    %v1411 = vunpack.c.l.b16 %v1331
    %v1412 = vunpack.c.h.b16 %v1331
    %v1413 = vunpack.c.l.b16 %v1332
    %v1414 = vunpack.c.l.b16 %v1333
    %v1415 = vunpack.c.h.b16 %v1333
    %v1416 = vunpack.c.l.b16 %v1334
    %v1417 = vunpack.c.l.b16 %v1335
    %v1418 = vunpack.c.h.b16 %v1335
    %v1419 = vunpack.c.l.b16 %v1336
    %v1420 = vunpack.c.l.b16 %v1337
    %v1421 = vunpack.c.h.b16 %v1337
    %v1422 = vunpack.c.l.b16 %v1338
    %v1423 = vunpack.c.l.b16 %v1339
    %v1424 = vunpack.c.h.b16 %v1339
    %v1425 = vunpack.c.l.b16 %v1340
    %v1426 = vunpack.c.l.b16 %v1341
    %v1427 = vunpack.c.h.b16 %v1341
    %v1428 = vunpack.c.l.b16 %v1342
    %v1429 = vunpack.c.l.b16 %v1343
    %v1430 = vunpack.c.h.b16 %v1343
    %v1431 = vunpack.c.l.b16 %v1344
    %v1432 = vunpack.c.l.b16 %v1345
    %v1433 = vunpack.c.h.b16 %v1345
    %v1434 = vunpack.c.l.b16 %v1346
    %v1435 = vunpack.c.l.b16 %v1347
    %v1436 = vunpack.c.h.b16 %v1347
    %v1437 = vunpack.c.l.b16 %v1348
    %v1438 = vunpack.c.l.b16 %v1349
    %v1439 = vunpack.c.h.b16 %v1349
    %v1440 = vunpack.c.l.b16 %v1350
    %v1441 = vunpack.c.l.b16 %v1351
    %v1442 = vunpack.c.h.b16 %v1351
    %v1443 = vunpack.c.l.b16 %v1352
    %v1444 = vunpack.c.l.b16 %v1353
    %v1445 = vunpack.c.h.b16 %v1353
    %v1446 = vunpack.c.l.b16 %v1354
    %v1447 = vunpack.c.l.b16 %v1355
    %v1448 = vunpack.c.h.b16 %v1355
    %v1449 = vunpack.c.l.b16 %v1356
    %v1450 = vunpack.c.l.b16 %v1357
    %v1451 = vunpack.c.h.b16 %v1357
    %v1452 = vunpack.c.l.b16 %v1358
    %v1453 = vunpack.c.l.b16 %v1359
    %v1454 = vunpack.c.h.b16 %v1359
    %v1455 = vunpack.c.l.b16 %v1360
    %v1456 = vunpack.c.l.b16 %v1361
    %v1457 = vunpack.c.h.b16 %v1361
    %v1458 = vunpack.c.l.b16 %v1362
    %v1459 = vpack.c.b16 %v1414, %v1411
    %v1460 = vpack.c.b16 %v1415, %v1412
    %v1461 = vpack.c.b16 %v1416, %v1413
    %v1462 = vpack.c.b16 %v1420, %v1417
    %v1463 = vpack.c.b16 %v1421, %v1418
    %v1464 = vpack.c.b16 %v1422, %v1419
    %v1465 = vpack.c.b16 %v1426, %v1423
    %v1466 = vpack.c.b16 %v1427, %v1424
    %v1467 = vpack.c.b16 %v1428, %v1425
    %v1468 = vpack.c.b16 %v1432, %v1429
    %v1469 = vpack.c.b16 %v1433, %v1430
    %v1470 = vpack.c.b16 %v1434, %v1431
    %v1471 = vpack.c.b16 %v1438, %v1435
    %v1472 = vpack.c.b16 %v1439, %v1436
    %v1473 = vpack.c.b16 %v1440, %v1437
    %v1474 = vpack.c.b16 %v1444, %v1441
    %v1475 = vpack.c.b16 %v1445, %v1442
    %v1476 = vpack.c.b16 %v1446, %v1443
    %v1477 = vpack.c.b16 %v1450, %v1447
    %v1478 = vpack.c.b16 %v1451, %v1448
    %v1479 = vpack.c.b16 %v1452, %v1449
    %v1480 = vpack.c.b16 %v1456, %v1453
    %v1481 = vpack.c.b16 %v1457, %v1454
    %v1482 = vpack.c.b16 %v1458, %v1455
    %1507 = vmatprep.subr.bf16.mxu0 %v1460
    %1508 = vmatpush1.bf16.msra.mxu0 %v1459
    %1509 = vmatprep.subr.bf16.mxu0 %v1463
    %1510 = vmatpush1.bf16.msra.mxu0 %v1462
    %1511 = vmatprep.subr.bf16.mxu0 %v1466
    %1512 = vmatpush1.bf16.msra.mxu0 %v1465
    %1513 = vmatprep.subr.bf16.mxu0 %v1469
    %1514 = vmatpush1.bf16.msra.mxu0 %v1468
    %1515 = vmatprep.subr.bf16.mxu0 %v1472
    %1516 = vmatpush1.bf16.msra.mxu0 %v1471
    %1517 = vmatprep.subr.bf16.mxu0 %v1475
    %1518 = vmatpush1.bf16.msra.mxu0 %v1474
    %1519 = vmatprep.subr.bf16.mxu0 %v1478
    %1520 = vmatpush1.bf16.msra.mxu0 %v1477
    %1521 = vmatprep.subr.bf16.mxu0 %v1481
    %1522 = vmatpush1.bf16.msra.mxu0 %v1480
    %1523 = vmatprep.subr.bf16.mxu0 0
    %1524 = vmatpush1.bf16.msra.mxu0 0
    %1525 = vmatprep.subr.bf16.mxu0 0
    %1526 = vmatpush1.bf16.msra.mxu0 0
    %1527 = vmatprep.subr.bf16.mxu0 0
    %1528 = vmatpush1.bf16.msra.mxu0 0
    %1529 = vmatprep.subr.bf16.mxu0 0
    %1530 = vmatpush1.bf16.msra.mxu0 0
    %1531 = vmatprep.subr.bf16.mxu0 0
    %1532 = vmatpush1.bf16.msra.mxu0 0
    %1533 = vmatprep.subr.bf16.mxu0 0
    %1534 = vmatpush1.bf16.msra.mxu0 0
    %1535 = vmatprep.subr.bf16.mxu0 0
    %1536 = vmatpush1.bf16.msra.mxu0 0
    %1537 = vmatprep.subr.bf16.mxu0 0
    %1538 = vmatpush1.bf16.msra.mxu0 0
    %1539 = vmatprep.mubr.bf16.mxu0 0
    %1540 = vmatmul.mubr.bf16.gmra.mrb[0].mxu0 0
    %v1541 = vpop.f32.mrb[0].mxu0
    %v1542 = vadd.f32 %v1367, %v1541
    %v1543 = vpop.f32.mrb[0].mxu0
    %v1544 = vadd.f32 %v1371, %v1543
    %v1545 = vpop.f32.mrb[0].mxu0
    %v1546 = vpop.f32.mrb[0].mxu0
    %1547 = vdwg.mxu0
    %1548 = vmatprep.subr.bf16.mxu0 0
    %1549 = vmatpush1.bf16.msra.mxu0 %v1461
    %1550 = vmatprep.subr.bf16.mxu0 0
    %1551 = vmatpush1.bf16.msra.mxu0 %v1464
    %1552 = vmatprep.subr.bf16.mxu0 0
    %1553 = vmatpush1.bf16.msra.mxu0 %v1467
    %1554 = vmatprep.subr.bf16.mxu0 0
    %1555 = vmatpush1.bf16.msra.mxu0 %v1470
    %1556 = vmatprep.subr.bf16.mxu0 0
    %1557 = vmatpush1.bf16.msra.mxu0 %v1473
    %1558 = vmatprep.subr.bf16.mxu0 0
    %1559 = vmatpush1.bf16.msra.mxu0 %v1476
    %1560 = vmatprep.subr.bf16.mxu0 0
    %1561 = vmatpush1.bf16.msra.mxu0 %v1479
    %1562 = vmatprep.subr.bf16.mxu0 0
    %1563 = vmatpush1.bf16.msra.mxu0 %v1482
    %1564 = vmatprep.subr.bf16.mxu0 0
    %1565 = vmatpush1.bf16.msra.mxu0 0
    %1566 = vmatprep.subr.bf16.mxu0 0
    %1567 = vmatpush1.bf16.msra.mxu0 0
    %1568 = vmatprep.subr.bf16.mxu0 0
    %1569 = vmatpush1.bf16.msra.mxu0 0
    %1570 = vmatprep.subr.bf16.mxu0 0
    %1571 = vmatpush1.bf16.msra.mxu0 0
    %1572 = vmatprep.subr.bf16.mxu0 0
    %1573 = vmatpush1.bf16.msra.mxu0 0
    %1574 = vmatprep.subr.bf16.mxu0 0
    %1575 = vmatpush1.bf16.msra.mxu0 0
    %1576 = vmatprep.subr.bf16.mxu0 0
    %1577 = vmatpush1.bf16.msra.mxu0 0
    %1578 = vmatprep.subr.bf16.mxu0 0
    %1579 = vmatpush1.bf16.msra.mxu0 0
    %1580 = vmatprep.mubr.bf16.mxu0 0
    %1581 = vmatmul.mubr.bf16.gmra.mrb[0].mxu0 0
    %v1582 = vpop.f32.mrb[0].mxu0
    %v1583 = vadd.f32 %v1375, %v1582
    %v1584 = vpop.f32.mrb[0].mxu0
    %v1585 = vpop.f32.mrb[0].mxu0
    %v1586 = vpop.f32.mrb[0].mxu0
    %1587 = vdwg.mxu0
    %v1588 = vadd.f32 %v1240, %v1542
    %v1589 = vxor.u32 %v1588, 2147483648
    %v1590 = vmul.f32 %v1589, 1.442695
    %v1591 = vpow.pop %v1590
    %v1592 = vadd.f32 %v1591, 1.0
    %v1593 = vrcp.pop %v1592
    %v1594 = vmul.f32 1.0, %v1593
    %v1595 = vadd.f32 %v1242, %v1544
    %v1596 = vxor.u32 %v1595, 2147483648
    %v1597 = vmul.f32 %v1596, 1.442695
    %v1598 = vpow.pop %v1597
    %v1599 = vadd.f32 %v1598, 1.0
    %v1600 = vrcp.pop %v1599
    %v1601 = vmul.f32 1.0, %v1600
    %v1602 = vmul.f32 %v1594, %v1583
    %v1603 = vadd.f32 %v1324, %v1602
    %v1604 = vtanh.pop %v1603
    %v1605 = vsub.f32 1.0, %v1601
    %v1606 = vmul.f32 %v1605, %v1604
    %v1607 = vmul.f32 %v1601, 0.0
    %v1608 = vadd.f32 %v1606, %v1607
    %v1609 = vpack.c.bf16 %v1608, %v1608
    %1610 = vmatprep.subr.bf16.mxu0 %v1460
    %1611 = vmatpush1.bf16.msra.mxu0 %v1459
    %1612 = vmatprep.subr.bf16.mxu0 %v1463
    %1613 = vmatpush1.bf16.msra.mxu0 %v1462
    %1614 = vmatprep.subr.bf16.mxu0 %v1466
    %1615 = vmatpush1.bf16.msra.mxu0 %v1465
    %1616 = vmatprep.subr.bf16.mxu0 %v1469
    %1617 = vmatpush1.bf16.msra.mxu0 %v1468
    %1618 = vmatprep.subr.bf16.mxu0 %v1472
    %1619 = vmatpush1.bf16.msra.mxu0 %v1471
    %1620 = vmatprep.subr.bf16.mxu0 %v1475
    %1621 = vmatpush1.bf16.msra.mxu0 %v1474
    %1622 = vmatprep.subr.bf16.mxu0 %v1478
    %1623 = vmatpush1.bf16.msra.mxu0 %v1477
    %1624 = vmatprep.subr.bf16.mxu0 %v1481
    %1625 = vmatpush1.bf16.msra.mxu0 %v1480
    %1626 = vmatprep.subr.bf16.mxu0 0
    %1627 = vmatpush1.bf16.msra.mxu0 0
    %1628 = vmatprep.subr.bf16.mxu0 0
    %1629 = vmatpush1.bf16.msra.mxu0 0
    %1630 = vmatprep.subr.bf16.mxu0 0
    %1631 = vmatpush1.bf16.msra.mxu0 0
    %1632 = vmatprep.subr.bf16.mxu0 0
    %1633 = vmatpush1.bf16.msra.mxu0 0
    %1634 = vmatprep.subr.bf16.mxu0 0
    %1635 = vmatpush1.bf16.msra.mxu0 0
    %1636 = vmatprep.subr.bf16.mxu0 0
    %1637 = vmatpush1.bf16.msra.mxu0 0
    %1638 = vmatprep.subr.bf16.mxu0 0
    %1639 = vmatpush1.bf16.msra.mxu0 0
    %1640 = vmatprep.subr.bf16.mxu0 0
    %1641 = vmatpush1.bf16.msra.mxu0 0
    %1642 = vmatprep.mubr.bf16.mxu0 0
    %1643 = vmatmul.mubr.bf16.gmra.mrb[0].mxu0 %v1609
    %v1644 = vpop.f32.mrb[0].mxu0
    %v1645 = vadd.f32 %v1367, %v1644
    %v1646 = vpop.f32.mrb[0].mxu0
    %v1647 = vadd.f32 %v1371, %v1646
    %v1648 = vpop.f32.mrb[0].mxu0
    %v1649 = vpop.f32.mrb[0].mxu0
    %1650 = vdwg.mxu0
    %1651 = vmatprep.subr.bf16.mxu0 0
    %1652 = vmatpush1.bf16.msra.mxu0 %v1461
    %1653 = vmatprep.subr.bf16.mxu0 0
    %1654 = vmatpush1.bf16.msra.mxu0 %v1464
    %1655 = vmatprep.subr.bf16.mxu0 0
    %1656 = vmatpush1.bf16.msra.mxu0 %v1467
    %1657 = vmatprep.subr.bf16.mxu0 0
    %1658 = vmatpush1.bf16.msra.mxu0 %v1470
    %1659 = vmatprep.subr.bf16.mxu0 0
    %1660 = vmatpush1.bf16.msra.mxu0 %v1473
    %1661 = vmatprep.subr.bf16.mxu0 0
    %1662 = vmatpush1.bf16.msra.mxu0 %v1476
    %1663 = vmatprep.subr.bf16.mxu0 0
    %1664 = vmatpush1.bf16.msra.mxu0 %v1479
    %1665 = vmatprep.subr.bf16.mxu0 0
    %1666 = vmatpush1.bf16.msra.mxu0 %v1482
    %1667 = vmatprep.subr.bf16.mxu0 0
    %1668 = vmatpush1.bf16.msra.mxu0 0
    %1669 = vmatprep.subr.bf16.mxu0 0
    %1670 = vmatpush1.bf16.msra.mxu0 0
    %1671 = vmatprep.subr.bf16.mxu0 0
    %1672 = vmatpush1.bf16.msra.mxu0 0
    %1673 = vmatprep.subr.bf16.mxu0 0
    %1674 = vmatpush1.bf16.msra.mxu0 0
    %1675 = vmatprep.subr.bf16.mxu0 0
    %1676 = vmatpush1.bf16.msra.mxu0 0
    %1677 = vmatprep.subr.bf16.mxu0 0
    %1678 = vmatpush1.bf16.msra.mxu0 0
    %1679 = vmatprep.subr.bf16.mxu0 0
    %1680 = vmatpush1.bf16.msra.mxu0 0
    %1681 = vmatprep.subr.bf16.mxu0 0
    %1682 = vmatpush1.bf16.msra.mxu0 0
    %1683 = vmatprep.mubr.bf16.mxu0 0
    %1684 = vmatmul.mubr.bf16.gmra.mrb[0].mxu0 %v1609
    %v1685 = vpop.f32.mrb[0].mxu0
    %v1686 = vadd.f32 %v1375, %v1685
    %v1687 = vpop.f32.mrb[0].mxu0
    %v1688 = vpop.f32.mrb[0].mxu0
    %v1689 = vpop.f32.mrb[0].mxu0
    %1690 = vdwg.mxu0
    %v1692 = vrot.slane %v1645, 6
    %v1694 = vadd.f32 %v1240, %v1692
    %v1695 = vxor.u32 %v1694, 2147483648
    %v1696 = vmul.f32 %v1695, 1.442695
    %v1697 = vpow.pop %v1696
    %v1698 = vadd.f32 %v1697, 1.0
    %v1699 = vrcp.pop %v1698
    %v1700 = vmul.f32 1.0, %v1699
    %v1702 = vrot.slane %v1647, 6
    %v1704 = vadd.f32 %v1242, %v1702
    %v1705 = vxor.u32 %v1704, 2147483648
    %v1706 = vmul.f32 %v1705, 1.442695
    %v1707 = vpow.pop %v1706
    %v1708 = vadd.f32 %v1707, 1.0
    %v1709 = vrcp.pop %v1708
    %v1710 = vmul.f32 1.0, %v1709
    %v1712 = vrot.slane %v1686, 6
    %v1714 = vmul.f32 %v1700, %v1712
    %v1715 = vadd.f32 %v1324, %v1714
    %v1716 = vtanh.pop %v1715
    %v1717 = vsub.f32 1.0, %v1710
    %v1718 = vmul.f32 %v1717, %v1716
    %v1720 = vrot.slane %v1608, 6
    %v1722 = vmul.f32 %v1710, %v1720
    %v1723 = vadd.f32 %v1718, %v1722
    %v1724 = vpack.c.bf16 %v1723, %v1723
    %v1726 = vrot.slane %v1724, 1
    %1728 = vmatprep.subr.bf16.mxu0 %v1460
    %1729 = vmatpush1.bf16.msra.mxu0 %v1459
    %1730 = vmatprep.subr.bf16.mxu0 %v1463
    %1731 = vmatpush1.bf16.msra.mxu0 %v1462
    %1732 = vmatprep.subr.bf16.mxu0 %v1466
    %1733 = vmatpush1.bf16.msra.mxu0 %v1465
    %1734 = vmatprep.subr.bf16.mxu0 %v1469
    %1735 = vmatpush1.bf16.msra.mxu0 %v1468
    %1736 = vmatprep.subr.bf16.mxu0 %v1472
    %1737 = vmatpush1.bf16.msra.mxu0 %v1471
    %1738 = vmatprep.subr.bf16.mxu0 %v1475
    %1739 = vmatpush1.bf16.msra.mxu0 %v1474
    %1740 = vmatprep.subr.bf16.mxu0 %v1478
    %1741 = vmatpush1.bf16.msra.mxu0 %v1477
    %1742 = vmatprep.subr.bf16.mxu0 %v1481
    %1743 = vmatpush1.bf16.msra.mxu0 %v1480
    %1744 = vmatprep.subr.bf16.mxu0 0
    %1745 = vmatpush1.bf16.msra.mxu0 0
    %1746 = vmatprep.subr.bf16.mxu0 0
    %1747 = vmatpush1.bf16.msra.mxu0 0
    %1748 = vmatprep.subr.bf16.mxu0 0
    %1749 = vmatpush1.bf16.msra.mxu0 0
    %1750 = vmatprep.subr.bf16.mxu0 0
    %1751 = vmatpush1.bf16.msra.mxu0 0
    %1752 = vmatprep.subr.bf16.mxu0 0
    %1753 = vmatpush1.bf16.msra.mxu0 0
    %1754 = vmatprep.subr.bf16.mxu0 0
    %1755 = vmatpush1.bf16.msra.mxu0 0
    %1756 = vmatprep.subr.bf16.mxu0 0
    %1757 = vmatpush1.bf16.msra.mxu0 0
    %1758 = vmatprep.subr.bf16.mxu0 0
    %1759 = vmatpush1.bf16.msra.mxu0 0
    %1760 = vmatprep.mubr.bf16.mxu0 0
    %1761 = vmatmul.mubr.bf16.gmra.mrb[0].mxu0 %v1726
    %v1762 = vpop.f32.mrb[0].mxu0
    %v1763 = vadd.f32 %v1367, %v1762
    %v1764 = vpop.f32.mrb[0].mxu0
    %v1765 = vadd.f32 %v1371, %v1764
    %v1766 = vpop.f32.mrb[0].mxu0
    %v1767 = vpop.f32.mrb[0].mxu0
    %1768 = vdwg.mxu0
    %1769 = vmatprep.subr.bf16.mxu0 0
    %1770 = vmatpush1.bf16.msra.mxu0 %v1461
    %1771 = vmatprep.subr.bf16.mxu0 0
    %1772 = vmatpush1.bf16.msra.mxu0 %v1464
    %1773 = vmatprep.subr.bf16.mxu0 0
    %1774 = vmatpush1.bf16.msra.mxu0 %v1467
    %1775 = vmatprep.subr.bf16.mxu0 0
    %1776 = vmatpush1.bf16.msra.mxu0 %v1470
    %1777 = vmatprep.subr.bf16.mxu0 0
    %1778 = vmatpush1.bf16.msra.mxu0 %v1473
    %1779 = vmatprep.subr.bf16.mxu0 0
    %1780 = vmatpush1.bf16.msra.mxu0 %v1476
    %1781 = vmatprep.subr.bf16.mxu0 0
    %1782 = vmatpush1.bf16.msra.mxu0 %v1479
    %1783 = vmatprep.subr.bf16.mxu0 0
    %1784 = vmatpush1.bf16.msra.mxu0 %v1482
    %1785 = vmatprep.subr.bf16.mxu0 0
    %1786 = vmatpush1.bf16.msra.mxu0 0
    %1787 = vmatprep.subr.bf16.mxu0 0
    %1788 = vmatpush1.bf16.msra.mxu0 0
    %1789 = vmatprep.subr.bf16.mxu0 0
    %1790 = vmatpush1.bf16.msra.mxu0 0
    %1791 = vmatprep.subr.bf16.mxu0 0
    %1792 = vmatpush1.bf16.msra.mxu0 0
    %1793 = vmatprep.subr.bf16.mxu0 0
    %1794 = vmatpush1.bf16.msra.mxu0 0
    %1795 = vmatprep.subr.bf16.mxu0 0
    %1796 = vmatpush1.bf16.msra.mxu0 0
    %1797 = vmatprep.subr.bf16.mxu0 0
    %1798 = vmatpush1.bf16.msra.mxu0 0
    %1799 = vmatprep.subr.bf16.mxu0 0
    %1800 = vmatpush1.bf16.msra.mxu0 0
    %1801 = vmatprep.mubr.bf16.mxu0 0
    %1802 = vmatmul.mubr.bf16.gmra.mrb[0].mxu0 %v1726
    %v1803 = vpop.f32.mrb[0].mxu0
    %v1804 = vadd.f32 %v1375, %v1803
    %v1805 = vpop.f32.mrb[0].mxu0
    %v1806 = vpop.f32.mrb[0].mxu0
    %v1807 = vpop.f32.mrb[0].mxu0
    %1808 = vdwg.mxu0
    %v1810 = vrot.slane %v1763, 4
    %v1812 = vadd.f32 %v1240, %v1810
    %v1813 = vxor.u32 %v1812, 2147483648
    %v1814 = vmul.f32 %v1813, 1.442695
    %v1815 = vpow.pop %v1814
    %v1816 = vadd.f32 %v1815, 1.0
    %v1817 = vrcp.pop %v1816
    %v1818 = vmul.f32 1.0, %v1817
    %v1820 = vrot.slane %v1765, 4
    %v1822 = vadd.f32 %v1242, %v1820
    %v1823 = vxor.u32 %v1822, 2147483648
    %v1824 = vmul.f32 %v1823, 1.442695
    %v1825 = vpow.pop %v1824
    %v1826 = vadd.f32 %v1825, 1.0
    %v1827 = vrcp.pop %v1826
    %v1828 = vmul.f32 1.0, %v1827
    %v1830 = vrot.slane %v1804, 4
    %v1832 = vmul.f32 %v1818, %v1830
    %v1833 = vadd.f32 %v1324, %v1832
    %v1834 = vtanh.pop %v1833
    %v1835 = vsub.f32 1.0, %v1828
    %v1836 = vmul.f32 %v1835, %v1834
    %v1838 = vrot.slane %v1723, 6
    %v1840 = vmul.f32 %v1828, %v1838
    %v1841 = vadd.f32 %v1836, %v1840
    %v1842 = vpack.c.bf16 %v1841, %v1841
    %v1844 = vrot.slane %v1842, 2
    %1846 = vmatprep.subr.bf16.mxu0 %v1460
    %1847 = vmatpush1.bf16.msra.mxu0 %v1459
    %1848 = vmatprep.subr.bf16.mxu0 %v1463
    %1849 = vmatpush1.bf16.msra.mxu0 %v1462
    %1850 = vmatprep.subr.bf16.mxu0 %v1466
    %1851 = vmatpush1.bf16.msra.mxu0 %v1465
    %1852 = vmatprep.subr.bf16.mxu0 %v1469
    %1853 = vmatpush1.bf16.msra.mxu0 %v1468
    %1854 = vmatprep.subr.bf16.mxu0 %v1472
    %1855 = vmatpush1.bf16.msra.mxu0 %v1471
    %1856 = vmatprep.subr.bf16.mxu0 %v1475
    %1857 = vmatpush1.bf16.msra.mxu0 %v1474
    %1858 = vmatprep.subr.bf16.mxu0 %v1478
    %1859 = vmatpush1.bf16.msra.mxu0 %v1477
    %1860 = vmatprep.subr.bf16.mxu0 %v1481
    %1861 = vmatpush1.bf16.msra.mxu0 %v1480
    %1862 = vmatprep.subr.bf16.mxu0 0
    %1863 = vmatpush1.bf16.msra.mxu0 0
    %1864 = vmatprep.subr.bf16.mxu0 0
    %1865 = vmatpush1.bf16.msra.mxu0 0
    %1866 = vmatprep.subr.bf16.mxu0 0
    %1867 = vmatpush1.bf16.msra.mxu0 0
    %1868 = vmatprep.subr.bf16.mxu0 0
    %1869 = vmatpush1.bf16.msra.mxu0 0
    %1870 = vmatprep.subr.bf16.mxu0 0
    %1871 = vmatpush1.bf16.msra.mxu0 0
    %1872 = vmatprep.subr.bf16.mxu0 0
    %1873 = vmatpush1.bf16.msra.mxu0 0
    %1874 = vmatprep.subr.bf16.mxu0 0
    %1875 = vmatpush1.bf16.msra.mxu0 0
    %1876 = vmatprep.subr.bf16.mxu0 0
    %1877 = vmatpush1.bf16.msra.mxu0 0
    %1878 = vmatprep.mubr.bf16.mxu0 0
    %1879 = vmatmul.mubr.bf16.gmra.mrb[0].mxu0 %v1844
    %v1880 = vpop.f32.mrb[0].mxu0
    %v1881 = vadd.f32 %v1367, %v1880
    %v1882 = vpop.f32.mrb[0].mxu0
    %v1883 = vadd.f32 %v1371, %v1882
    %v1884 = vpop.f32.mrb[0].mxu0
    %v1885 = vpop.f32.mrb[0].mxu0
    %1886 = vdwg.mxu0
    %1887 = vmatprep.subr.bf16.mxu0 0
    %1888 = vmatpush1.bf16.msra.mxu0 %v1461
    %1889 = vmatprep.subr.bf16.mxu0 0
    %1890 = vmatpush1.bf16.msra.mxu0 %v1464
    %1891 = vmatprep.subr.bf16.mxu0 0
    %1892 = vmatpush1.bf16.msra.mxu0 %v1467
    %1893 = vmatprep.subr.bf16.mxu0 0
    %1894 = vmatpush1.bf16.msra.mxu0 %v1470
    %1895 = vmatprep.subr.bf16.mxu0 0
    %1896 = vmatpush1.bf16.msra.mxu0 %v1473
    %1897 = vmatprep.subr.bf16.mxu0 0
    %1898 = vmatpush1.bf16.msra.mxu0 %v1476
    %1899 = vmatprep.subr.bf16.mxu0 0
    %1900 = vmatpush1.bf16.msra.mxu0 %v1479
    %1901 = vmatprep.subr.bf16.mxu0 0
    %1902 = vmatpush1.bf16.msra.mxu0 %v1482
    %1903 = vmatprep.subr.bf16.mxu0 0
    %1904 = vmatpush1.bf16.msra.mxu0 0
    %1905 = vmatprep.subr.bf16.mxu0 0
    %1906 = vmatpush1.bf16.msra.mxu0 0
    %1907 = vmatprep.subr.bf16.mxu0 0
    %1908 = vmatpush1.bf16.msra.mxu0 0
    %1909 = vmatprep.subr.bf16.mxu0 0
    %1910 = vmatpush1.bf16.msra.mxu0 0
    %1911 = vmatprep.subr.bf16.mxu0 0
    %1912 = vmatpush1.bf16.msra.mxu0 0
    %1913 = vmatprep.subr.bf16.mxu0 0
    %1914 = vmatpush1.bf16.msra.mxu0 0
    %1915 = vmatprep.subr.bf16.mxu0 0
    %1916 = vmatpush1.bf16.msra.mxu0 0
    %1917 = vmatprep.subr.bf16.mxu0 0
    %1918 = vmatpush1.bf16.msra.mxu0 0
    %1919 = vmatprep.mubr.bf16.mxu0 0
    %1920 = vmatmul.mubr.bf16.gmra.mrb[0].mxu0 %v1844
    %v1921 = vpop.f32.mrb[0].mxu0
    %v1922 = vadd.f32 %v1375, %v1921
    %v1923 = vpop.f32.mrb[0].mxu0
    %v1924 = vpop.f32.mrb[0].mxu0
    %v1925 = vpop.f32.mrb[0].mxu0
    %1926 = vdwg.mxu0
    %v1928 = vrot.slane %v1881, 2
    %v1930 = vadd.f32 %v1240, %v1928
    %v1931 = vxor.u32 %v1930, 2147483648
    %v1932 = vmul.f32 %v1931, 1.442695
    %v1933 = vpow.pop %v1932
    %v1934 = vadd.f32 %v1933, 1.0
    %v1935 = vrcp.pop %v1934
    %v1936 = vmul.f32 1.0, %v1935
    %v1938 = vrot.slane %v1883, 2
    %v1940 = vadd.f32 %v1242, %v1938
    %v1941 = vxor.u32 %v1940, 2147483648
    %v1942 = vmul.f32 %v1941, 1.442695
    %v1943 = vpow.pop %v1942
    %v1944 = vadd.f32 %v1943, 1.0
    %v1945 = vrcp.pop %v1944
    %v1946 = vmul.f32 1.0, %v1945
    %v1948 = vrot.slane %v1922, 2
    %v1950 = vmul.f32 %v1936, %v1948
    %v1951 = vadd.f32 %v1324, %v1950
    %v1952 = vtanh.pop %v1951
    %v1953 = vsub.f32 1.0, %v1946
    %v1954 = vmul.f32 %v1953, %v1952
    %v1956 = vrot.slane %v1841, 6
    %v1958 = vmul.f32 %v1946, %v1956
    %v1959 = vadd.f32 %v1954, %v1958
    %v1960 = vpack.c.bf16 %v1959, %v1959
    %v1962 = vrot.slane %v1960, 3
    %1964 = vmatprep.subr.bf16.mxu0 %v1460
    %1965 = vmatpush1.bf16.msra.mxu0 %v1459
    %1966 = vmatprep.subr.bf16.mxu0 %v1463
    %1967 = vmatpush1.bf16.msra.mxu0 %v1462
    %1968 = vmatprep.subr.bf16.mxu0 %v1466
    %1969 = vmatpush1.bf16.msra.mxu0 %v1465
    %1970 = vmatprep.subr.bf16.mxu0 %v1469
    %1971 = vmatpush1.bf16.msra.mxu0 %v1468
    %1972 = vmatprep.subr.bf16.mxu0 %v1472
    %1973 = vmatpush1.bf16.msra.mxu0 %v1471
    %1974 = vmatprep.subr.bf16.mxu0 %v1475
    %1975 = vmatpush1.bf16.msra.mxu0 %v1474
    %1976 = vmatprep.subr.bf16.mxu0 %v1478
    %1977 = vmatpush1.bf16.msra.mxu0 %v1477
    %1978 = vmatprep.subr.bf16.mxu0 %v1481
    %1979 = vmatpush1.bf16.msra.mxu0 %v1480
    %1980 = vmatprep.subr.bf16.mxu0 0
    %1981 = vmatpush1.bf16.msra.mxu0 0
    %1982 = vmatprep.subr.bf16.mxu0 0
    %1983 = vmatpush1.bf16.msra.mxu0 0
    %1984 = vmatprep.subr.bf16.mxu0 0
    %1985 = vmatpush1.bf16.msra.mxu0 0
    %1986 = vmatprep.subr.bf16.mxu0 0
    %1987 = vmatpush1.bf16.msra.mxu0 0
    %1988 = vmatprep.subr.bf16.mxu0 0
    %1989 = vmatpush1.bf16.msra.mxu0 0
    %1990 = vmatprep.subr.bf16.mxu0 0
    %1991 = vmatpush1.bf16.msra.mxu0 0
    %1992 = vmatprep.subr.bf16.mxu0 0
    %1993 = vmatpush1.bf16.msra.mxu0 0
    %1994 = vmatprep.subr.bf16.mxu0 0
    %1995 = vmatpush1.bf16.msra.mxu0 0
    %1996 = vmatprep.mubr.bf16.mxu0 0
    %1997 = vmatmul.mubr.bf16.gmra.mrb[0].mxu0 %v1962
    %v1998 = vpop.f32.mrb[0].mxu0
    %v1999 = vadd.f32 %v1367, %v1998
    %v2000 = vpop.f32.mrb[0].mxu0
    %v2001 = vadd.f32 %v1371, %v2000
    %v2002 = vpop.f32.mrb[0].mxu0
    %v2003 = vpop.f32.mrb[0].mxu0
    %2004 = vdwg.mxu0
    %2005 = vmatprep.subr.bf16.mxu0 0
    %2006 = vmatpush1.bf16.msra.mxu0 %v1461
    %2007 = vmatprep.subr.bf16.mxu0 0
    %2008 = vmatpush1.bf16.msra.mxu0 %v1464
    %2009 = vmatprep.subr.bf16.mxu0 0
    %2010 = vmatpush1.bf16.msra.mxu0 %v1467
    %2011 = vmatprep.subr.bf16.mxu0 0
    %2012 = vmatpush1.bf16.msra.mxu0 %v1470
    %2013 = vmatprep.subr.bf16.mxu0 0
    %2014 = vmatpush1.bf16.msra.mxu0 %v1473
    %2015 = vmatprep.subr.bf16.mxu0 0
    %2016 = vmatpush1.bf16.msra.mxu0 %v1476
    %2017 = vmatprep.subr.bf16.mxu0 0
    %2018 = vmatpush1.bf16.msra.mxu0 %v1479
    %2019 = vmatprep.subr.bf16.mxu0 0
    %2020 = vmatpush1.bf16.msra.mxu0 %v1482
    %2021 = vmatprep.subr.bf16.mxu0 0
    %2022 = vmatpush1.bf16.msra.mxu0 0
    %2023 = vmatprep.subr.bf16.mxu0 0
    %2024 = vmatpush1.bf16.msra.mxu0 0
    %2025 = vmatprep.subr.bf16.mxu0 0
    %2026 = vmatpush1.bf16.msra.mxu0 0
    %2027 = vmatprep.subr.bf16.mxu0 0
    %2028 = vmatpush1.bf16.msra.mxu0 0
    %2029 = vmatprep.subr.bf16.mxu0 0
    %2030 = vmatpush1.bf16.msra.mxu0 0
    %2031 = vmatprep.subr.bf16.mxu0 0
    %2032 = vmatpush1.bf16.msra.mxu0 0
    %2033 = vmatprep.subr.bf16.mxu0 0
    %2034 = vmatpush1.bf16.msra.mxu0 0
    %2035 = vmatprep.subr.bf16.mxu0 0
    %2036 = vmatpush1.bf16.msra.mxu0 0
    %2037 = vmatprep.mubr.bf16.mxu0 0
    %2038 = vmatmul.mubr.bf16.gmra.mrb[0].mxu0 %v1962
    %v2039 = vpop.f32.mrb[0].mxu0
    %v2040 = vadd.f32 %v1375, %v2039
    %v2041 = vpop.f32.mrb[0].mxu0
    %v2042 = vpop.f32.mrb[0].mxu0
    %v2043 = vpop.f32.mrb[0].mxu0
    %2044 = vdwg.mxu0
    %v2045 = vadd.f32 %v1244, %v1999
    %v2046 = vxor.u32 %v2045, 2147483648
    %v2047 = vmul.f32 %v2046, 1.442695
    %v2048 = vpow.pop %v2047
    %v2049 = vadd.f32 %v2048, 1.0
    %v2050 = vrcp.pop %v2049
    %v2051 = vmul.f32 1.0, %v2050
    %v2052 = vadd.f32 %v1246, %v2001
    %v2053 = vxor.u32 %v2052, 2147483648
    %v2054 = vmul.f32 %v2053, 1.442695
    %v2055 = vpow.pop %v2054
    %v2056 = vadd.f32 %v2055, 1.0
    %v2057 = vrcp.pop %v2056
    %v2058 = vmul.f32 1.0, %v2057
    %v2059 = vmul.f32 %v2051, %v2040
    %v2060 = vadd.f32 %v1327, %v2059
    %v2061 = vtanh.pop %v2060
    %v2062 = vsub.f32 1.0, %v2058
    %v2063 = vmul.f32 %v2062, %v2061
    %v2065 = vrot.slane %v1959, 6
    %v2067 = vmul.f32 %v2058, %v2065
    %v2068 = vadd.f32 %v2063, %v2067
    %v2069 = vpack.c.bf16 %v2068, %v2068
    %2070 = vmatprep.subr.bf16.mxu0 %v1460
    %2071 = vmatpush1.bf16.msra.mxu0 %v1459
    %2072 = vmatprep.subr.bf16.mxu0 %v1463
    %2073 = vmatpush1.bf16.msra.mxu0 %v1462
    %2074 = vmatprep.subr.bf16.mxu0 %v1466
    %2075 = vmatpush1.bf16.msra.mxu0 %v1465
    %2076 = vmatprep.subr.bf16.mxu0 %v1469
    %2077 = vmatpush1.bf16.msra.mxu0 %v1468
    %2078 = vmatprep.subr.bf16.mxu0 %v1472
    %2079 = vmatpush1.bf16.msra.mxu0 %v1471
    %2080 = vmatprep.subr.bf16.mxu0 %v1475
    %2081 = vmatpush1.bf16.msra.mxu0 %v1474
    %2082 = vmatprep.subr.bf16.mxu0 %v1478
    %2083 = vmatpush1.bf16.msra.mxu0 %v1477
    %2084 = vmatprep.subr.bf16.mxu0 %v1481
    %2085 = vmatpush1.bf16.msra.mxu0 %v1480
    %2086 = vmatprep.subr.bf16.mxu0 0
    %2087 = vmatpush1.bf16.msra.mxu0 0
    %2088 = vmatprep.subr.bf16.mxu0 0
    %2089 = vmatpush1.bf16.msra.mxu0 0
    %2090 = vmatprep.subr.bf16.mxu0 0
    %2091 = vmatpush1.bf16.msra.mxu0 0
    %2092 = vmatprep.subr.bf16.mxu0 0
    %2093 = vmatpush1.bf16.msra.mxu0 0
    %2094 = vmatprep.subr.bf16.mxu0 0
    %2095 = vmatpush1.bf16.msra.mxu0 0
    %2096 = vmatprep.subr.bf16.mxu0 0
    %2097 = vmatpush1.bf16.msra.mxu0 0
    %2098 = vmatprep.subr.bf16.mxu0 0
    %2099 = vmatpush1.bf16.msra.mxu0 0
    %2100 = vmatprep.subr.bf16.mxu0 0
    %2101 = vmatpush1.bf16.msra.mxu0 0
    %2102 = vmatprep.mubr.bf16.mxu0 0
    %2103 = vmatmul.mubr.bf16.gmra.mrb[0].mxu0 %v2069
    %v2104 = vpop.f32.mrb[0].mxu0
    %v2105 = vadd.f32 %v1367, %v2104
    %v2106 = vpop.f32.mrb[0].mxu0
    %v2107 = vadd.f32 %v1371, %v2106
    %v2108 = vpop.f32.mrb[0].mxu0
    %v2109 = vpop.f32.mrb[0].mxu0
    %2110 = vdwg.mxu0
    %2111 = vmatprep.subr.bf16.mxu0 0
    %2112 = vmatpush1.bf16.msra.mxu0 %v1461
    %2113 = vmatprep.subr.bf16.mxu0 0
    %2114 = vmatpush1.bf16.msra.mxu0 %v1464
    %2115 = vmatprep.subr.bf16.mxu0 0
    %2116 = vmatpush1.bf16.msra.mxu0 %v1467
    %2117 = vmatprep.subr.bf16.mxu0 0
    %2118 = vmatpush1.bf16.msra.mxu0 %v1470
    %2119 = vmatprep.subr.bf16.mxu0 0
    %2120 = vmatpush1.bf16.msra.mxu0 %v1473
    %2121 = vmatprep.subr.bf16.mxu0 0
    %2122 = vmatpush1.bf16.msra.mxu0 %v1476
    %2123 = vmatprep.subr.bf16.mxu0 0
    %2124 = vmatpush1.bf16.msra.mxu0 %v1479
    %2125 = vmatprep.subr.bf16.mxu0 0
    %2126 = vmatpush1.bf16.msra.mxu0 %v1482
    %2127 = vmatprep.subr.bf16.mxu0 0
    %2128 = vmatpush1.bf16.msra.mxu0 0
    %2129 = vmatprep.subr.bf16.mxu0 0
    %2130 = vmatpush1.bf16.msra.mxu0 0
    %2131 = vmatprep.subr.bf16.mxu0 0
    %2132 = vmatpush1.bf16.msra.mxu0 0
    %2133 = vmatprep.subr.bf16.mxu0 0
    %2134 = vmatpush1.bf16.msra.mxu0 0
    %2135 = vmatprep.subr.bf16.mxu0 0
    %2136 = vmatpush1.bf16.msra.mxu0 0
    %2137 = vmatprep.subr.bf16.mxu0 0
    %2138 = vmatpush1.bf16.msra.mxu0 0
    %2139 = vmatprep.subr.bf16.mxu0 0
    %2140 = vmatpush1.bf16.msra.mxu0 0
    %2141 = vmatprep.subr.bf16.mxu0 0
    %2142 = vmatpush1.bf16.msra.mxu0 0
    %2143 = vmatprep.mubr.bf16.mxu0 0
    %2144 = vmatmul.mubr.bf16.gmra.mrb[0].mxu0 %v2069
    %v2145 = vpop.f32.mrb[0].mxu0
    %v2146 = vadd.f32 %v1375, %v2145
    %v2147 = vpop.f32.mrb[0].mxu0
    %v2148 = vpop.f32.mrb[0].mxu0
    %v2149 = vpop.f32.mrb[0].mxu0
    %2150 = vdwg.mxu0
    %v2152 = vrot.slane %v2105, 6
    %v2154 = vadd.f32 %v1244, %v2152
    %v2155 = vxor.u32 %v2154, 2147483648
    %v2156 = vmul.f32 %v2155, 1.442695
    %v2157 = vpow.pop %v2156
    %v2158 = vadd.f32 %v2157, 1.0
    %v2159 = vrcp.pop %v2158
    %v2160 = vmul.f32 1.0, %v2159
    %v2162 = vrot.slane %v2107, 6
    %v2164 = vadd.f32 %v1246, %v2162
    %v2165 = vxor.u32 %v2164, 2147483648
    %v2166 = vmul.f32 %v2165, 1.442695
    %v2167 = vpow.pop %v2166
    %v2168 = vadd.f32 %v2167, 1.0
    %v2169 = vrcp.pop %v2168
    %v2170 = vmul.f32 1.0, %v2169
    %v2172 = vrot.slane %v2146, 6
    %v2174 = vmul.f32 %v2160, %v2172
    %v2175 = vadd.f32 %v1327, %v2174
    %v2176 = vtanh.pop %v2175
    %v2177 = vsub.f32 1.0, %v2170
    %v2178 = vmul.f32 %v2177, %v2176
    %v2180 = vrot.slane %v2068, 6
    %v2182 = vmul.f32 %v2170, %v2180
    %v2183 = vadd.f32 %v2178, %v2182
    %v2184 = vpack.c.bf16 %v2183, %v2183
    %v2186 = vrot.slane %v2184, 1
    %2188 = vmatprep.subr.bf16.mxu0 %v1460
    %2189 = vmatpush1.bf16.msra.mxu0 %v1459
    %2190 = vmatprep.subr.bf16.mxu0 %v1463
    %2191 = vmatpush1.bf16.msra.mxu0 %v1462
    %2192 = vmatprep.subr.bf16.mxu0 %v1466
    %2193 = vmatpush1.bf16.msra.mxu0 %v1465
    %2194 = vmatprep.subr.bf16.mxu0 %v1469
    %2195 = vmatpush1.bf16.msra.mxu0 %v1468
    %2196 = vmatprep.subr.bf16.mxu0 %v1472
    %2197 = vmatpush1.bf16.msra.mxu0 %v1471
    %2198 = vmatprep.subr.bf16.mxu0 %v1475
    %2199 = vmatpush1.bf16.msra.mxu0 %v1474
    %2200 = vmatprep.subr.bf16.mxu0 %v1478
    %2201 = vmatpush1.bf16.msra.mxu0 %v1477
    %2202 = vmatprep.subr.bf16.mxu0 %v1481
    %2203 = vmatpush1.bf16.msra.mxu0 %v1480
    %2204 = vmatprep.subr.bf16.mxu0 0
    %2205 = vmatpush1.bf16.msra.mxu0 0
    %2206 = vmatprep.subr.bf16.mxu0 0
    %2207 = vmatpush1.bf16.msra.mxu0 0
    %2208 = vmatprep.subr.bf16.mxu0 0
    %2209 = vmatpush1.bf16.msra.mxu0 0
    %2210 = vmatprep.subr.bf16.mxu0 0
    %2211 = vmatpush1.bf16.msra.mxu0 0
    %2212 = vmatprep.subr.bf16.mxu0 0
    %2213 = vmatpush1.bf16.msra.mxu0 0
    %2214 = vmatprep.subr.bf16.mxu0 0
    %2215 = vmatpush1.bf16.msra.mxu0 0
    %2216 = vmatprep.subr.bf16.mxu0 0
    %2217 = vmatpush1.bf16.msra.mxu0 0
    %2218 = vmatprep.subr.bf16.mxu0 0
    %2219 = vmatpush1.bf16.msra.mxu0 0
    %2220 = vmatprep.mubr.bf16.mxu0 0
    %2221 = vmatmul.mubr.bf16.gmra.mrb[0].mxu0 %v2186
    %v2222 = vpop.f32.mrb[0].mxu0
    %v2223 = vadd.f32 %v1367, %v2222
    %v2224 = vpop.f32.mrb[0].mxu0
    %v2225 = vadd.f32 %v1371, %v2224
    %v2226 = vpop.f32.mrb[0].mxu0
    %v2227 = vpop.f32.mrb[0].mxu0
    %2228 = vdwg.mxu0
    %2229 = vmatprep.subr.bf16.mxu0 0
    %2230 = vmatpush1.bf16.msra.mxu0 %v1461
    %2231 = vmatprep.subr.bf16.mxu0 0
    %2232 = vmatpush1.bf16.msra.mxu0 %v1464
    %2233 = vmatprep.subr.bf16.mxu0 0
    %2234 = vmatpush1.bf16.msra.mxu0 %v1467
    %2235 = vmatprep.subr.bf16.mxu0 0
    %2236 = vmatpush1.bf16.msra.mxu0 %v1470
    %2237 = vmatprep.subr.bf16.mxu0 0
    %2238 = vmatpush1.bf16.msra.mxu0 %v1473
    %2239 = vmatprep.subr.bf16.mxu0 0
    %2240 = vmatpush1.bf16.msra.mxu0 %v1476
    %2241 = vmatprep.subr.bf16.mxu0 0
    %2242 = vmatpush1.bf16.msra.mxu0 %v1479
    %2243 = vmatprep.subr.bf16.mxu0 0
    %2244 = vmatpush1.bf16.msra.mxu0 %v1482
    %2245 = vmatprep.subr.bf16.mxu0 0
    %2246 = vmatpush1.bf16.msra.mxu0 0
    %2247 = vmatprep.subr.bf16.mxu0 0
    %2248 = vmatpush1.bf16.msra.mxu0 0
    %2249 = vmatprep.subr.bf16.mxu0 0
    %2250 = vmatpush1.bf16.msra.mxu0 0
    %2251 = vmatprep.subr.bf16.mxu0 0
    %2252 = vmatpush1.bf16.msra.mxu0 0
    %2253 = vmatprep.subr.bf16.mxu0 0
    %2254 = vmatpush1.bf16.msra.mxu0 0
    %2255 = vmatprep.subr.bf16.mxu0 0
    %2256 = vmatpush1.bf16.msra.mxu0 0
    %2257 = vmatprep.subr.bf16.mxu0 0
    %2258 = vmatpush1.bf16.msra.mxu0 0
    %2259 = vmatprep.subr.bf16.mxu0 0
    %2260 = vmatpush1.bf16.msra.mxu0 0
    %2261 = vmatprep.mubr.bf16.mxu0 0
    %2262 = vmatmul.mubr.bf16.gmra.mrb[0].mxu0 %v2186
    %v2263 = vpop.f32.mrb[0].mxu0
    %v2264 = vadd.f32 %v1375, %v2263
    %v2265 = vpop.f32.mrb[0].mxu0
    %v2266 = vpop.f32.mrb[0].mxu0
    %v2267 = vpop.f32.mrb[0].mxu0
    %2268 = vdwg.mxu0
    %v2270 = vrot.slane %v2223, 4
    %v2272 = vadd.f32 %v1244, %v2270
    %v2273 = vxor.u32 %v2272, 2147483648
    %v2274 = vmul.f32 %v2273, 1.442695
    %v2275 = vpow.pop %v2274
    %v2276 = vadd.f32 %v2275, 1.0
    %v2277 = vrcp.pop %v2276
    %v2278 = vmul.f32 1.0, %v2277
    %v2280 = vrot.slane %v2225, 4
    %v2282 = vadd.f32 %v1246, %v2280
    %v2283 = vxor.u32 %v2282, 2147483648
    %v2284 = vmul.f32 %v2283, 1.442695
    %v2285 = vpow.pop %v2284
    %v2286 = vadd.f32 %v2285, 1.0
    %v2287 = vrcp.pop %v2286
    %v2288 = vmul.f32 1.0, %v2287
    %v2290 = vrot.slane %v2264, 4
    %v2292 = vmul.f32 %v2278, %v2290
    %v2293 = vadd.f32 %v1327, %v2292
    %v2294 = vtanh.pop %v2293
    %v2295 = vsub.f32 1.0, %v2288
    %v2296 = vmul.f32 %v2295, %v2294
    %v2298 = vrot.slane %v2183, 6
    %v2300 = vmul.f32 %v2288, %v2298
    %v2301 = vadd.f32 %v2296, %v2300
    %v2302 = vpack.c.bf16 %v2301, %v2301
    %v2304 = vrot.slane %v2302, 2
    %2306 = vmatprep.subr.bf16.mxu0 %v1460
    %2307 = vmatpush1.bf16.msra.mxu0 %v1459
    %2308 = vmatprep.subr.bf16.mxu0 %v1463
    %2309 = vmatpush1.bf16.msra.mxu0 %v1462
    %2310 = vmatprep.subr.bf16.mxu0 %v1466
    %2311 = vmatpush1.bf16.msra.mxu0 %v1465
    %2312 = vmatprep.subr.bf16.mxu0 %v1469
    %2313 = vmatpush1.bf16.msra.mxu0 %v1468
    %2314 = vmatprep.subr.bf16.mxu0 %v1472
    %2315 = vmatpush1.bf16.msra.mxu0 %v1471
    %2316 = vmatprep.subr.bf16.mxu0 %v1475
    %2317 = vmatpush1.bf16.msra.mxu0 %v1474
    %2318 = vmatprep.subr.bf16.mxu0 %v1478
    %2319 = vmatpush1.bf16.msra.mxu0 %v1477
    %2320 = vmatprep.subr.bf16.mxu0 %v1481
    %2321 = vmatpush1.bf16.msra.mxu0 %v1480
    %2322 = vmatprep.subr.bf16.mxu0 0
    %2323 = vmatpush1.bf16.msra.mxu0 0
    %2324 = vmatprep.subr.bf16.mxu0 0
    %2325 = vmatpush1.bf16.msra.mxu0 0
    %2326 = vmatprep.subr.bf16.mxu0 0
    %2327 = vmatpush1.bf16.msra.mxu0 0
    %2328 = vmatprep.subr.bf16.mxu0 0
    %2329 = vmatpush1.bf16.msra.mxu0 0
    %2330 = vmatprep.subr.bf16.mxu0 0
    %2331 = vmatpush1.bf16.msra.mxu0 0
    %2332 = vmatprep.subr.bf16.mxu0 0
    %2333 = vmatpush1.bf16.msra.mxu0 0
    %2334 = vmatprep.subr.bf16.mxu0 0
    %2335 = vmatpush1.bf16.msra.mxu0 0
    %2336 = vmatprep.subr.bf16.mxu0 0
    %2337 = vmatpush1.bf16.msra.mxu0 0
    %2338 = vmatprep.mubr.bf16.mxu0 0
    %2339 = vmatmul.mubr.bf16.gmra.mrb[0].mxu0 %v2304
    %v2340 = vpop.f32.mrb[0].mxu0
    %v2341 = vadd.f32 %v1367, %v2340
    %v2342 = vpop.f32.mrb[0].mxu0
    %v2343 = vadd.f32 %v1371, %v2342
    %v2344 = vpop.f32.mrb[0].mxu0
    %v2345 = vpop.f32.mrb[0].mxu0
    %2346 = vdwg.mxu0
    %2347 = vmatprep.subr.bf16.mxu0 0
    %2348 = vmatpush1.bf16.msra.mxu0 %v1461
    %2349 = vmatprep.subr.bf16.mxu0 0
    %2350 = vmatpush1.bf16.msra.mxu0 %v1464
    %2351 = vmatprep.subr.bf16.mxu0 0
    %2352 = vmatpush1.bf16.msra.mxu0 %v1467
    %2353 = vmatprep.subr.bf16.mxu0 0
    %2354 = vmatpush1.bf16.msra.mxu0 %v1470
    %2355 = vmatprep.subr.bf16.mxu0 0
    %2356 = vmatpush1.bf16.msra.mxu0 %v1473
    %2357 = vmatprep.subr.bf16.mxu0 0
    %2358 = vmatpush1.bf16.msra.mxu0 %v1476
    %2359 = vmatprep.subr.bf16.mxu0 0
    %2360 = vmatpush1.bf16.msra.mxu0 %v1479
    %2361 = vmatprep.subr.bf16.mxu0 0
    %2362 = vmatpush1.bf16.msra.mxu0 %v1482
    %2363 = vmatprep.subr.bf16.mxu0 0
    %2364 = vmatpush1.bf16.msra.mxu0 0
    %2365 = vmatprep.subr.bf16.mxu0 0
    %2366 = vmatpush1.bf16.msra.mxu0 0
    %2367 = vmatprep.subr.bf16.mxu0 0
    %2368 = vmatpush1.bf16.msra.mxu0 0
    %2369 = vmatprep.subr.bf16.mxu0 0
    %2370 = vmatpush1.bf16.msra.mxu0 0
    %2371 = vmatprep.subr.bf16.mxu0 0
    %2372 = vmatpush1.bf16.msra.mxu0 0
    %2373 = vmatprep.subr.bf16.mxu0 0
    %2374 = vmatpush1.bf16.msra.mxu0 0
    %2375 = vmatprep.subr.bf16.mxu0 0
    %2376 = vmatpush1.bf16.msra.mxu0 0
    %2377 = vmatprep.subr.bf16.mxu0 0
    %2378 = vmatpush1.bf16.msra.mxu0 0
    %2379 = vmatprep.mubr.bf16.mxu0 0
    %2380 = vmatmul.mubr.bf16.gmra.mrb[0].mxu0 %v2304
    %v2381 = vpop.f32.mrb[0].mxu0
    %v2382 = vadd.f32 %v1375, %v2381
    %v2383 = vpop.f32.mrb[0].mxu0
    %v2384 = vpop.f32.mrb[0].mxu0
    %v2385 = vpop.f32.mrb[0].mxu0
    %2386 = vdwg.mxu0
    %v2388 = vrot.slane %v2341, 2
    %v2390 = vadd.f32 %v1244, %v2388
    %v2391 = vxor.u32 %v2390, 2147483648
    %v2392 = vmul.f32 %v2391, 1.442695
    %v2393 = vpow.pop %v2392
    %v2394 = vadd.f32 %v2393, 1.0
    %v2395 = vrcp.pop %v2394
    %v2396 = vmul.f32 1.0, %v2395
    %v2398 = vrot.slane %v2343, 2
    %v2400 = vadd.f32 %v1246, %v2398
    %v2401 = vxor.u32 %v2400, 2147483648
    %v2402 = vmul.f32 %v2401, 1.442695
    %v2403 = vpow.pop %v2402
    %v2404 = vadd.f32 %v2403, 1.0
    %v2405 = vrcp.pop %v2404
    %v2406 = vmul.f32 1.0, %v2405
    %v2408 = vrot.slane %v2382, 2
    %v2410 = vmul.f32 %v2396, %v2408
    %v2411 = vadd.f32 %v1327, %v2410
    %v2412 = vtanh.pop %v2411
    %v2413 = vsub.f32 1.0, %v2406
    %v2414 = vmul.f32 %v2413, %v2412
    %v2416 = vrot.slane %v2301, 6
    %v2418 = vmul.f32 %v2406, %v2416
    %v2419 = vadd.f32 %v2414, %v2418
    %s2420 = smul.u32 4, 16
    %s2421 = smul.u32 %s2420, 3
    %s2422 = sshll.u32 %s2421, 4
    %2423 = dma.done [#allocation4], %s2422
    %s2424 = smul.u32 4, 51
    %s2425 = smul.u32 %s2424, 3
    %s2426 = sshll.u32 %s2425, 4
    %2427 = dma.done %s276, %s2426
    %v2428 = vpack.c.bf16 %v2419, %v2419
    %v2429 = vld [vmem:[#allocation2] sm:$0xff]
    %v2430 = vld [vmem:[#allocation2 + $0x8] sm:$0xff]
    %v2431 = vld [vmem:[#allocation2 + $0x10] sm:$0xff]
    %v2432 = vld [vmem:[#allocation2 + $0x18] sm:$0xff]
    %v2433 = vld [vmem:[#allocation2 + $0x20] sm:$0xff]
    %v2434 = vld [vmem:[#allocation2 + $0x28] sm:$0xff]
    %v2435 = vld [vmem:[#allocation2 + $0x30] sm:$0xff]
    %v2436 = vld [vmem:[#allocation2 + $0x38] sm:$0xff]
    %v2437 = vld [vmem:[#allocation2 + $0x40] sm:$0xff]
    %v2438 = vld [vmem:[#allocation2 + $0x48] sm:$0xff]
    %v2439 = vld [vmem:[#allocation2 + $0x50] sm:$0xff]
    %v2440 = vld [vmem:[#allocation2 + $0x58] sm:$0xff]
    %v2441 = vld [vmem:[#allocation2 + $0x60] sm:$0xff]
    %v2442 = vld [vmem:[#allocation2 + $0x68] sm:$0xff]
    %v2443 = vld [vmem:[#allocation2 + $0x70] sm:$0xff]
    %v2444 = vld [vmem:[#allocation2 + $0x78] sm:$0xff]
    %v2445 = vld [vmem:[#allocation2 + $0x80] sm:$0xff]
    %v2446 = vld [vmem:[#allocation2 + $0x88] sm:$0xff]
    %v2447 = vld [vmem:[#allocation2 + $0x90] sm:$0xff]
    %v2448 = vld [vmem:[#allocation2 + $0x98] sm:$0xff]
    %v2449 = vld [vmem:[#allocation2 + $0xa0] sm:$0xff]
    %v2450 = vld [vmem:[#allocation2 + $0xa8] sm:$0xff]
    %v2451 = vld [vmem:[#allocation2 + $0xb0] sm:$0xff]
    %v2452 = vld [vmem:[#allocation2 + $0xb8] sm:$0xff]
    %v2453 = vld [vmem:[%s5] sm:$0xf]
    %v2454 = vld [vmem:[#allocation3] sm:$0xff]
    %v2455 = vld [vmem:[#allocation3 + $0x8] sm:$0xf]
    %v2456 = vld [vmem:[#allocation3 + $0xc] sm:$0xff]
    %v2457 = vld [vmem:[#allocation3 + $0x14] sm:$0xf]
    %v2458 = vld [vmem:[#allocation3 + $0x18] sm:$0xff]
    %v2459 = vld [vmem:[#allocation3 + $0x20] sm:$0xf]
    %v2460 = vld [vmem:[#allocation3 + $0x24] sm:$0xff]
    %v2461 = vld [vmem:[#allocation3 + $0x2c] sm:$0xf]
    %v2462 = vld [vmem:[#allocation3 + $0x30] sm:$0xff]
    %v2463 = vld [vmem:[#allocation3 + $0x38] sm:$0xf]
    %v2464 = vld [vmem:[#allocation3 + $0x3c] sm:$0xff]
    %v2465 = vld [vmem:[#allocation3 + $0x44] sm:$0xf]
    %v2466 = vld [vmem:[#allocation3 + $0x48] sm:$0xff]
    %v2467 = vld [vmem:[#allocation3 + $0x50] sm:$0xf]
    %v2468 = vld [vmem:[#allocation3 + $0x54] sm:$0xff]
    %v2469 = vld [vmem:[#allocation3 + $0x5c] sm:$0xf]
    %v2470 = vld [vmem:[#allocation3 + $0x60] sm:$0xff]
    %v2471 = vld [vmem:[#allocation3 + $0x68] sm:$0xf]
    %v2472 = vld [vmem:[#allocation3 + $0x6c] sm:$0xff]
    %v2473 = vld [vmem:[#allocation3 + $0x74] sm:$0xf]
    %v2474 = vld [vmem:[#allocation3 + $0x78] sm:$0xff]
    %v2475 = vld [vmem:[#allocation3 + $0x80] sm:$0xf]
    %v2476 = vld [vmem:[#allocation3 + $0x84] sm:$0xff]
    %v2477 = vld [vmem:[#allocation3 + $0x8c] sm:$0xf]
    %v2478 = vld [vmem:[#allocation3 + $0x90] sm:$0xff]
    %v2479 = vld [vmem:[#allocation3 + $0x98] sm:$0xf]
    %v2480 = vld [vmem:[#allocation3 + $0x9c] sm:$0xff]
    %v2481 = vld [vmem:[#allocation3 + $0xa4] sm:$0xf]
    %v2482 = vld [vmem:[#allocation3 + $0xa8] sm:$0xff]
    %v2483 = vld [vmem:[#allocation3 + $0xb0] sm:$0xf]
    %v2484 = vld [vmem:[#allocation3 + $0xb4] sm:$0xff]
    %v2485 = vld [vmem:[#allocation3 + $0xbc] sm:$0xf]
    %v2486 = vld [vmem:[#allocation3 + $0xc0] sm:$0xff]
    %v2487 = vld [vmem:[#allocation3 + $0xc8] sm:$0xf]
    %v2488 = vld [vmem:[#allocation3 + $0xcc] sm:$0xff]
    %v2489 = vld [vmem:[#allocation3 + $0xd4] sm:$0xf]
    %v2490 = vld [vmem:[#allocation3 + $0xd8] sm:$0xff]
    %v2491 = vld [vmem:[#allocation3 + $0xe0] sm:$0xf]
    %v2492 = vld [vmem:[#allocation3 + $0xe4] sm:$0xff]
    %v2493 = vld [vmem:[#allocation3 + $0xec] sm:$0xf]
    %v2494 = vld [vmem:[#allocation3 + $0xf0] sm:$0xff]
    %v2495 = vld [vmem:[#allocation3 + $0xf8] sm:$0xf]
    %v2496 = vld [vmem:[#allocation3 + $0xfc] sm:$0xff]
    %v2497 = vld [vmem:[#allocation3 + $0x104] sm:$0xf]
    %v2498 = vld [vmem:[#allocation3 + $0x108] sm:$0xff]
    %v2499 = vld [vmem:[#allocation3 + $0x110] sm:$0xf]
    %v2500 = vld [vmem:[#allocation3 + $0x114] sm:$0xff]
    %v2501 = vld [vmem:[#allocation3 + $0x11c] sm:$0xf]
    %v2502 = vld [vmem:[#allocation3 + $0x120] sm:$0xff]
    %v2503 = vld [vmem:[#allocation3 + $0x128] sm:$0xf]
    %v2504 = vld [vmem:[#allocation3 + $0x12c] sm:$0xff]
    %v2505 = vld [vmem:[#allocation3 + $0x134] sm:$0xf]
    %v2506 = vld [vmem:[#allocation3 + $0x138] sm:$0xff]
    %v2507 = vld [vmem:[#allocation3 + $0x140] sm:$0xf]
    %v2508 = vld [vmem:[#allocation3 + $0x144] sm:$0xff]
    %v2509 = vld [vmem:[#allocation3 + $0x14c] sm:$0xf]
    %v2510 = vld [vmem:[#allocation3 + $0x150] sm:$0xff]
    %v2511 = vld [vmem:[#allocation3 + $0x158] sm:$0xf]
    %v2512 = vld [vmem:[#allocation3 + $0x15c] sm:$0xff]
    %v2513 = vld [vmem:[#allocation3 + $0x164] sm:$0xf]
    %v2514 = vld [vmem:[#allocation3 + $0x168] sm:$0xff]
    %v2515 = vld [vmem:[#allocation3 + $0x170] sm:$0xf]
    %v2516 = vld [vmem:[#allocation3 + $0x174] sm:$0xff]
    %v2517 = vld [vmem:[#allocation3 + $0x17c] sm:$0xf]
    %v2518 = vld [vmem:[#allocation3 + $0x180] sm:$0xff]
    %v2519 = vld [vmem:[#allocation3 + $0x188] sm:$0xf]
    %v2520 = vld [vmem:[#allocation3 + $0x18c] sm:$0xff]
    %v2521 = vld [vmem:[#allocation3 + $0x194] sm:$0xf]
    %v2522 = vld [vmem:[#allocation3 + $0x198] sm:$0xff]
    %v2523 = vld [vmem:[#allocation3 + $0x1a0] sm:$0xf]
    %v2524 = vld [vmem:[#allocation3 + $0x1a4] sm:$0xff]
    %v2525 = vld [vmem:[#allocation3 + $0x1ac] sm:$0xf]
    %v2526 = vld [vmem:[#allocation3 + $0x1b0] sm:$0xff]
    %v2527 = vld [vmem:[#allocation3 + $0x1b8] sm:$0xf]
    %v2528 = vld [vmem:[#allocation3 + $0x1bc] sm:$0xff]
    %v2529 = vld [vmem:[#allocation3 + $0x1c4] sm:$0xf]
    %v2530 = vld [vmem:[#allocation3 + $0x1c8] sm:$0xff]
    %v2531 = vld [vmem:[#allocation3 + $0x1d0] sm:$0xf]
    %v2532 = vld [vmem:[#allocation3 + $0x1d4] sm:$0xff]
    %v2533 = vld [vmem:[#allocation3 + $0x1dc] sm:$0xf]
    %v2534 = vld [vmem:[#allocation3 + $0x1e0] sm:$0xff]
    %v2535 = vld [vmem:[#allocation3 + $0x1e8] sm:$0xf]
    %v2536 = vld [vmem:[#allocation3 + $0x1ec] sm:$0xff]
    %v2537 = vld [vmem:[#allocation3 + $0x1f4] sm:$0xf]
    %v2538 = vld [vmem:[#allocation3 + $0x1f8] sm:$0xff]
    %v2539 = vld [vmem:[#allocation3 + $0x200] sm:$0xf]
    %v2540 = vld [vmem:[#allocation3 + $0x204] sm:$0xff]
    %v2541 = vld [vmem:[#allocation3 + $0x20c] sm:$0xf]
    %v2542 = vld [vmem:[#allocation3 + $0x210] sm:$0xff]
    %v2543 = vld [vmem:[#allocation3 + $0x218] sm:$0xf]
    %v2544 = vld [vmem:[#allocation3 + $0x21c] sm:$0xff]
    %v2545 = vld [vmem:[#allocation3 + $0x224] sm:$0xf]
    %v2546 = vld [vmem:[#allocation3 + $0x228] sm:$0xff]
    %v2547 = vld [vmem:[#allocation3 + $0x230] sm:$0xf]
    %v2548 = vld [vmem:[#allocation3 + $0x234] sm:$0xff]
    %v2549 = vld [vmem:[#allocation3 + $0x23c] sm:$0xf]
    %v2550 = vld [vmem:[#allocation3 + $0x240] sm:$0xff]
    %v2551 = vld [vmem:[#allocation3 + $0x248] sm:$0xf]
    %v2552 = vld [vmem:[#allocation3 + $0x24c] sm:$0xff]
    %v2553 = vld [vmem:[#allocation3 + $0x254] sm:$0xf]
    %v2554 = vld [vmem:[#allocation3 + $0x258] sm:$0xff]
    %v2555 = vld [vmem:[#allocation3 + $0x260] sm:$0xf]
    %v2558 = vunpack.c.l.s4 1966171168
    %v2559 = vunpack.c.0.s8 %v2558
    %v2560 = vlaneseq
    %v2561 = vshrl.u32 %v2560, 7
    %v2562 = vsub.s32 %v2559, %v2561
    %v2563 = vrot.slane %v2453, %v2562
    %v2564 = vcombine.high %v2563, %v2563
    %v2566 = vunpack.c.l.s4 1966171168
    %v2567 = vunpack.c.0.s8 %v2566
    %v2568 = vlaneseq
    %v2569 = vshrl.u32 %v2568, 7
    %v2570 = vsub.s32 %v2567, %v2569
    %v2571 = vrot.slane %v2563, %v2570
    %v2573 = vunpack.c.l.s4 1966171168
    %v2574 = vunpack.c.0.s8 %v2573
    %v2575 = vlaneseq
    %v2576 = vshrl.u32 %v2575, 7
    %v2577 = vsub.s32 %v2574, %v2576
    %v2578 = vrot.slane %v2564, %v2577
    %v2579 = vcombine.high %v2571, %v2571
    %v2580 = vcombine.high %v2578, %v2578
    %v2686 = vunpack.c.l.b16 %v2454
    %v2687 = vunpack.c.h.b16 %v2454
    %v2688 = vunpack.c.l.b16 %v2455
    %v2689 = vunpack.c.l.b16 %v2456
    %v2690 = vunpack.c.h.b16 %v2456
    %v2691 = vunpack.c.l.b16 %v2457
    %v2692 = vunpack.c.l.b16 %v2458
    %v2693 = vunpack.c.h.b16 %v2458
    %v2694 = vunpack.c.l.b16 %v2459
    %v2695 = vunpack.c.l.b16 %v2460
    %v2696 = vunpack.c.h.b16 %v2460
    %v2697 = vunpack.c.l.b16 %v2461
    %v2698 = vunpack.c.l.b16 %v2462
    %v2699 = vunpack.c.h.b16 %v2462
    %v2700 = vunpack.c.l.b16 %v2463
    %v2701 = vunpack.c.l.b16 %v2464
    %v2702 = vunpack.c.h.b16 %v2464
    %v2703 = vunpack.c.l.b16 %v2465
    %v2704 = vunpack.c.l.b16 %v2466
    %v2705 = vunpack.c.h.b16 %v2466
    %v2706 = vunpack.c.l.b16 %v2467
    %v2707 = vunpack.c.l.b16 %v2468
    %v2708 = vunpack.c.h.b16 %v2468
    %v2709 = vunpack.c.l.b16 %v2469
    %v2710 = vunpack.c.l.b16 %v2470
    %v2711 = vunpack.c.h.b16 %v2470
    %v2712 = vunpack.c.l.b16 %v2471
    %v2713 = vunpack.c.l.b16 %v2472
    %v2714 = vunpack.c.h.b16 %v2472
    %v2715 = vunpack.c.l.b16 %v2473
    %v2716 = vunpack.c.l.b16 %v2474
    %v2717 = vunpack.c.h.b16 %v2474
    %v2718 = vunpack.c.l.b16 %v2475
    %v2719 = vunpack.c.l.b16 %v2476
    %v2720 = vunpack.c.h.b16 %v2476
    %v2721 = vunpack.c.l.b16 %v2477
    %v2722 = vunpack.c.l.b16 %v2478
    %v2723 = vunpack.c.h.b16 %v2478
    %v2724 = vunpack.c.l.b16 %v2479
    %v2725 = vunpack.c.l.b16 %v2480
    %v2726 = vunpack.c.h.b16 %v2480
    %v2727 = vunpack.c.l.b16 %v2481
    %v2728 = vunpack.c.l.b16 %v2482
    %v2729 = vunpack.c.h.b16 %v2482
    %v2730 = vunpack.c.l.b16 %v2483
    %v2731 = vunpack.c.l.b16 %v2484
    %v2732 = vunpack.c.h.b16 %v2484
    %v2733 = vunpack.c.l.b16 %v2485
    %v2734 = vunpack.c.l.b16 %v2486
    %v2735 = vunpack.c.h.b16 %v2486
    %v2736 = vunpack.c.l.b16 %v2487
    %v2737 = vunpack.c.l.b16 %v2488
    %v2738 = vunpack.c.h.b16 %v2488
    %v2739 = vunpack.c.l.b16 %v2489
    %v2740 = vunpack.c.l.b16 %v2490
    %v2741 = vunpack.c.h.b16 %v2490
    %v2742 = vunpack.c.l.b16 %v2491
    %v2743 = vunpack.c.l.b16 %v2492
    %v2744 = vunpack.c.h.b16 %v2492
    %v2745 = vunpack.c.l.b16 %v2493
    %v2746 = vunpack.c.l.b16 %v2494
    %v2747 = vunpack.c.h.b16 %v2494
    %v2748 = vunpack.c.l.b16 %v2495
    %v2749 = vunpack.c.l.b16 %v2496
    %v2750 = vunpack.c.h.b16 %v2496
    %v2751 = vunpack.c.l.b16 %v2497
    %v2752 = vunpack.c.l.b16 %v2498
    %v2753 = vunpack.c.h.b16 %v2498
    %v2754 = vunpack.c.l.b16 %v2499
    %v2755 = vunpack.c.l.b16 %v2500
    %v2756 = vunpack.c.h.b16 %v2500
    %v2757 = vunpack.c.l.b16 %v2501
    %v2758 = vunpack.c.l.b16 %v2502
    %v2759 = vunpack.c.h.b16 %v2502
    %v2760 = vunpack.c.l.b16 %v2503
    %v2761 = vunpack.c.l.b16 %v2504
    %v2762 = vunpack.c.h.b16 %v2504
    %v2763 = vunpack.c.l.b16 %v2505
    %v2764 = vunpack.c.l.b16 %v2506
    %v2765 = vunpack.c.h.b16 %v2506
    %v2766 = vunpack.c.l.b16 %v2507
    %v2767 = vunpack.c.l.b16 %v2508
    %v2768 = vunpack.c.h.b16 %v2508
    %v2769 = vunpack.c.l.b16 %v2509
    %v2770 = vunpack.c.l.b16 %v2510
    %v2771 = vunpack.c.h.b16 %v2510
    %v2772 = vunpack.c.l.b16 %v2511
    %v2773 = vunpack.c.l.b16 %v2512
    %v2774 = vunpack.c.h.b16 %v2512
    %v2775 = vunpack.c.l.b16 %v2513
    %v2776 = vunpack.c.l.b16 %v2514
    %v2777 = vunpack.c.h.b16 %v2514
    %v2778 = vunpack.c.l.b16 %v2515
    %v2779 = vunpack.c.l.b16 %v2516
    %v2780 = vunpack.c.h.b16 %v2516
    %v2781 = vunpack.c.l.b16 %v2517
    %v2782 = vunpack.c.l.b16 %v2518
    %v2783 = vunpack.c.h.b16 %v2518
    %v2784 = vunpack.c.l.b16 %v2519
    %v2785 = vunpack.c.l.b16 %v2520
    %v2786 = vunpack.c.h.b16 %v2520
    %v2787 = vunpack.c.l.b16 %v2521
    %v2788 = vunpack.c.l.b16 %v2522
    %v2789 = vunpack.c.h.b16 %v2522
    %v2790 = vunpack.c.l.b16 %v2523
    %v2791 = vunpack.c.l.b16 %v2524
    %v2792 = vunpack.c.h.b16 %v2524
    %v2793 = vunpack.c.l.b16 %v2525
    %v2794 = vunpack.c.l.b16 %v2526
    %v2795 = vunpack.c.h.b16 %v2526
    %v2796 = vunpack.c.l.b16 %v2527
    %v2797 = vunpack.c.l.b16 %v2528
    %v2798 = vunpack.c.h.b16 %v2528
    %v2799 = vunpack.c.l.b16 %v2529
    %v2800 = vunpack.c.l.b16 %v2530
    %v2801 = vunpack.c.h.b16 %v2530
    %v2802 = vunpack.c.l.b16 %v2531
    %v2803 = vunpack.c.l.b16 %v2532
    %v2804 = vunpack.c.h.b16 %v2532
    %v2805 = vunpack.c.l.b16 %v2533
    %v2806 = vunpack.c.l.b16 %v2534
    %v2807 = vunpack.c.h.b16 %v2534
    %v2808 = vunpack.c.l.b16 %v2535
    %v2809 = vunpack.c.l.b16 %v2536
    %v2810 = vunpack.c.h.b16 %v2536
    %v2811 = vunpack.c.l.b16 %v2537
    %v2812 = vunpack.c.l.b16 %v2538
    %v2813 = vunpack.c.h.b16 %v2538
    %v2814 = vunpack.c.l.b16 %v2539
    %v2815 = vunpack.c.l.b16 %v2540
    %v2816 = vunpack.c.h.b16 %v2540
    %v2817 = vunpack.c.l.b16 %v2541
    %v2818 = vunpack.c.l.b16 %v2542
    %v2819 = vunpack.c.h.b16 %v2542
    %v2820 = vunpack.c.l.b16 %v2543
    %v2821 = vunpack.c.l.b16 %v2544
    %v2822 = vunpack.c.h.b16 %v2544
    %v2823 = vunpack.c.l.b16 %v2545
    %v2824 = vunpack.c.l.b16 %v2546
    %v2825 = vunpack.c.h.b16 %v2546
    %v2826 = vunpack.c.l.b16 %v2547
    %v2827 = vunpack.c.l.b16 %v2548
    %v2828 = vunpack.c.h.b16 %v2548
    %v2829 = vunpack.c.l.b16 %v2549
    %v2830 = vunpack.c.l.b16 %v2550
    %v2831 = vunpack.c.h.b16 %v2550
    %v2832 = vunpack.c.l.b16 %v2551
    %v2833 = vunpack.c.l.b16 %v2552
    %v2834 = vunpack.c.h.b16 %v2552
    %v2835 = vunpack.c.l.b16 %v2553
    %v2836 = vunpack.c.l.b16 %v2554
    %v2837 = vunpack.c.h.b16 %v2554
    %v2838 = vunpack.c.l.b16 %v2555
    %v2839 = vpack.c.b16 %v2689, %v2686
    %v2840 = vpack.c.b16 %v2690, %v2687
    %v2841 = vpack.c.b16 %v2691, %v2688
    %v2842 = vpack.c.b16 %v2695, %v2692
    %v2843 = vpack.c.b16 %v2696, %v2693
    %v2844 = vpack.c.b16 %v2697, %v2694
    %v2845 = vpack.c.b16 %v2701, %v2698
    %v2846 = vpack.c.b16 %v2702, %v2699
    %v2847 = vpack.c.b16 %v2703, %v2700
    %v2848 = vpack.c.b16 %v2707, %v2704
    %v2849 = vpack.c.b16 %v2708, %v2705
    %v2850 = vpack.c.b16 %v2709, %v2706
    %v2851 = vpack.c.b16 %v2713, %v2710
    %v2852 = vpack.c.b16 %v2714, %v2711
    %v2853 = vpack.c.b16 %v2715, %v2712
    %v2854 = vpack.c.b16 %v2719, %v2716
    %v2855 = vpack.c.b16 %v2720, %v2717
    %v2856 = vpack.c.b16 %v2721, %v2718
    %v2857 = vpack.c.b16 %v2725, %v2722
    %v2858 = vpack.c.b16 %v2726, %v2723
    %v2859 = vpack.c.b16 %v2727, %v2724
    %v2860 = vpack.c.b16 %v2731, %v2728
    %v2861 = vpack.c.b16 %v2732, %v2729
    %v2862 = vpack.c.b16 %v2733, %v2730
    %v2863 = vpack.c.b16 %v2737, %v2734
    %v2864 = vpack.c.b16 %v2738, %v2735
    %v2865 = vpack.c.b16 %v2739, %v2736
    %v2866 = vpack.c.b16 %v2743, %v2740
    %v2867 = vpack.c.b16 %v2744, %v2741
    %v2868 = vpack.c.b16 %v2745, %v2742
    %v2869 = vpack.c.b16 %v2749, %v2746
    %v2870 = vpack.c.b16 %v2750, %v2747
    %v2871 = vpack.c.b16 %v2751, %v2748
    %v2872 = vpack.c.b16 %v2755, %v2752
    %v2873 = vpack.c.b16 %v2756, %v2753
    %v2874 = vpack.c.b16 %v2757, %v2754
    %v2875 = vpack.c.b16 %v2761, %v2758
    %v2876 = vpack.c.b16 %v2762, %v2759
    %v2877 = vpack.c.b16 %v2763, %v2760
    %v2878 = vpack.c.b16 %v2767, %v2764
    %v2879 = vpack.c.b16 %v2768, %v2765
    %v2880 = vpack.c.b16 %v2769, %v2766
    %v2881 = vpack.c.b16 %v2773, %v2770
    %v2882 = vpack.c.b16 %v2774, %v2771
    %v2883 = vpack.c.b16 %v2775, %v2772
    %v2884 = vpack.c.b16 %v2779, %v2776
    %v2885 = vpack.c.b16 %v2780, %v2777
    %v2886 = vpack.c.b16 %v2781, %v2778
    %v2887 = vpack.c.b16 %v2785, %v2782
    %v2888 = vpack.c.b16 %v2786, %v2783
    %v2889 = vpack.c.b16 %v2787, %v2784
    %v2890 = vpack.c.b16 %v2791, %v2788
    %v2891 = vpack.c.b16 %v2792, %v2789
    %v2892 = vpack.c.b16 %v2793, %v2790
    %v2893 = vpack.c.b16 %v2797, %v2794
    %v2894 = vpack.c.b16 %v2798, %v2795
    %v2895 = vpack.c.b16 %v2799, %v2796
    %v2896 = vpack.c.b16 %v2803, %v2800
    %v2897 = vpack.c.b16 %v2804, %v2801
    %v2898 = vpack.c.b16 %v2805, %v2802
    %v2899 = vpack.c.b16 %v2809, %v2806
    %v2900 = vpack.c.b16 %v2810, %v2807
    %v2901 = vpack.c.b16 %v2811, %v2808
    %v2902 = vpack.c.b16 %v2815, %v2812
    %v2903 = vpack.c.b16 %v2816, %v2813
    %v2904 = vpack.c.b16 %v2817, %v2814
    %v2905 = vpack.c.b16 %v2821, %v2818
    %v2906 = vpack.c.b16 %v2822, %v2819
    %v2907 = vpack.c.b16 %v2823, %v2820
    %v2908 = vpack.c.b16 %v2827, %v2824
    %v2909 = vpack.c.b16 %v2828, %v2825
    %v2910 = vpack.c.b16 %v2829, %v2826
    %v2911 = vpack.c.b16 %v2833, %v2830
    %v2912 = vpack.c.b16 %v2834, %v2831
    %v2913 = vpack.c.b16 %v2835, %v2832
    %v2914 = vpack.c.b16 %v2836, %v2836
    %v2915 = vpack.c.b16 %v2837, %v2837
    %v2916 = vpack.c.b16 %v2838, %v2838
    %vm2992 = vcmask 195584
    %v2994 = vsel %vm2992, %v2580, 0
    %vm2996 = vcmask 1043456
    %v2998 = vsel %vm2996, %v2914, 0
    %v3001 = vsel %vm2996, %v2915, 0
    %v3004 = vsel %vm2996, %v2916, 0
    %3006 = vmatprep.subr.bf16.mxu0 %v2840
    %3007 = vmatpush1.bf16.msra.mxu0 %v2839
    %3008 = vmatprep.subr.bf16.mxu0 %v2843
    %3009 = vmatpush1.bf16.msra.mxu0 %v2842
    %3010 = vmatprep.subr.bf16.mxu0 %v2846
    %3011 = vmatpush1.bf16.msra.mxu0 %v2845
    %3012 = vmatprep.subr.bf16.mxu0 %v2849
    %3013 = vmatpush1.bf16.msra.mxu0 %v2848
    %3014 = vmatprep.subr.bf16.mxu0 %v2852
    %3015 = vmatpush1.bf16.msra.mxu0 %v2851
    %3016 = vmatprep.subr.bf16.mxu0 %v2855
    %3017 = vmatpush1.bf16.msra.mxu0 %v2854
    %3018 = vmatprep.subr.bf16.mxu0 %v2858
    %3019 = vmatpush1.bf16.msra.mxu0 %v2857
    %3020 = vmatprep.subr.bf16.mxu0 %v2861
    %3021 = vmatpush1.bf16.msra.mxu0 %v2860
    %3022 = vmatprep.subr.bf16.mxu0 %v2864
    %3023 = vmatpush1.bf16.msra.mxu0 %v2863
    %3024 = vmatprep.subr.bf16.mxu0 %v2867
    %3025 = vmatpush1.bf16.msra.mxu0 %v2866
    %3026 = vmatprep.subr.bf16.mxu0 %v2870
    %3027 = vmatpush1.bf16.msra.mxu0 %v2869
    %3028 = vmatprep.subr.bf16.mxu0 %v2873
    %3029 = vmatpush1.bf16.msra.mxu0 %v2872
    %3030 = vmatprep.subr.bf16.mxu0 %v2876
    %3031 = vmatpush1.bf16.msra.mxu0 %v2875
    %3032 = vmatprep.subr.bf16.mxu0 %v2879
    %3033 = vmatpush1.bf16.msra.mxu0 %v2878
    %3034 = vmatprep.subr.bf16.mxu0 %v2882
    %3035 = vmatpush1.bf16.msra.mxu0 %v2881
    %3036 = vmatprep.subr.bf16.mxu0 %v2885
    %3037 = vmatpush1.bf16.msra.mxu0 %v2884
    %3038 = vmatprep.mubr.bf16.mxu0 %v2578
    %3039 = vmatmul.mubr.bf16.gmra.mrb[0].mxu0 %v2571
    %v3040 = vpop.f32.mrb[0].mxu0
    %v3041 = vadd.f32 0.0, %v3040
    %v3042 = vpop.f32.mrb[0].mxu0
    %v3043 = vadd.f32 0.0, %v3042
    %v3044 = vpop.f32.mrb[0].mxu0
    %v3045 = vpop.f32.mrb[0].mxu0
    %3046 = vdwg.mxu0
    %3047 = vmatprep.subr.bf16.mxu0 %v2888
    %3048 = vmatpush1.bf16.msra.mxu0 %v2887
    %3049 = vmatprep.subr.bf16.mxu0 %v2891
    %3050 = vmatpush1.bf16.msra.mxu0 %v2890
    %3051 = vmatprep.subr.bf16.mxu0 %v2894
    %3052 = vmatpush1.bf16.msra.mxu0 %v2893
    %3053 = vmatprep.subr.bf16.mxu0 %v2897
    %3054 = vmatpush1.bf16.msra.mxu0 %v2896
    %3055 = vmatprep.subr.bf16.mxu0 %v2900
    %3056 = vmatpush1.bf16.msra.mxu0 %v2899
    %3057 = vmatprep.subr.bf16.mxu0 %v2903
    %3058 = vmatpush1.bf16.msra.mxu0 %v2902
    %3059 = vmatprep.subr.bf16.mxu0 %v2906
    %3060 = vmatpush1.bf16.msra.mxu0 %v2905
    %3061 = vmatprep.subr.bf16.mxu0 %v2909
    %3062 = vmatpush1.bf16.msra.mxu0 %v2908
    %3063 = vmatprep.subr.bf16.mxu0 %v2912
    %3064 = vmatpush1.bf16.msra.mxu0 %v2911
    %3065 = vmatprep.subr.bf16.mxu0 %v3001
    %3066 = vmatpush1.bf16.msra.mxu0 %v2998
    %3067 = vmatprep.subr.bf16.mxu0 0
    %3068 = vmatpush1.bf16.msra.mxu0 0
    %3069 = vmatprep.subr.bf16.mxu0 0
    %3070 = vmatpush1.bf16.msra.mxu0 0
    %3071 = vmatprep.subr.bf16.mxu0 0
    %3072 = vmatpush1.bf16.msra.mxu0 0
    %3073 = vmatprep.subr.bf16.mxu0 0
    %3074 = vmatpush1.bf16.msra.mxu0 0
    %3075 = vmatprep.subr.bf16.mxu0 0
    %3076 = vmatpush1.bf16.msra.mxu0 0
    %3077 = vmatprep.subr.bf16.mxu0 0
    %3078 = vmatpush1.bf16.msra.mxu0 0
    %3079 = vmatprep.mubr.bf16.mxu0 %v2994
    %3080 = vmatmul.mubr.bf16.gmra.mrb[0].mxu0 %v2579
    %v3081 = vpop.f32.mrb[0].mxu0
    %v3082 = vadd.f32 %v3041, %v3081
    %v3083 = vpop.f32.mrb[0].mxu0
    %v3084 = vadd.f32 %v3043, %v3083
    %v3085 = vpop.f32.mrb[0].mxu0
    %v3086 = vpop.f32.mrb[0].mxu0
    %3087 = vdwg.mxu0
    %3088 = vmatprep.subr.bf16.mxu0 0
    %3089 = vmatpush1.bf16.msra.mxu0 %v2841
    %3090 = vmatprep.subr.bf16.mxu0 0
    %3091 = vmatpush1.bf16.msra.mxu0 %v2844
    %3092 = vmatprep.subr.bf16.mxu0 0
    %3093 = vmatpush1.bf16.msra.mxu0 %v2847
    %3094 = vmatprep.subr.bf16.mxu0 0
    %3095 = vmatpush1.bf16.msra.mxu0 %v2850
    %3096 = vmatprep.subr.bf16.mxu0 0
    %3097 = vmatpush1.bf16.msra.mxu0 %v2853
    %3098 = vmatprep.subr.bf16.mxu0 0
    %3099 = vmatpush1.bf16.msra.mxu0 %v2856
    %3100 = vmatprep.subr.bf16.mxu0 0
    %3101 = vmatpush1.bf16.msra.mxu0 %v2859
    %3102 = vmatprep.subr.bf16.mxu0 0
    %3103 = vmatpush1.bf16.msra.mxu0 %v2862
    %3104 = vmatprep.subr.bf16.mxu0 0
    %3105 = vmatpush1.bf16.msra.mxu0 %v2865
    %3106 = vmatprep.subr.bf16.mxu0 0
    %3107 = vmatpush1.bf16.msra.mxu0 %v2868
    %3108 = vmatprep.subr.bf16.mxu0 0
    %3109 = vmatpush1.bf16.msra.mxu0 %v2871
    %3110 = vmatprep.subr.bf16.mxu0 0
    %3111 = vmatpush1.bf16.msra.mxu0 %v2874
    %3112 = vmatprep.subr.bf16.mxu0 0
    %3113 = vmatpush1.bf16.msra.mxu0 %v2877
    %3114 = vmatprep.subr.bf16.mxu0 0
    %3115 = vmatpush1.bf16.msra.mxu0 %v2880
    %3116 = vmatprep.subr.bf16.mxu0 0
    %3117 = vmatpush1.bf16.msra.mxu0 %v2883
    %3118 = vmatprep.subr.bf16.mxu0 0
    %3119 = vmatpush1.bf16.msra.mxu0 %v2886
    %3120 = vmatprep.mubr.bf16.mxu0 %v2578
    %3121 = vmatmul.mubr.bf16.gmra.mrb[0].mxu0 %v2571
    %v3122 = vpop.f32.mrb[0].mxu0
    %v3123 = vadd.f32 0.0, %v3122
    %v3124 = vpop.f32.mrb[0].mxu0
    %v3125 = vpop.f32.mrb[0].mxu0
    %v3126 = vpop.f32.mrb[0].mxu0
    %3127 = vdwg.mxu0
    %3128 = vmatprep.subr.bf16.mxu0 0
    %3129 = vmatpush1.bf16.msra.mxu0 %v2889
    %3130 = vmatprep.subr.bf16.mxu0 0
    %3131 = vmatpush1.bf16.msra.mxu0 %v2892
    %3132 = vmatprep.subr.bf16.mxu0 0
    %3133 = vmatpush1.bf16.msra.mxu0 %v2895
    %3134 = vmatprep.subr.bf16.mxu0 0
    %3135 = vmatpush1.bf16.msra.mxu0 %v2898
    %3136 = vmatprep.subr.bf16.mxu0 0
    %3137 = vmatpush1.bf16.msra.mxu0 %v2901
    %3138 = vmatprep.subr.bf16.mxu0 0
    %3139 = vmatpush1.bf16.msra.mxu0 %v2904
    %3140 = vmatprep.subr.bf16.mxu0 0
    %3141 = vmatpush1.bf16.msra.mxu0 %v2907
    %3142 = vmatprep.subr.bf16.mxu0 0
    %3143 = vmatpush1.bf16.msra.mxu0 %v2910
    %3144 = vmatprep.subr.bf16.mxu0 0
    %3145 = vmatpush1.bf16.msra.mxu0 %v2913
    %3146 = vmatprep.subr.bf16.mxu0 0
    %3147 = vmatpush1.bf16.msra.mxu0 %v3004
    %3148 = vmatprep.subr.bf16.mxu0 0
    %3149 = vmatpush1.bf16.msra.mxu0 0
    %3150 = vmatprep.subr.bf16.mxu0 0
    %3151 = vmatpush1.bf16.msra.mxu0 0
    %3152 = vmatprep.subr.bf16.mxu0 0
    %3153 = vmatpush1.bf16.msra.mxu0 0
    %3154 = vmatprep.subr.bf16.mxu0 0
    %3155 = vmatpush1.bf16.msra.mxu0 0
    %3156 = vmatprep.subr.bf16.mxu0 0
    %3157 = vmatpush1.bf16.msra.mxu0 0
    %3158 = vmatprep.subr.bf16.mxu0 0
    %3159 = vmatpush1.bf16.msra.mxu0 0
    %3160 = vmatprep.mubr.bf16.mxu0 %v2994
    %3161 = vmatmul.mubr.bf16.gmra.mrb[0].mxu0 %v2579
    %v3162 = vpop.f32.mrb[0].mxu0
    %v3163 = vadd.f32 %v3123, %v3162
    %v3164 = vpop.f32.mrb[0].mxu0
    %v3165 = vpop.f32.mrb[0].mxu0
    %v3166 = vpop.f32.mrb[0].mxu0
    %3167 = vdwg.mxu0
    %v3169 = vrot.slane %v2428, 3
    %3171 = vmatprep.subr.bf16.mxu0 %v2430
    %3172 = vmatpush1.bf16.msra.mxu0 %v2429
    %3173 = vmatprep.subr.bf16.mxu0 %v2433
    %3174 = vmatpush1.bf16.msra.mxu0 %v2432
    %3175 = vmatprep.subr.bf16.mxu0 %v2436
    %3176 = vmatpush1.bf16.msra.mxu0 %v2435
    %3177 = vmatprep.subr.bf16.mxu0 %v2439
    %3178 = vmatpush1.bf16.msra.mxu0 %v2438
    %3179 = vmatprep.subr.bf16.mxu0 %v2442
    %3180 = vmatpush1.bf16.msra.mxu0 %v2441
    %3181 = vmatprep.subr.bf16.mxu0 %v2445
    %3182 = vmatpush1.bf16.msra.mxu0 %v2444
    %3183 = vmatprep.subr.bf16.mxu0 %v2448
    %3184 = vmatpush1.bf16.msra.mxu0 %v2447
    %3185 = vmatprep.subr.bf16.mxu0 %v2451
    %3186 = vmatpush1.bf16.msra.mxu0 %v2450
    %3187 = vmatprep.subr.bf16.mxu0 0
    %3188 = vmatpush1.bf16.msra.mxu0 0
    %3189 = vmatprep.subr.bf16.mxu0 0
    %3190 = vmatpush1.bf16.msra.mxu0 0
    %3191 = vmatprep.subr.bf16.mxu0 0
    %3192 = vmatpush1.bf16.msra.mxu0 0
    %3193 = vmatprep.subr.bf16.mxu0 0
    %3194 = vmatpush1.bf16.msra.mxu0 0
    %3195 = vmatprep.subr.bf16.mxu0 0
    %3196 = vmatpush1.bf16.msra.mxu0 0
    %3197 = vmatprep.subr.bf16.mxu0 0
    %3198 = vmatpush1.bf16.msra.mxu0 0
    %3199 = vmatprep.subr.bf16.mxu0 0
    %3200 = vmatpush1.bf16.msra.mxu0 0
    %3201 = vmatprep.subr.bf16.mxu0 0
    %3202 = vmatpush1.bf16.msra.mxu0 0
    %3203 = vmatprep.mubr.bf16.mxu0 0
    %3204 = vmatmul.mubr.bf16.gmra.mrb[0].mxu0 %v3169
    %v3205 = vpop.f32.mrb[0].mxu0
    %v3206 = vadd.f32 %v3082, %v3205
    %v3207 = vpop.f32.mrb[0].mxu0
    %v3208 = vadd.f32 %v3084, %v3207
    %v3209 = vpop.f32.mrb[0].mxu0
    %v3210 = vpop.f32.mrb[0].mxu0
    %3211 = vdwg.mxu0
    %3212 = vmatprep.subr.bf16.mxu0 0
    %3213 = vmatpush1.bf16.msra.mxu0 %v2431
    %3214 = vmatprep.subr.bf16.mxu0 0
    %3215 = vmatpush1.bf16.msra.mxu0 %v2434
    %3216 = vmatprep.subr.bf16.mxu0 0
    %3217 = vmatpush1.bf16.msra.mxu0 %v2437
    %3218 = vmatprep.subr.bf16.mxu0 0
    %3219 = vmatpush1.bf16.msra.mxu0 %v2440
    %3220 = vmatprep.subr.bf16.mxu0 0
    %3221 = vmatpush1.bf16.msra.mxu0 %v2443
    %3222 = vmatprep.subr.bf16.mxu0 0
    %3223 = vmatpush1.bf16.msra.mxu0 %v2446
    %3224 = vmatprep.subr.bf16.mxu0 0
    %3225 = vmatpush1.bf16.msra.mxu0 %v2449
    %3226 = vmatprep.subr.bf16.mxu0 0
    %3227 = vmatpush1.bf16.msra.mxu0 %v2452
    %3228 = vmatprep.subr.bf16.mxu0 0
    %3229 = vmatpush1.bf16.msra.mxu0 0
    %3230 = vmatprep.subr.bf16.mxu0 0
    %3231 = vmatpush1.bf16.msra.mxu0 0
    %3232 = vmatprep.subr.bf16.mxu0 0
    %3233 = vmatpush1.bf16.msra.mxu0 0
    %3234 = vmatprep.subr.bf16.mxu0 0
    %3235 = vmatpush1.bf16.msra.mxu0 0
    %3236 = vmatprep.subr.bf16.mxu0 0
    %3237 = vmatpush1.bf16.msra.mxu0 0
    %3238 = vmatprep.subr.bf16.mxu0 0
    %3239 = vmatpush1.bf16.msra.mxu0 0
    %3240 = vmatprep.subr.bf16.mxu0 0
    %3241 = vmatpush1.bf16.msra.mxu0 0
    %3242 = vmatprep.subr.bf16.mxu0 0
    %3243 = vmatpush1.bf16.msra.mxu0 0
    %3244 = vmatprep.mubr.bf16.mxu0 0
    %3245 = vmatmul.mubr.bf16.gmra.mrb[0].mxu0 %v3169
    %v3246 = vpop.f32.mrb[0].mxu0
    %v3247 = vadd.f32 %v3163, %v3246
    %v3248 = vpop.f32.mrb[0].mxu0
    %v3249 = vpop.f32.mrb[0].mxu0
    %v3250 = vpop.f32.mrb[0].mxu0
    %3251 = vdwg.mxu0
    %v3252 = vld [vmem:[%s6] sm:$0x7]
    %v3254 = vlaneseq
    %v3255 = vshrl.u32 %v3254, 7
    %v3256 = vsub.s32 0, %v3255
    %v3257 = vrot.slane %v3252, %v3256
    %v3258 = vlaneseq
    %v3259 = vshrl.u32 %v3258, 7
    %v3260 = vsub.s32 1, %v3259
    %v3261 = vrot.slane %v3252, %v3260
    %v3262 = vlaneseq
    %v3263 = vshrl.u32 %v3262, 7
    %v3264 = vsub.s32 2, %v3263
    %v3265 = vrot.slane %v3252, %v3264
    %v3269 = vadd.f32 %v3206, %v3257
    %v3270 = vadd.f32 %v3208, %v3261
    %v3271 = vadd.f32 %v3247, %v3265
    %v3272 = vpack.c.bf16 %v3269, %v3269
    %v3273 = vpack.c.bf16 %v3270, %v3270
    %v3274 = vpack.c.bf16 %v3271, %v3271
    %v3275 = vld [vmem:[%s7] sm:$0xf]
    %v3276 = vld [vmem:[%s7 + $0x4] sm:$0xf]
    %v3277 = vld [vmem:[%s7 + $0x8] sm:$0xf]
    %v3278 = vld [vmem:[%s7 + $0xc] sm:$0xf]
    %v3279 = vld [vmem:[%s7 + $0x10] sm:$0xf]
    %v3280 = vld [vmem:[%s7 + $0x14] sm:$0xf]
    %v3281 = vld [vmem:[%s7 + $0x18] sm:$0xf]
    %v3282 = vld [vmem:[%s7 + $0x1c] sm:$0xf]
    %v3283 = vld [vmem:[%s7 + $0x20] sm:$0xf]
    %v3284 = vld [vmem:[%s7 + $0x24] sm:$0xf]
    %v3285 = vld [vmem:[%s7 + $0x28] sm:$0xf]
    %v3286 = vld [vmem:[%s7 + $0x2c] sm:$0xf]
    %v3287 = vld [vmem:[%s7 + $0x30] sm:$0xf]
    %v3288 = vld [vmem:[%s7 + $0x34] sm:$0xf]
    %v3289 = vld [vmem:[%s7 + $0x38] sm:$0xf]
    %v3290 = vld [vmem:[%s7 + $0x3c] sm:$0xf]
    %v3291 = vld [vmem:[%s7 + $0x40] sm:$0xf]
    %v3292 = vld [vmem:[%s7 + $0x44] sm:$0xf]
    %v3293 = vld [vmem:[%s7 + $0x48] sm:$0xf]
    %v3294 = vld [vmem:[%s7 + $0x4c] sm:$0xf]
    %v3295 = vld [vmem:[%s7 + $0x50] sm:$0xf]
    %v3296 = vld [vmem:[%s7 + $0x54] sm:$0xf]
    %v3297 = vld [vmem:[%s7 + $0x58] sm:$0xf]
    %v3298 = vld [vmem:[%s7 + $0x5c] sm:$0xf]
    %v3299 = vld [vmem:[%s7 + $0x60] sm:$0xf]
    %v3300 = vld [vmem:[%s7 + $0x64] sm:$0xf]
    %v3301 = vld [vmem:[%s7 + $0x68] sm:$0xf]
    %v3302 = vld [vmem:[%s7 + $0x6c] sm:$0xf]
    %v3303 = vld [vmem:[%s7 + $0x70] sm:$0xf]
    %v3304 = vld [vmem:[%s7 + $0x74] sm:$0xf]
    %v3305 = vld [vmem:[%s7 + $0x78] sm:$0xf]
    %v3306 = vld [vmem:[%s7 + $0x7c] sm:$0xf]
    %v3307 = vld [vmem:[%s7 + $0x80] sm:$0xf]
    %v3308 = vld [vmem:[%s7 + $0x84] sm:$0x3]
    %v3309 = vld [vmem:[%s8] sm:$0x1]
    %v3311 = vlaneseq
    %v3312 = vshrl.u32 %v3311, 7
    %v3313 = vsub.s32 0, %v3312
    %v3314 = vrot.slane %v3309, %v3313
    %v3350 = vunpack.c.l.b16 %v3275
    %v3351 = vunpack.c.l.b16 %v3276
    %v3352 = vunpack.c.l.b16 %v3277
    %v3353 = vunpack.c.l.b16 %v3278
    %v3354 = vunpack.c.l.b16 %v3279
    %v3355 = vunpack.c.l.b16 %v3280
    %v3356 = vunpack.c.l.b16 %v3281
    %v3357 = vunpack.c.l.b16 %v3282
    %v3358 = vunpack.c.l.b16 %v3283
    %v3359 = vunpack.c.l.b16 %v3284
    %v3360 = vunpack.c.l.b16 %v3285
    %v3361 = vunpack.c.l.b16 %v3286
    %v3362 = vunpack.c.l.b16 %v3287
    %v3363 = vunpack.c.l.b16 %v3288
    %v3364 = vunpack.c.l.b16 %v3289
    %v3365 = vunpack.c.l.b16 %v3290
    %v3366 = vunpack.c.l.b16 %v3291
    %v3367 = vunpack.c.l.b16 %v3292
    %v3368 = vunpack.c.l.b16 %v3293
    %v3369 = vunpack.c.l.b16 %v3294
    %v3370 = vunpack.c.l.b16 %v3295
    %v3371 = vunpack.c.l.b16 %v3296
    %v3372 = vunpack.c.l.b16 %v3297
    %v3373 = vunpack.c.l.b16 %v3298
    %v3374 = vunpack.c.l.b16 %v3299
    %v3375 = vunpack.c.l.b16 %v3300
    %v3376 = vunpack.c.l.b16 %v3301
    %v3377 = vunpack.c.l.b16 %v3302
    %v3378 = vunpack.c.l.b16 %v3303
    %v3379 = vunpack.c.l.b16 %v3304
    %v3380 = vunpack.c.l.b16 %v3305
    %v3381 = vunpack.c.l.b16 %v3306
    %v3382 = vunpack.c.l.b16 %v3307
    %v3383 = vunpack.c.l.b16 %v3308
    %v3384 = vpack.c.b16 %v3351, %v3350
    %v3385 = vpack.c.b16 %v3353, %v3352
    %v3386 = vpack.c.b16 %v3355, %v3354
    %v3387 = vpack.c.b16 %v3357, %v3356
    %v3388 = vpack.c.b16 %v3359, %v3358
    %v3389 = vpack.c.b16 %v3361, %v3360
    %v3390 = vpack.c.b16 %v3363, %v3362
    %v3391 = vpack.c.b16 %v3365, %v3364
    %v3392 = vpack.c.b16 %v3367, %v3366
    %v3393 = vpack.c.b16 %v3369, %v3368
    %v3394 = vpack.c.b16 %v3371, %v3370
    %v3395 = vpack.c.b16 %v3373, %v3372
    %v3396 = vpack.c.b16 %v3375, %v3374
    %v3397 = vpack.c.b16 %v3377, %v3376
    %v3398 = vpack.c.b16 %v3379, %v3378
    %v3399 = vpack.c.b16 %v3381, %v3380
    %v3400 = vpack.c.b16 %v3383, %v3382
    %vm3417 = vcmask 97280
    %v3419 = vsel %vm3417, %v3274, 0
    %vm3421 = vcmask 1045504
    %v3423 = vsel %vm3421, %v3400, 0
    %3425 = vmatprep.subr.bf16.mxu0 0
    %3426 = vmatpush1.bf16.msra.mxu0 %v3384
    %3427 = vmatprep.subr.bf16.mxu0 0
    %3428 = vmatpush1.bf16.msra.mxu0 %v3385
    %3429 = vmatprep.subr.bf16.mxu0 0
    %3430 = vmatpush1.bf16.msra.mxu0 %v3386
    %3431 = vmatprep.subr.bf16.mxu0 0
    %3432 = vmatpush1.bf16.msra.mxu0 %v3387
    %3433 = vmatprep.subr.bf16.mxu0 0
    %3434 = vmatpush1.bf16.msra.mxu0 %v3388
    %3435 = vmatprep.subr.bf16.mxu0 0
    %3436 = vmatpush1.bf16.msra.mxu0 %v3389
    %3437 = vmatprep.subr.bf16.mxu0 0
    %3438 = vmatpush1.bf16.msra.mxu0 %v3390
    %3439 = vmatprep.subr.bf16.mxu0 0
    %3440 = vmatpush1.bf16.msra.mxu0 %v3391
    %3441 = vmatprep.subr.bf16.mxu0 0
    %3442 = vmatpush1.bf16.msra.mxu0 %v3392
    %3443 = vmatprep.subr.bf16.mxu0 0
    %3444 = vmatpush1.bf16.msra.mxu0 %v3393
    %3445 = vmatprep.subr.bf16.mxu0 0
    %3446 = vmatpush1.bf16.msra.mxu0 %v3394
    %3447 = vmatprep.subr.bf16.mxu0 0
    %3448 = vmatpush1.bf16.msra.mxu0 %v3395
    %3449 = vmatprep.subr.bf16.mxu0 0
    %3450 = vmatpush1.bf16.msra.mxu0 %v3396
    %3451 = vmatprep.subr.bf16.mxu0 0
    %3452 = vmatpush1.bf16.msra.mxu0 %v3397
    %3453 = vmatprep.subr.bf16.mxu0 0
    %3454 = vmatpush1.bf16.msra.mxu0 %v3398
    %3455 = vmatprep.subr.bf16.mxu0 0
    %3456 = vmatpush1.bf16.msra.mxu0 %v3399
    %3457 = vmatprep.mubr.bf16.mxu0 %v3273
    %3458 = vmatmul.mubr.bf16.gmra.mrb[0].mxu0 %v3272
    %v3459 = vpop.f32.mrb[0].mxu0
    %v3460 = vadd.f32 %v3314, %v3459
    %v3461 = vpop.f32.mrb[0].mxu0
    %v3462 = vpop.f32.mrb[0].mxu0
    %v3463 = vpop.f32.mrb[0].mxu0
    %3464 = vdwg.mxu0
    %3465 = vmatprep.subr.bf16.mxu0 0
    %3466 = vmatpush1.bf16.msra.mxu0 %v3423
    %3467 = vmatprep.subr.bf16.mxu0 0
    %3468 = vmatpush1.bf16.msra.mxu0 0
    %3469 = vmatprep.subr.bf16.mxu0 0
    %3470 = vmatpush1.bf16.msra.mxu0 0
    %3471 = vmatprep.subr.bf16.mxu0 0
    %3472 = vmatpush1.bf16.msra.mxu0 0
    %3473 = vmatprep.subr.bf16.mxu0 0
    %3474 = vmatpush1.bf16.msra.mxu0 0
    %3475 = vmatprep.subr.bf16.mxu0 0
    %3476 = vmatpush1.bf16.msra.mxu0 0
    %3477 = vmatprep.subr.bf16.mxu0 0
    %3478 = vmatpush1.bf16.msra.mxu0 0
    %3479 = vmatprep.subr.bf16.mxu0 0
    %3480 = vmatpush1.bf16.msra.mxu0 0
    %3481 = vmatprep.subr.bf16.mxu0 0
    %3482 = vmatpush1.bf16.msra.mxu0 0
    %3483 = vmatprep.subr.bf16.mxu0 0
    %3484 = vmatpush1.bf16.msra.mxu0 0
    %3485 = vmatprep.subr.bf16.mxu0 0
    %3486 = vmatpush1.bf16.msra.mxu0 0
    %3487 = vmatprep.subr.bf16.mxu0 0
    %3488 = vmatpush1.bf16.msra.mxu0 0
    %3489 = vmatprep.subr.bf16.mxu0 0
    %3490 = vmatpush1.bf16.msra.mxu0 0
    %3491 = vmatprep.subr.bf16.mxu0 0
    %3492 = vmatpush1.bf16.msra.mxu0 0
    %3493 = vmatprep.subr.bf16.mxu0 0
    %3494 = vmatpush1.bf16.msra.mxu0 0
    %3495 = vmatprep.subr.bf16.mxu0 0
    %3496 = vmatpush1.bf16.msra.mxu0 0
    %3497 = vmatprep.mubr.bf16.mxu0 0
    %3498 = vmatmul.mubr.bf16.gmra.mrb[0].mxu0 %v3419
    %v3499 = vpop.f32.mrb[0].mxu0
    %v3500 = vadd.f32 %v3460, %v3499
    %v3501 = vpop.f32.mrb[0].mxu0
    %v3502 = vpop.f32.mrb[0].mxu0
    %v3503 = vpop.f32.mrb[0].mxu0
    %3504 = vdwg.mxu0
    %vm3505 = vcmask 99328
    %v3506 = vsel %vm3505, %v3500, -inf
    %3507 = vmax.xlane.f32.xlu0 %v3506
    %v3508 = vpop.xlane.xlu0 %3507
    %v3509 = vsub.f32 %v3500, %v3508
    %v3510 = vmul.f32 %v3509, 1.442695
    %v3511 = vpow.pop %v3510
    %v3512 = vsel %vm3505, %v3511, 0.0
    %3513 = vadd.xlane.f32.xlu0 %v3512
    %v3514 = vpop.xlane.xlu0 %3513
    %v3515 = vrcp.pop %v3514
    %v3516 = vmul.f32 %v3511, %v3515
    %3517 = vst.msk [vmem:[#allocation5] sm:$0x3] %vm3505, %v3516
    // Predicated region
    $region112: #{tpu_custom_call.1} parent=1 // pred_check
      _
    $region113: #{tpu_custom_call.1} parent=1 // pred_check_branch
      %3519 = sbr.rel (0) target = $region115
    $region114: #{tpu_custom_call.1} parent=1 // pred_region
      %s3521 = ssub.s32 32, 32
      %3522 = vsyncadd [#allocation6], %s3521
      %s3524 = sshll.u32 [#allocation5], 4
      %s3525 = int_to_ptr.vmem [resolvable:$true] %s3524
      %3527 = dma.vmem_to_hbm [thread:$0]  %s3525, 32, %s11, [#allocation6]
    $region115: #{tpu_custom_call.1} parent=1 // pred_fallthru
      _
    // Predicated region
    $region116: #{tpu_custom_call.1} parent=1 // pred_check
      _
    $region117: #{tpu_custom_call.1} parent=1 // pred_check_branch
      %3529 = sbr.rel (0) target = $region119
    $region118: #{tpu_custom_call.1} parent=1 // pred_region
      %3530 = dma.done [#allocation6], 32
    $region119: #{tpu_custom_call.1} parent=1 // pred_fallthru
      _
    %3531 = vsyncpa [#allocation6], 1
  %3532 = vsyncmov [#allocation4]
  %s3533 = vpop.sfrf %3532
  %p3534 = scmp.eq.s32.totalorder %s3533, 0
  %p3535 = pneg %p3534
  %3537 = shalt.err (%p3535)
  %s3538 = scalar_lea.sflag [#allocation4], 1
  %3539 = vsyncmov %s3538
  %s3540 = vpop.sfrf %3539
  %p3541 = scmp.eq.s32.totalorder %s3540, 0
  %p3542 = pneg %p3541
  %3544 = shalt.err (%p3542)

</llo_original>
